<compile_context>
chip_gen: v7x
topology: tpu7x:2x2x1
jax: 0.10.0
libtpu: 0.0.40
codegen_flags: <defaults>
</compile_context>

<pallas_src>
import functools

import jax
import jax.numpy as jnp
from jax.experimental import pallas as pl
from jax.experimental.pallas import tpu as pltpu


# =============================================================================
# Kernel 1: fused conv3x3(same) + bias + ReLU + global average pool
#   grid = (N, T)   N -> "parallel" (v7x megacore), T (row tiles) -> "arbitrary"
#   output block [1, C_feat] is revisited across T and used as the GAP
#   accumulator; finalized (divided by H*W) on the last row tile.
# =============================================================================
def conv_relu_gap_kernel(x_ref, w_ref, b_ref, o_ref, *, H, W, HT, C_feat):
    t = pl.program_id(1)
    row0 = pl.multiple_of(t * HT, HT)

    # Hoisted loads: bias + the 9 weight taps are read once and reused across
    # the unrolled row loop below.
    bias = b_ref[...]                                     # [1, C_feat] f32
    taps = [[w_ref[kh, kw] for kw in range(3)] for kh in range(3)]

    def row_body(hh, partial):
        h = row0 + hh                                     # output row index
        acc = jnp.zeros((W, C_feat), jnp.float32)
        # conv as 9 shift-and-matmul accumulations (no im2col in HBM).
        # NOTE: K = C_in = 3 under-fills the MXU contraction dim; inherent to a
        # first conv layer (real stems pad channels / space-to-depth).
        for kh in range(3):
            for kw in range(3):
                a = x_ref[h + kh, pl.ds(kw, W), :]        # [W, C_in] bf16 view
                acc += jnp.dot(a, taps[kh][kw],
                               preferred_element_type=jnp.float32)
        y = jnp.maximum(acc + bias, 0.0)                  # bias + ReLU in f32
        row_sum = jnp.sum(y, axis=0, keepdims=True)       # [1, C_feat]
        valid = (h < H).astype(jnp.float32)               # mask remainder rows
        return partial + valid * row_sum

    partial = jax.lax.fori_loop(
        0, HT, row_body, jnp.zeros((1, C_feat), jnp.float32), unroll=True)

    @pl.when(t == 0)
    def _init():
        o_ref[...] = jnp.zeros_like(o_ref)

    o_ref[...] += partial

    @pl.when(t == pl.num_programs(1) - 1)
    def _finalize():
        o_ref[...] = o_ref[...] * (1.0 / (H * W))         # sum -> mean


def conv_relu_gap(images_nchw, conv_w, conv_b, *, HT=8):
    """images_nchw: [N, C_in, H, W] f32 -> GAP features [N, C_feat] f32."""
    N, C_in, H, W = images_nchw.shape
    C_feat = conv_w.shape[0]
    T = pl.cdiv(H, HT)
    Hp = T * HT + 2                                       # halo + remainder pad
    Wp = W + 2

    x = jnp.transpose(images_nchw, (0, 2, 3, 1))          # NHWC
    x = jnp.pad(x, ((0, 0), (1, Hp - H - 1), (1, 1), (0, 0)))
    x = x.astype(jnp.bfloat16)                            # bf16 MXU feed
    w = jnp.transpose(conv_w, (2, 3, 1, 0)).astype(jnp.bfloat16)  # [3,3,Cin,Cf]
    b = conv_b.reshape(1, C_feat).astype(jnp.float32)

    kernel = functools.partial(conv_relu_gap_kernel,
                               H=H, W=W, HT=HT, C_feat=C_feat)
    out = pl.pallas_call(
        kernel,
        out_shape=jax.ShapeDtypeStruct((N, 1, C_feat), jnp.float32),
        grid=(N, T),
        in_specs=[
            # full padded image per batch element (halo tile); block index is
            # constant across the T axis, so it is DMA'd once per n.
            pl.BlockSpec((None, Hp, Wp, C_in), lambda n, t: (n, 0, 0, 0)),
            pl.BlockSpec((3, 3, C_in, C_feat), lambda n, t: (0, 0, 0, 0)),
            pl.BlockSpec((1, C_feat), lambda n, t: (0, 0)),
        ],
        out_specs=pl.BlockSpec((None, 1, C_feat), lambda n, t: (n, 0, 0)),
        compiler_params=pltpu.CompilerParams(
            dimension_semantics=("parallel", "arbitrary"),
            vmem_limit_bytes=32 * 1024 * 1024,            # fits v7x 64MiB/TC
        ),
    )(x, w, b)
    return out.reshape(N, C_feat)


# =============================================================================
# Kernel 2: fused Linear (no bias; cancelled by BN) + BatchNorm1d (batch stats)
#   grid tiles the embed dim E ("parallel") -> lane-dense output, v7x 2nd core.
#   BN stats are per-feature, so tiling E is exact; the full batch N stays in
#   one block (required for correct training-mode statistics).
# =============================================================================
def linear_bn_kernel(x_ref, w_ref, gamma_ref, beta_ref, o_ref, *, inv_n, eps):
    y = jnp.dot(x_ref[...], w_ref[...],
                preferred_element_type=jnp.float32)        # [N, TE] f32
    mean = jnp.sum(y, axis=0, keepdims=True) * inv_n
    d = y - mean
    var = jnp.sum(d * d, axis=0, keepdims=True) * inv_n    # biased var (PyTorch)
    o_ref[...] = gamma_ref[...] * (d * jax.lax.rsqrt(var + eps)) + beta_ref[...]


def linear_batchnorm(feats, lin_w, gamma, beta, *, TE=128, eps=1e-5):
    N, F = feats.shape
    E = lin_w.shape[0]
    assert E % TE == 0, "embed dim must be a multiple of the lane tile"

    x = feats.astype(jnp.bfloat16)                         # bf16 MXU feed
    w = lin_w.T.astype(jnp.bfloat16)                       # [F, E]
    g = gamma.reshape(1, E).astype(jnp.float32)
    bt = beta.reshape(1, E).astype(jnp.float32)

    kernel = functools.partial(linear_bn_kernel, inv_n=1.0 / N, eps=eps)
    return pl.pallas_call(
        kernel,
        out_shape=jax.ShapeDtypeStruct((N, E), jnp.float32),
        grid=(E // TE,),
        in_specs=[
            pl.BlockSpec((N, F), lambda j: (0, 0)),
            pl.BlockSpec((F, TE), lambda j: (0, j)),
            pl.BlockSpec((1, TE), lambda j: (0, j)),
            pl.BlockSpec((1, TE), lambda j: (0, j)),
        ],
        out_specs=pl.BlockSpec((N, TE), lambda j: (0, j)),
        compiler_params=pltpu.CompilerParams(
            dimension_semantics=("parallel",),
            vmem_limit_bytes=32 * 1024 * 1024,
        ),
    )(x, w, g, bt)


# =============================================================================
# Forward pass + params
# =============================================================================
def cnn_forward(images, params, *, HT=8):
    """images: [N, C_in, H, W] f32 (NCHW, PyTorch convention) -> [N, E] f32."""
    feats = conv_relu_gap(images, params["conv_w"], params["conv_b"], HT=HT)
    # NOTE: params["lin_b"] is intentionally not added — training-mode BN
    # subtracts the batch mean, which cancels any per-feature constant exactly.
    return linear_batchnorm(feats, params["lin_w"],
                            params["bn_gamma"], params["bn_beta"])


def init_params(key, c_in=3, c_feat=128, embed_size=256):
    k1, k2, k3, k4 = jax.random.split(key, 4)
    return {
        "conv_w": 0.1 * jax.random.normal(k1, (c_feat, c_in, 3, 3), jnp.float32),
        "conv_b": 0.1 * jax.random.normal(k2, (c_feat,), jnp.float32),
        "lin_w": 0.05 * jax.random.normal(k3, (embed_size, c_feat), jnp.float32),
        "lin_b": 0.05 * jax.random.normal(k4, (embed_size,), jnp.float32),  # unused (BN cancels it)
        "bn_gamma": jnp.ones((embed_size,), jnp.float32),
        "bn_beta": jnp.zeros((embed_size,), jnp.float32),
    }


def reference_forward(images, params):
    """Pure-JAX reference (same bf16 matmul feeds, f32 accumulation/elementwise)."""
    x = jnp.transpose(images, (0, 2, 3, 1)).astype(jnp.bfloat16)
    w = jnp.transpose(params["conv_w"], (2, 3, 1, 0)).astype(jnp.bfloat16)  # HWIO
    conv = jax.lax.conv_general_dilated(
        x, w, window_strides=(1, 1), padding="SAME",
        dimension_numbers=("NHWC", "HWIO", "NHWC"),
        preferred_element_type=jnp.float32)
    conv = jnp.maximum(conv + params["conv_b"], 0.0)
    feats = jnp.mean(conv, axis=(1, 2))
    y = jnp.dot(feats.astype(jnp.bfloat16),
                params["lin_w"].T.astype(jnp.bfloat16),
                preferred_element_type=jnp.float32)
    mean = jnp.mean(y, axis=0, keepdims=True)
    var = jnp.mean((y - mean) ** 2, axis=0, keepdims=True)
    return params["bn_gamma"] * (y - mean) * jax.lax.rsqrt(var + 1e-5) \
        + params["bn_beta"]


if __name__ == "__main__":
    key = jax.random.PRNGKey(0)
    kx, kp = jax.random.split(key)

    N, C_in, H, W = 4, 3, 16, 16
    embed_size = 256
    images = jax.random.normal(kx, (N, C_in, H, W), jnp.float32)
    params = init_params(kp, c_in=C_in, c_feat=128, embed_size=embed_size)

    features = jax.jit(cnn_forward)(images, params)
    features = jax.block_until_ready(features)

    assert features.shape == (N, embed_size)
    assert bool(jnp.all(jnp.isfinite(features)))

    # Sanity check vs. pure-JAX reference. Tolerance is deliberately loose:
    # training-mode BN divides by per-feature batch std, which amplifies bf16
    # rounding; real bugs would show up as O(1) errors.
    ref = reference_forward(images, params)
    assert jnp.allclose(features, ref, atol=0.2, rtol=0.0), \
        float(jnp.max(jnp.abs(features - ref)))

    print("KERNEL_OK")
</pallas_src>

<mosaic_0001>
module attributes {stable_mosaic.version = 11 : i64} {
  func.func @conv_relu_gap_kernel(%arg0: i32, %arg1: i32, %arg2: memref<1x18x18x3xbf16, #tpu.memory_space<vmem>>, %arg3: memref<3x3x3x128xbf16, #tpu.memory_space<vmem>>, %arg4: memref<1x128xf32, #tpu.memory_space<vmem>>, %arg5: memref<1x1x128xf32, #tpu.memory_space<vmem>>) attributes {dimension_semantics = [#tpu.dimension_semantics<parallel>, #tpu.dimension_semantics<arbitrary>], iteration_bounds = array<i64: 4, 2>, scalar_prefetch = 0 : i64, scratch_operands = 0 : i64, tpu.core_type = #tpu.core_type<tc>, window_params = [{transform_indices = @transform_0, window_bounds = array<i64: 1, 18, 18, 3>}, {pipeline_mode = #tpu.pipeline_mode<synchronous>, transform_indices = @transform_1, window_bounds = array<i64: 3, 3, 3, 128>}, {pipeline_mode = #tpu.pipeline_mode<synchronous>, transform_indices = @transform_2, window_bounds = array<i64: 1, 128>}, {transform_indices = @transform_3, window_bounds = array<i64: 1, 1, 128>}]} {
    %c8_i32 = arith.constant 8 : i32
    %0 = arith.muli %arg1, %c8_i32 : i32
    %1 = tpu.assume_multiple %0, 8 : i32
    %c0 = arith.constant 0 : index
    %c0_0 = arith.constant 0 : index
    %2 = vector.load %arg4[%c0, %c0_0] : memref<1x128xf32, #tpu.memory_space<vmem>>, vector<1x128xf32>
    %c0_1 = arith.constant 0 : index
    %c0_2 = arith.constant 0 : index
    %c0_3 = arith.constant 0 : index
    %c0_4 = arith.constant 0 : index
    %3 = vector.load %arg3[%c0_1, %c0_2, %c0_3, %c0_4] : memref<3x3x3x128xbf16, #tpu.memory_space<vmem>>, vector<1x1x3x128xbf16>
    %4 = vector.shape_cast %3 : vector<1x1x3x128xbf16> to vector<3x128xbf16>
    %c0_5 = arith.constant 0 : index
    %c1 = arith.constant 1 : index
    %c0_6 = arith.constant 0 : index
    %c0_7 = arith.constant 0 : index
    %5 = vector.load %arg3[%c0_5, %c1, %c0_6, %c0_7] : memref<3x3x3x128xbf16, #tpu.memory_space<vmem>>, vector<1x1x3x128xbf16>
    %6 = vector.shape_cast %5 : vector<1x1x3x128xbf16> to vector<3x128xbf16>
    %c0_8 = arith.constant 0 : index
    %c2 = arith.constant 2 : index
    %c0_9 = arith.constant 0 : index
    %c0_10 = arith.constant 0 : index
    %7 = vector.load %arg3[%c0_8, %c2, %c0_9, %c0_10] : memref<3x3x3x128xbf16, #tpu.memory_space<vmem>>, vector<1x1x3x128xbf16>
    %8 = vector.shape_cast %7 : vector<1x1x3x128xbf16> to vector<3x128xbf16>
    %c1_11 = arith.constant 1 : index
    %c0_12 = arith.constant 0 : index
    %c0_13 = arith.constant 0 : index
    %c0_14 = arith.constant 0 : index
    %9 = vector.load %arg3[%c1_11, %c0_12, %c0_13, %c0_14] : memref<3x3x3x128xbf16, #tpu.memory_space<vmem>>, vector<1x1x3x128xbf16>
    %10 = vector.shape_cast %9 : vector<1x1x3x128xbf16> to vector<3x128xbf16>
    %c1_15 = arith.constant 1 : index
    %c1_16 = arith.constant 1 : index
    %c0_17 = arith.constant 0 : index
    %c0_18 = arith.constant 0 : index
    %11 = vector.load %arg3[%c1_15, %c1_16, %c0_17, %c0_18] : memref<3x3x3x128xbf16, #tpu.memory_space<vmem>>, vector<1x1x3x128xbf16>
    %12 = vector.shape_cast %11 : vector<1x1x3x128xbf16> to vector<3x128xbf16>
    %c1_19 = arith.constant 1 : index
    %c2_20 = arith.constant 2 : index
    %c0_21 = arith.constant 0 : index
    %c0_22 = arith.constant 0 : index
    %13 = vector.load %arg3[%c1_19, %c2_20, %c0_21, %c0_22] : memref<3x3x3x128xbf16, #tpu.memory_space<vmem>>, vector<1x1x3x128xbf16>
    %14 = vector.shape_cast %13 : vector<1x1x3x128xbf16> to vector<3x128xbf16>
    %c2_23 = arith.constant 2 : index
    %c0_24 = arith.constant 0 : index
    %c0_25 = arith.constant 0 : index
    %c0_26 = arith.constant 0 : index
    %15 = vector.load %arg3[%c2_23, %c0_24, %c0_25, %c0_26] : memref<3x3x3x128xbf16, #tpu.memory_space<vmem>>, vector<1x1x3x128xbf16>
    %16 = vector.shape_cast %15 : vector<1x1x3x128xbf16> to vector<3x128xbf16>
    %c2_27 = arith.constant 2 : index
    %c1_28 = arith.constant 1 : index
    %c0_29 = arith.constant 0 : index
    %c0_30 = arith.constant 0 : index
    %17 = vector.load %arg3[%c2_27, %c1_28, %c0_29, %c0_30] : memref<3x3x3x128xbf16, #tpu.memory_space<vmem>>, vector<1x1x3x128xbf16>
    %18 = vector.shape_cast %17 : vector<1x1x3x128xbf16> to vector<3x128xbf16>
    %c2_31 = arith.constant 2 : index
    %c2_32 = arith.constant 2 : index
    %c0_33 = arith.constant 0 : index
    %c0_34 = arith.constant 0 : index
    %19 = vector.load %arg3[%c2_31, %c2_32, %c0_33, %c0_34] : memref<3x3x3x128xbf16, #tpu.memory_space<vmem>>, vector<1x1x3x128xbf16>
    %20 = vector.shape_cast %19 : vector<1x1x3x128xbf16> to vector<3x128xbf16>
    %cst = arith.constant 0.000000e+00 : f32
    %21 = vector.broadcast %cst : f32 to vector<1x128xf32>
    %c0_i32 = arith.constant 0 : i32
    %22 = arith.addi %1, %c0_i32 : i32
    %cst_35 = arith.constant 0.000000e+00 : f32
    %23 = vector.broadcast %cst_35 : f32 to vector<16x128xf32>
    %c0_i32_36 = arith.constant 0 : i32
    %24 = arith.addi %22, %c0_i32_36 : i32
    %c0_37 = arith.constant 0 : index
    %25 = arith.index_cast %24 : i32 to index
    %c0_38 = arith.constant 0 : index
    %c0_39 = arith.constant 0 : index
    %26 = vector.load %arg2[%c0_37, %25, %c0_38, %c0_39] : memref<1x18x18x3xbf16, #tpu.memory_space<vmem>>, vector<1x1x16x3xbf16>
    %27 = vector.shape_cast %26 : vector<1x1x16x3xbf16> to vector<16x3xbf16>
    %cst_40 = arith.constant dense<0.000000e+00> : vector<16x128xf32>
    %28 = tpu.matmul %27, %4, %cst_40 {dimension_numbers = #tpu.dot_dimension_numbers<[1], [0], [0], [1], [0, 0, 1, 1], [], []>} : vector<16x3xbf16>, vector<3x128xbf16>, vector<16x128xf32> -> vector<16x128xf32>
    %29 = arith.addf %23, %28 : vector<16x128xf32>
    %c0_i32_41 = arith.constant 0 : i32
    %30 = arith.addi %22, %c0_i32_41 : i32
    %c0_42 = arith.constant 0 : index
    %31 = arith.index_cast %30 : i32 to index
    %c1_43 = arith.constant 1 : index
    %c0_44 = arith.constant 0 : index
    %32 = vector.load %arg2[%c0_42, %31, %c1_43, %c0_44] : memref<1x18x18x3xbf16, #tpu.memory_space<vmem>>, vector<1x1x16x3xbf16>
    %33 = vector.shape_cast %32 : vector<1x1x16x3xbf16> to vector<16x3xbf16>
    %cst_45 = arith.constant dense<0.000000e+00> : vector<16x128xf32>
    %34 = tpu.matmul %33, %6, %cst_45 {dimension_numbers = #tpu.dot_dimension_numbers<[1], [0], [0], [1], [0, 0, 1, 1], [], []>} : vector<16x3xbf16>, vector<3x128xbf16>, vector<16x128xf32> -> vector<16x128xf32>
    %35 = arith.addf %29, %34 : vector<16x128xf32>
    %c0_i32_46 = arith.constant 0 : i32
    %36 = arith.addi %22, %c0_i32_46 : i32
    %c0_47 = arith.constant 0 : index
    %37 = arith.index_cast %36 : i32 to index
    %c2_48 = arith.constant 2 : index
    %c0_49 = arith.constant 0 : index
    %38 = vector.load %arg2[%c0_47, %37, %c2_48, %c0_49] : memref<1x18x18x3xbf16, #tpu.memory_space<vmem>>, vector<1x1x16x3xbf16>
    %39 = vector.shape_cast %38 : vector<1x1x16x3xbf16> to vector<16x3xbf16>
    %cst_50 = arith.constant dense<0.000000e+00> : vector<16x128xf32>
    %40 = tpu.matmul %39, %8, %cst_50 {dimension_numbers = #tpu.dot_dimension_numbers<[1], [0], [0], [1], [0, 0, 1, 1], [], []>} : vector<16x3xbf16>, vector<3x128xbf16>, vector<16x128xf32> -> vector<16x128xf32>
    %41 = arith.addf %35, %40 : vector<16x128xf32>
    %c1_i32 = arith.constant 1 : i32
    %42 = arith.addi %22, %c1_i32 : i32
    %c0_51 = arith.constant 0 : index
    %43 = arith.index_cast %42 : i32 to index
    %c0_52 = arith.constant 0 : index
    %c0_53 = arith.constant 0 : index
    %44 = vector.load %arg2[%c0_51, %43, %c0_52, %c0_53] : memref<1x18x18x3xbf16, #tpu.memory_space<vmem>>, vector<1x1x16x3xbf16>
    %45 = vector.shape_cast %44 : vector<1x1x16x3xbf16> to vector<16x3xbf16>
    %cst_54 = arith.constant dense<0.000000e+00> : vector<16x128xf32>
    %46 = tpu.matmul %45, %10, %cst_54 {dimension_numbers = #tpu.dot_dimension_numbers<[1], [0], [0], [1], [0, 0, 1, 1], [], []>} : vector<16x3xbf16>, vector<3x128xbf16>, vector<16x128xf32> -> vector<16x128xf32>
    %47 = arith.addf %41, %46 : vector<16x128xf32>
    %c1_i32_55 = arith.constant 1 : i32
    %48 = arith.addi %22, %c1_i32_55 : i32
    %c0_56 = arith.constant 0 : index
    %49 = arith.index_cast %48 : i32 to index
    %c1_57 = arith.constant 1 : index
    %c0_58 = arith.constant 0 : index
    %50 = vector.load %arg2[%c0_56, %49, %c1_57, %c0_58] : memref<1x18x18x3xbf16, #tpu.memory_space<vmem>>, vector<1x1x16x3xbf16>
    %51 = vector.shape_cast %50 : vector<1x1x16x3xbf16> to vector<16x3xbf16>
    %cst_59 = arith.constant dense<0.000000e+00> : vector<16x128xf32>
    %52 = tpu.matmul %51, %12, %cst_59 {dimension_numbers = #tpu.dot_dimension_numbers<[1], [0], [0], [1], [0, 0, 1, 1], [], []>} : vector<16x3xbf16>, vector<3x128xbf16>, vector<16x128xf32> -> vector<16x128xf32>
    %53 = arith.addf %47, %52 : vector<16x128xf32>
    %c1_i32_60 = arith.constant 1 : i32
    %54 = arith.addi %22, %c1_i32_60 : i32
    %c0_61 = arith.constant 0 : index
    %55 = arith.index_cast %54 : i32 to index
    %c2_62 = arith.constant 2 : index
    %c0_63 = arith.constant 0 : index
    %56 = vector.load %arg2[%c0_61, %55, %c2_62, %c0_63] : memref<1x18x18x3xbf16, #tpu.memory_space<vmem>>, vector<1x1x16x3xbf16>
    %57 = vector.shape_cast %56 : vector<1x1x16x3xbf16> to vector<16x3xbf16>
    %cst_64 = arith.constant dense<0.000000e+00> : vector<16x128xf32>
    %58 = tpu.matmul %57, %14, %cst_64 {dimension_numbers = #tpu.dot_dimension_numbers<[1], [0], [0], [1], [0, 0, 1, 1], [], []>} : vector<16x3xbf16>, vector<3x128xbf16>, vector<16x128xf32> -> vector<16x128xf32>
    %59 = arith.addf %53, %58 : vector<16x128xf32>
    %c2_i32 = arith.constant 2 : i32
    %60 = arith.addi %22, %c2_i32 : i32
    %c0_65 = arith.constant 0 : index
    %61 = arith.index_cast %60 : i32 to index
    %c0_66 = arith.constant 0 : index
    %c0_67 = arith.constant 0 : index
    %62 = vector.load %arg2[%c0_65, %61, %c0_66, %c0_67] : memref<1x18x18x3xbf16, #tpu.memory_space<vmem>>, vector<1x1x16x3xbf16>
    %63 = vector.shape_cast %62 : vector<1x1x16x3xbf16> to vector<16x3xbf16>
    %cst_68 = arith.constant dense<0.000000e+00> : vector<16x128xf32>
    %64 = tpu.matmul %63, %16, %cst_68 {dimension_numbers = #tpu.dot_dimension_numbers<[1], [0], [0], [1], [0, 0, 1, 1], [], []>} : vector<16x3xbf16>, vector<3x128xbf16>, vector<16x128xf32> -> vector<16x128xf32>
    %65 = arith.addf %59, %64 : vector<16x128xf32>
    %c2_i32_69 = arith.constant 2 : i32
    %66 = arith.addi %22, %c2_i32_69 : i32
    %c0_70 = arith.constant 0 : index
    %67 = arith.index_cast %66 : i32 to index
    %c1_71 = arith.constant 1 : index
    %c0_72 = arith.constant 0 : index
    %68 = vector.load %arg2[%c0_70, %67, %c1_71, %c0_72] : memref<1x18x18x3xbf16, #tpu.memory_space<vmem>>, vector<1x1x16x3xbf16>
    %69 = vector.shape_cast %68 : vector<1x1x16x3xbf16> to vector<16x3xbf16>
    %cst_73 = arith.constant dense<0.000000e+00> : vector<16x128xf32>
    %70 = tpu.matmul %69, %18, %cst_73 {dimension_numbers = #tpu.dot_dimension_numbers<[1], [0], [0], [1], [0, 0, 1, 1], [], []>} : vector<16x3xbf16>, vector<3x128xbf16>, vector<16x128xf32> -> vector<16x128xf32>
    %71 = arith.addf %65, %70 : vector<16x128xf32>
    %c2_i32_74 = arith.constant 2 : i32
    %72 = arith.addi %22, %c2_i32_74 : i32
    %c0_75 = arith.constant 0 : index
    %73 = arith.index_cast %72 : i32 to index
    %c2_76 = arith.constant 2 : index
    %c0_77 = arith.constant 0 : index
    %74 = vector.load %arg2[%c0_75, %73, %c2_76, %c0_77] : memref<1x18x18x3xbf16, #tpu.memory_space<vmem>>, vector<1x1x16x3xbf16>
    %75 = vector.shape_cast %74 : vector<1x1x16x3xbf16> to vector<16x3xbf16>
    %cst_78 = arith.constant dense<0.000000e+00> : vector<16x128xf32>
    %76 = tpu.matmul %75, %20, %cst_78 {dimension_numbers = #tpu.dot_dimension_numbers<[1], [0], [0], [1], [0, 0, 1, 1], [], []>} : vector<16x3xbf16>, vector<3x128xbf16>, vector<16x128xf32> -> vector<16x128xf32>
    %77 = arith.addf %71, %76 : vector<16x128xf32>
    %78 = vector.broadcast %2 : vector<1x128xf32> to vector<16x128xf32>
    %79 = arith.addf %77, %78 : vector<16x128xf32>
    %cst_79 = arith.constant 0.000000e+00 : f32
    %80 = vector.broadcast %cst_79 : f32 to vector<16x128xf32>
    %81 = arith.maximumf %79, %80 : vector<16x128xf32>
    %cst_80 = arith.constant dense<0.000000e+00> : vector<128xf32>
    %82 = vector.multi_reduction <add>, %81, %cst_80 [0] : vector<16x128xf32> to vector<128xf32>
    %83 = vector.shape_cast %82 : vector<128xf32> to vector<1x128xf32>
    %c16_i32 = arith.constant 16 : i32
    %84 = arith.cmpi slt, %22, %c16_i32 : i32
    %85 = arith.extui %84 : i1 to i32
    %86 = arith.sitofp %85 : i32 to f32
    %87 = vector.broadcast %86 : f32 to vector<1x128xf32>
    %88 = arith.mulf %87, %83 : vector<1x128xf32>
    %89 = arith.addf %21, %88 : vector<1x128xf32>
    %c1_i32_81 = arith.constant 1 : i32
    %90 = arith.addi %1, %c1_i32_81 : i32
    %cst_82 = arith.constant 0.000000e+00 : f32
    %91 = vector.broadcast %cst_82 : f32 to vector<16x128xf32>
    %c0_i32_83 = arith.constant 0 : i32
    %92 = arith.addi %90, %c0_i32_83 : i32
    %c0_84 = arith.constant 0 : index
    %93 = arith.index_cast %92 : i32 to index
    %c0_85 = arith.constant 0 : index
    %c0_86 = arith.constant 0 : index
    %94 = vector.load %arg2[%c0_84, %93, %c0_85, %c0_86] : memref<1x18x18x3xbf16, #tpu.memory_space<vmem>>, vector<1x1x16x3xbf16>
    %95 = vector.shape_cast %94 : vector<1x1x16x3xbf16> to vector<16x3xbf16>
    %cst_87 = arith.constant dense<0.000000e+00> : vector<16x128xf32>
    %96 = tpu.matmul %95, %4, %cst_87 {dimension_numbers = #tpu.dot_dimension_numbers<[1], [0], [0], [1], [0, 0, 1, 1], [], []>} : vector<16x3xbf16>, vector<3x128xbf16>, vector<16x128xf32> -> vector<16x128xf32>
    %97 = arith.addf %91, %96 : vector<16x128xf32>
    %c0_i32_88 = arith.constant 0 : i32
    %98 = arith.addi %90, %c0_i32_88 : i32
    %c0_89 = arith.constant 0 : index
    %99 = arith.index_cast %98 : i32 to index
    %c1_90 = arith.constant 1 : index
    %c0_91 = arith.constant 0 : index
    %100 = vector.load %arg2[%c0_89, %99, %c1_90, %c0_91] : memref<1x18x18x3xbf16, #tpu.memory_space<vmem>>, vector<1x1x16x3xbf16>
    %101 = vector.shape_cast %100 : vector<1x1x16x3xbf16> to vector<16x3xbf16>
    %cst_92 = arith.constant dense<0.000000e+00> : vector<16x128xf32>
    %102 = tpu.matmul %101, %6, %cst_92 {dimension_numbers = #tpu.dot_dimension_numbers<[1], [0], [0], [1], [0, 0, 1, 1], [], []>} : vector<16x3xbf16>, vector<3x128xbf16>, vector<16x128xf32> -> vector<16x128xf32>
    %103 = arith.addf %97, %102 : vector<16x128xf32>
    %c0_i32_93 = arith.constant 0 : i32
    %104 = arith.addi %90, %c0_i32_93 : i32
    %c0_94 = arith.constant 0 : index
    %105 = arith.index_cast %104 : i32 to index
    %c2_95 = arith.constant 2 : index
    %c0_96 = arith.constant 0 : index
    %106 = vector.load %arg2[%c0_94, %105, %c2_95, %c0_96] : memref<1x18x18x3xbf16, #tpu.memory_space<vmem>>, vector<1x1x16x3xbf16>
    %107 = vector.shape_cast %106 : vector<1x1x16x3xbf16> to vector<16x3xbf16>
    %cst_97 = arith.constant dense<0.000000e+00> : vector<16x128xf32>
    %108 = tpu.matmul %107, %8, %cst_97 {dimension_numbers = #tpu.dot_dimension_numbers<[1], [0], [0], [1], [0, 0, 1, 1], [], []>} : vector<16x3xbf16>, vector<3x128xbf16>, vector<16x128xf32> -> vector<16x128xf32>
    %109 = arith.addf %103, %108 : vector<16x128xf32>
    %c1_i32_98 = arith.constant 1 : i32
    %110 = arith.addi %90, %c1_i32_98 : i32
    %c0_99 = arith.constant 0 : index
    %111 = arith.index_cast %110 : i32 to index
    %c0_100 = arith.constant 0 : index
    %c0_101 = arith.constant 0 : index
    %112 = vector.load %arg2[%c0_99, %111, %c0_100, %c0_101] : memref<1x18x18x3xbf16, #tpu.memory_space<vmem>>, vector<1x1x16x3xbf16>
    %113 = vector.shape_cast %112 : vector<1x1x16x3xbf16> to vector<16x3xbf16>
    %cst_102 = arith.constant dense<0.000000e+00> : vector<16x128xf32>
    %114 = tpu.matmul %113, %10, %cst_102 {dimension_numbers = #tpu.dot_dimension_numbers<[1], [0], [0], [1], [0, 0, 1, 1], [], []>} : vector<16x3xbf16>, vector<3x128xbf16>, vector<16x128xf32> -> vector<16x128xf32>
    %115 = arith.addf %109, %114 : vector<16x128xf32>
    %c1_i32_103 = arith.constant 1 : i32
    %116 = arith.addi %90, %c1_i32_103 : i32
    %c0_104 = arith.constant 0 : index
    %117 = arith.index_cast %116 : i32 to index
    %c1_105 = arith.constant 1 : index
    %c0_106 = arith.constant 0 : index
    %118 = vector.load %arg2[%c0_104, %117, %c1_105, %c0_106] : memref<1x18x18x3xbf16, #tpu.memory_space<vmem>>, vector<1x1x16x3xbf16>
    %119 = vector.shape_cast %118 : vector<1x1x16x3xbf16> to vector<16x3xbf16>
    %cst_107 = arith.constant dense<0.000000e+00> : vector<16x128xf32>
    %120 = tpu.matmul %119, %12, %cst_107 {dimension_numbers = #tpu.dot_dimension_numbers<[1], [0], [0], [1], [0, 0, 1, 1], [], []>} : vector<16x3xbf16>, vector<3x128xbf16>, vector<16x128xf32> -> vector<16x128xf32>
    %121 = arith.addf %115, %120 : vector<16x128xf32>
    %c1_i32_108 = arith.constant 1 : i32
    %122 = arith.addi %90, %c1_i32_108 : i32
    %c0_109 = arith.constant 0 : index
    %123 = arith.index_cast %122 : i32 to index
    %c2_110 = arith.constant 2 : index
    %c0_111 = arith.constant 0 : index
    %124 = vector.load %arg2[%c0_109, %123, %c2_110, %c0_111] : memref<1x18x18x3xbf16, #tpu.memory_space<vmem>>, vector<1x1x16x3xbf16>
    %125 = vector.shape_cast %124 : vector<1x1x16x3xbf16> to vector<16x3xbf16>
    %cst_112 = arith.constant dense<0.000000e+00> : vector<16x128xf32>
    %126 = tpu.matmul %125, %14, %cst_112 {dimension_numbers = #tpu.dot_dimension_numbers<[1], [0], [0], [1], [0, 0, 1, 1], [], []>} : vector<16x3xbf16>, vector<3x128xbf16>, vector<16x128xf32> -> vector<16x128xf32>
    %127 = arith.addf %121, %126 : vector<16x128xf32>
    %c2_i32_113 = arith.constant 2 : i32
    %128 = arith.addi %90, %c2_i32_113 : i32
    %c0_114 = arith.constant 0 : index
    %129 = arith.index_cast %128 : i32 to index
    %c0_115 = arith.constant 0 : index
    %c0_116 = arith.constant 0 : index
    %130 = vector.load %arg2[%c0_114, %129, %c0_115, %c0_116] : memref<1x18x18x3xbf16, #tpu.memory_space<vmem>>, vector<1x1x16x3xbf16>
    %131 = vector.shape_cast %130 : vector<1x1x16x3xbf16> to vector<16x3xbf16>
    %cst_117 = arith.constant dense<0.000000e+00> : vector<16x128xf32>
    %132 = tpu.matmul %131, %16, %cst_117 {dimension_numbers = #tpu.dot_dimension_numbers<[1], [0], [0], [1], [0, 0, 1, 1], [], []>} : vector<16x3xbf16>, vector<3x128xbf16>, vector<16x128xf32> -> vector<16x128xf32>
    %133 = arith.addf %127, %132 : vector<16x128xf32>
    %c2_i32_118 = arith.constant 2 : i32
    %134 = arith.addi %90, %c2_i32_118 : i32
    %c0_119 = arith.constant 0 : index
    %135 = arith.index_cast %134 : i32 to index
    %c1_120 = arith.constant 1 : index
    %c0_121 = arith.constant 0 : index
    %136 = vector.load %arg2[%c0_119, %135, %c1_120, %c0_121] : memref<1x18x18x3xbf16, #tpu.memory_space<vmem>>, vector<1x1x16x3xbf16>
    %137 = vector.shape_cast %136 : vector<1x1x16x3xbf16> to vector<16x3xbf16>
    %cst_122 = arith.constant dense<0.000000e+00> : vector<16x128xf32>
    %138 = tpu.matmul %137, %18, %cst_122 {dimension_numbers = #tpu.dot_dimension_numbers<[1], [0], [0], [1], [0, 0, 1, 1], [], []>} : vector<16x3xbf16>, vector<3x128xbf16>, vector<16x128xf32> -> vector<16x128xf32>
    %139 = arith.addf %133, %138 : vector<16x128xf32>
    %c2_i32_123 = arith.constant 2 : i32
    %140 = arith.addi %90, %c2_i32_123 : i32
    %c0_124 = arith.constant 0 : index
    %141 = arith.index_cast %140 : i32 to index
    %c2_125 = arith.constant 2 : index
    %c0_126 = arith.constant 0 : index
    %142 = vector.load %arg2[%c0_124, %141, %c2_125, %c0_126] : memref<1x18x18x3xbf16, #tpu.memory_space<vmem>>, vector<1x1x16x3xbf16>
    %143 = vector.shape_cast %142 : vector<1x1x16x3xbf16> to vector<16x3xbf16>
    %cst_127 = arith.constant dense<0.000000e+00> : vector<16x128xf32>
    %144 = tpu.matmul %143, %20, %cst_127 {dimension_numbers = #tpu.dot_dimension_numbers<[1], [0], [0], [1], [0, 0, 1, 1], [], []>} : vector<16x3xbf16>, vector<3x128xbf16>, vector<16x128xf32> -> vector<16x128xf32>
    %145 = arith.addf %139, %144 : vector<16x128xf32>
    %146 = vector.broadcast %2 : vector<1x128xf32> to vector<16x128xf32>
    %147 = arith.addf %145, %146 : vector<16x128xf32>
    %cst_128 = arith.constant 0.000000e+00 : f32
    %148 = vector.broadcast %cst_128 : f32 to vector<16x128xf32>
    %149 = arith.maximumf %147, %148 : vector<16x128xf32>
    %cst_129 = arith.constant dense<0.000000e+00> : vector<128xf32>
    %150 = vector.multi_reduction <add>, %149, %cst_129 [0] : vector<16x128xf32> to vector<128xf32>
    %151 = vector.shape_cast %150 : vector<128xf32> to vector<1x128xf32>
    %c16_i32_130 = arith.constant 16 : i32
    %152 = arith.cmpi slt, %90, %c16_i32_130 : i32
    %153 = arith.extui %152 : i1 to i32
    %154 = arith.sitofp %153 : i32 to f32
    %155 = vector.broadcast %154 : f32 to vector<1x128xf32>
    %156 = arith.mulf %155, %151 : vector<1x128xf32>
    %157 = arith.addf %89, %156 : vector<1x128xf32>
    %c2_i32_131 = arith.constant 2 : i32
    %158 = arith.addi %1, %c2_i32_131 : i32
    %cst_132 = arith.constant 0.000000e+00 : f32
    %159 = vector.broadcast %cst_132 : f32 to vector<16x128xf32>
    %c0_i32_133 = arith.constant 0 : i32
    %160 = arith.addi %158, %c0_i32_133 : i32
    %c0_134 = arith.constant 0 : index
    %161 = arith.index_cast %160 : i32 to index
    %c0_135 = arith.constant 0 : index
    %c0_136 = arith.constant 0 : index
    %162 = vector.load %arg2[%c0_134, %161, %c0_135, %c0_136] : memref<1x18x18x3xbf16, #tpu.memory_space<vmem>>, vector<1x1x16x3xbf16>
    %163 = vector.shape_cast %162 : vector<1x1x16x3xbf16> to vector<16x3xbf16>
    %cst_137 = arith.constant dense<0.000000e+00> : vector<16x128xf32>
    %164 = tpu.matmul %163, %4, %cst_137 {dimension_numbers = #tpu.dot_dimension_numbers<[1], [0], [0], [1], [0, 0, 1, 1], [], []>} : vector<16x3xbf16>, vector<3x128xbf16>, vector<16x128xf32> -> vector<16x128xf32>
    %165 = arith.addf %159, %164 : vector<16x128xf32>
    %c0_i32_138 = arith.constant 0 : i32
    %166 = arith.addi %158, %c0_i32_138 : i32
    %c0_139 = arith.constant 0 : index
    %167 = arith.index_cast %166 : i32 to index
    %c1_140 = arith.constant 1 : index
    %c0_141 = arith.constant 0 : index
    %168 = vector.load %arg2[%c0_139, %167, %c1_140, %c0_141] : memref<1x18x18x3xbf16, #tpu.memory_space<vmem>>, vector<1x1x16x3xbf16>
    %169 = vector.shape_cast %168 : vector<1x1x16x3xbf16> to vector<16x3xbf16>
    %cst_142 = arith.constant dense<0.000000e+00> : vector<16x128xf32>
    %170 = tpu.matmul %169, %6, %cst_142 {dimension_numbers = #tpu.dot_dimension_numbers<[1], [0], [0], [1], [0, 0, 1, 1], [], []>} : vector<16x3xbf16>, vector<3x128xbf16>, vector<16x128xf32> -> vector<16x128xf32>
    %171 = arith.addf %165, %170 : vector<16x128xf32>
    %c0_i32_143 = arith.constant 0 : i32
    %172 = arith.addi %158, %c0_i32_143 : i32
    %c0_144 = arith.constant 0 : index
    %173 = arith.index_cast %172 : i32 to index
    %c2_145 = arith.constant 2 : index
    %c0_146 = arith.constant 0 : index
    %174 = vector.load %arg2[%c0_144, %173, %c2_145, %c0_146] : memref<1x18x18x3xbf16, #tpu.memory_space<vmem>>, vector<1x1x16x3xbf16>
    %175 = vector.shape_cast %174 : vector<1x1x16x3xbf16> to vector<16x3xbf16>
    %cst_147 = arith.constant dense<0.000000e+00> : vector<16x128xf32>
    %176 = tpu.matmul %175, %8, %cst_147 {dimension_numbers = #tpu.dot_dimension_numbers<[1], [0], [0], [1], [0, 0, 1, 1], [], []>} : vector<16x3xbf16>, vector<3x128xbf16>, vector<16x128xf32> -> vector<16x128xf32>
    %177 = arith.addf %171, %176 : vector<16x128xf32>
    %c1_i32_148 = arith.constant 1 : i32
    %178 = arith.addi %158, %c1_i32_148 : i32
    %c0_149 = arith.constant 0 : index
    %179 = arith.index_cast %178 : i32 to index
    %c0_150 = arith.constant 0 : index
    %c0_151 = arith.constant 0 : index
    %180 = vector.load %arg2[%c0_149, %179, %c0_150, %c0_151] : memref<1x18x18x3xbf16, #tpu.memory_space<vmem>>, vector<1x1x16x3xbf16>
    %181 = vector.shape_cast %180 : vector<1x1x16x3xbf16> to vector<16x3xbf16>
    %cst_152 = arith.constant dense<0.000000e+00> : vector<16x128xf32>
    %182 = tpu.matmul %181, %10, %cst_152 {dimension_numbers = #tpu.dot_dimension_numbers<[1], [0], [0], [1], [0, 0, 1, 1], [], []>} : vector<16x3xbf16>, vector<3x128xbf16>, vector<16x128xf32> -> vector<16x128xf32>
    %183 = arith.addf %177, %182 : vector<16x128xf32>
    %c1_i32_153 = arith.constant 1 : i32
    %184 = arith.addi %158, %c1_i32_153 : i32
    %c0_154 = arith.constant 0 : index
    %185 = arith.index_cast %184 : i32 to index
    %c1_155 = arith.constant 1 : index
    %c0_156 = arith.constant 0 : index
    %186 = vector.load %arg2[%c0_154, %185, %c1_155, %c0_156] : memref<1x18x18x3xbf16, #tpu.memory_space<vmem>>, vector<1x1x16x3xbf16>
    %187 = vector.shape_cast %186 : vector<1x1x16x3xbf16> to vector<16x3xbf16>
    %cst_157 = arith.constant dense<0.000000e+00> : vector<16x128xf32>
    %188 = tpu.matmul %187, %12, %cst_157 {dimension_numbers = #tpu.dot_dimension_numbers<[1], [0], [0], [1], [0, 0, 1, 1], [], []>} : vector<16x3xbf16>, vector<3x128xbf16>, vector<16x128xf32> -> vector<16x128xf32>
    %189 = arith.addf %183, %188 : vector<16x128xf32>
    %c1_i32_158 = arith.constant 1 : i32
    %190 = arith.addi %158, %c1_i32_158 : i32
    %c0_159 = arith.constant 0 : index
    %191 = arith.index_cast %190 : i32 to index
    %c2_160 = arith.constant 2 : index
    %c0_161 = arith.constant 0 : index
    %192 = vector.load %arg2[%c0_159, %191, %c2_160, %c0_161] : memref<1x18x18x3xbf16, #tpu.memory_space<vmem>>, vector<1x1x16x3xbf16>
    %193 = vector.shape_cast %192 : vector<1x1x16x3xbf16> to vector<16x3xbf16>
    %cst_162 = arith.constant dense<0.000000e+00> : vector<16x128xf32>
    %194 = tpu.matmul %193, %14, %cst_162 {dimension_numbers = #tpu.dot_dimension_numbers<[1], [0], [0], [1], [0, 0, 1, 1], [], []>} : vector<16x3xbf16>, vector<3x128xbf16>, vector<16x128xf32> -> vector<16x128xf32>
    %195 = arith.addf %189, %194 : vector<16x128xf32>
    %c2_i32_163 = arith.constant 2 : i32
    %196 = arith.addi %158, %c2_i32_163 : i32
    %c0_164 = arith.constant 0 : index
    %197 = arith.index_cast %196 : i32 to index
    %c0_165 = arith.constant 0 : index
    %c0_166 = arith.constant 0 : index
    %198 = vector.load %arg2[%c0_164, %197, %c0_165, %c0_166] : memref<1x18x18x3xbf16, #tpu.memory_space<vmem>>, vector<1x1x16x3xbf16>
    %199 = vector.shape_cast %198 : vector<1x1x16x3xbf16> to vector<16x3xbf16>
    %cst_167 = arith.constant dense<0.000000e+00> : vector<16x128xf32>
    %200 = tpu.matmul %199, %16, %cst_167 {dimension_numbers = #tpu.dot_dimension_numbers<[1], [0], [0], [1], [0, 0, 1, 1], [], []>} : vector<16x3xbf16>, vector<3x128xbf16>, vector<16x128xf32> -> vector<16x128xf32>
    %201 = arith.addf %195, %200 : vector<16x128xf32>
    %c2_i32_168 = arith.constant 2 : i32
    %202 = arith.addi %158, %c2_i32_168 : i32
    %c0_169 = arith.constant 0 : index
    %203 = arith.index_cast %202 : i32 to index
    %c1_170 = arith.constant 1 : index
    %c0_171 = arith.constant 0 : index
    %204 = vector.load %arg2[%c0_169, %203, %c1_170, %c0_171] : memref<1x18x18x3xbf16, #tpu.memory_space<vmem>>, vector<1x1x16x3xbf16>
    %205 = vector.shape_cast %204 : vector<1x1x16x3xbf16> to vector<16x3xbf16>
    %cst_172 = arith.constant dense<0.000000e+00> : vector<16x128xf32>
    %206 = tpu.matmul %205, %18, %cst_172 {dimension_numbers = #tpu.dot_dimension_numbers<[1], [0], [0], [1], [0, 0, 1, 1], [], []>} : vector<16x3xbf16>, vector<3x128xbf16>, vector<16x128xf32> -> vector<16x128xf32>
    %207 = arith.addf %201, %206 : vector<16x128xf32>
    %c2_i32_173 = arith.constant 2 : i32
    %208 = arith.addi %158, %c2_i32_173 : i32
    %c0_174 = arith.constant 0 : index
    %209 = arith.index_cast %208 : i32 to index
    %c2_175 = arith.constant 2 : index
    %c0_176 = arith.constant 0 : index
    %210 = vector.load %arg2[%c0_174, %209, %c2_175, %c0_176] : memref<1x18x18x3xbf16, #tpu.memory_space<vmem>>, vector<1x1x16x3xbf16>
    %211 = vector.shape_cast %210 : vector<1x1x16x3xbf16> to vector<16x3xbf16>
    %cst_177 = arith.constant dense<0.000000e+00> : vector<16x128xf32>
    %212 = tpu.matmul %211, %20, %cst_177 {dimension_numbers = #tpu.dot_dimension_numbers<[1], [0], [0], [1], [0, 0, 1, 1], [], []>} : vector<16x3xbf16>, vector<3x128xbf16>, vector<16x128xf32> -> vector<16x128xf32>
    %213 = arith.addf %207, %212 : vector<16x128xf32>
    %214 = vector.broadcast %2 : vector<1x128xf32> to vector<16x128xf32>
    %215 = arith.addf %213, %214 : vector<16x128xf32>
    %cst_178 = arith.constant 0.000000e+00 : f32
    %216 = vector.broadcast %cst_178 : f32 to vector<16x128xf32>
    %217 = arith.maximumf %215, %216 : vector<16x128xf32>
    %cst_179 = arith.constant dense<0.000000e+00> : vector<128xf32>
    %218 = vector.multi_reduction <add>, %217, %cst_179 [0] : vector<16x128xf32> to vector<128xf32>
    %219 = vector.shape_cast %218 : vector<128xf32> to vector<1x128xf32>
    %c16_i32_180 = arith.constant 16 : i32
    %220 = arith.cmpi slt, %158, %c16_i32_180 : i32
    %221 = arith.extui %220 : i1 to i32
    %222 = arith.sitofp %221 : i32 to f32
    %223 = vector.broadcast %222 : f32 to vector<1x128xf32>
    %224 = arith.mulf %223, %219 : vector<1x128xf32>
    %225 = arith.addf %157, %224 : vector<1x128xf32>
    %c3_i32 = arith.constant 3 : i32
    %226 = arith.addi %1, %c3_i32 : i32
    %cst_181 = arith.constant 0.000000e+00 : f32
    %227 = vector.broadcast %cst_181 : f32 to vector<16x128xf32>
    %c0_i32_182 = arith.constant 0 : i32
    %228 = arith.addi %226, %c0_i32_182 : i32
    %c0_183 = arith.constant 0 : index
    %229 = arith.index_cast %228 : i32 to index
    %c0_184 = arith.constant 0 : index
    %c0_185 = arith.constant 0 : index
    %230 = vector.load %arg2[%c0_183, %229, %c0_184, %c0_185] : memref<1x18x18x3xbf16, #tpu.memory_space<vmem>>, vector<1x1x16x3xbf16>
    %231 = vector.shape_cast %230 : vector<1x1x16x3xbf16> to vector<16x3xbf16>
    %cst_186 = arith.constant dense<0.000000e+00> : vector<16x128xf32>
    %232 = tpu.matmul %231, %4, %cst_186 {dimension_numbers = #tpu.dot_dimension_numbers<[1], [0], [0], [1], [0, 0, 1, 1], [], []>} : vector<16x3xbf16>, vector<3x128xbf16>, vector<16x128xf32> -> vector<16x128xf32>
    %233 = arith.addf %227, %232 : vector<16x128xf32>
    %c0_i32_187 = arith.constant 0 : i32
    %234 = arith.addi %226, %c0_i32_187 : i32
    %c0_188 = arith.constant 0 : index
    %235 = arith.index_cast %234 : i32 to index
    %c1_189 = arith.constant 1 : index
    %c0_190 = arith.constant 0 : index
    %236 = vector.load %arg2[%c0_188, %235, %c1_189, %c0_190] : memref<1x18x18x3xbf16, #tpu.memory_space<vmem>>, vector<1x1x16x3xbf16>
    %237 = vector.shape_cast %236 : vector<1x1x16x3xbf16> to vector<16x3xbf16>
    %cst_191 = arith.constant dense<0.000000e+00> : vector<16x128xf32>
    %238 = tpu.matmul %237, %6, %cst_191 {dimension_numbers = #tpu.dot_dimension_numbers<[1], [0], [0], [1], [0, 0, 1, 1], [], []>} : vector<16x3xbf16>, vector<3x128xbf16>, vector<16x128xf32> -> vector<16x128xf32>
    %239 = arith.addf %233, %238 : vector<16x128xf32>
    %c0_i32_192 = arith.constant 0 : i32
    %240 = arith.addi %226, %c0_i32_192 : i32
    %c0_193 = arith.constant 0 : index
    %241 = arith.index_cast %240 : i32 to index
    %c2_194 = arith.constant 2 : index
    %c0_195 = arith.constant 0 : index
    %242 = vector.load %arg2[%c0_193, %241, %c2_194, %c0_195] : memref<1x18x18x3xbf16, #tpu.memory_space<vmem>>, vector<1x1x16x3xbf16>
    %243 = vector.shape_cast %242 : vector<1x1x16x3xbf16> to vector<16x3xbf16>
    %cst_196 = arith.constant dense<0.000000e+00> : vector<16x128xf32>
    %244 = tpu.matmul %243, %8, %cst_196 {dimension_numbers = #tpu.dot_dimension_numbers<[1], [0], [0], [1], [0, 0, 1, 1], [], []>} : vector<16x3xbf16>, vector<3x128xbf16>, vector<16x128xf32> -> vector<16x128xf32>
    %245 = arith.addf %239, %244 : vector<16x128xf32>
    %c1_i32_197 = arith.constant 1 : i32
    %246 = arith.addi %226, %c1_i32_197 : i32
    %c0_198 = arith.constant 0 : index
    %247 = arith.index_cast %246 : i32 to index
    %c0_199 = arith.constant 0 : index
    %c0_200 = arith.constant 0 : index
    %248 = vector.load %arg2[%c0_198, %247, %c0_199, %c0_200] : memref<1x18x18x3xbf16, #tpu.memory_space<vmem>>, vector<1x1x16x3xbf16>
    %249 = vector.shape_cast %248 : vector<1x1x16x3xbf16> to vector<16x3xbf16>
    %cst_201 = arith.constant dense<0.000000e+00> : vector<16x128xf32>
    %250 = tpu.matmul %249, %10, %cst_201 {dimension_numbers = #tpu.dot_dimension_numbers<[1], [0], [0], [1], [0, 0, 1, 1], [], []>} : vector<16x3xbf16>, vector<3x128xbf16>, vector<16x128xf32> -> vector<16x128xf32>
    %251 = arith.addf %245, %250 : vector<16x128xf32>
    %c1_i32_202 = arith.constant 1 : i32
    %252 = arith.addi %226, %c1_i32_202 : i32
    %c0_203 = arith.constant 0 : index
    %253 = arith.index_cast %252 : i32 to index
    %c1_204 = arith.constant 1 : index
    %c0_205 = arith.constant 0 : index
    %254 = vector.load %arg2[%c0_203, %253, %c1_204, %c0_205] : memref<1x18x18x3xbf16, #tpu.memory_space<vmem>>, vector<1x1x16x3xbf16>
    %255 = vector.shape_cast %254 : vector<1x1x16x3xbf16> to vector<16x3xbf16>
    %cst_206 = arith.constant dense<0.000000e+00> : vector<16x128xf32>
    %256 = tpu.matmul %255, %12, %cst_206 {dimension_numbers = #tpu.dot_dimension_numbers<[1], [0], [0], [1], [0, 0, 1, 1], [], []>} : vector<16x3xbf16>, vector<3x128xbf16>, vector<16x128xf32> -> vector<16x128xf32>
    %257 = arith.addf %251, %256 : vector<16x128xf32>
    %c1_i32_207 = arith.constant 1 : i32
    %258 = arith.addi %226, %c1_i32_207 : i32
    %c0_208 = arith.constant 0 : index
    %259 = arith.index_cast %258 : i32 to index
    %c2_209 = arith.constant 2 : index
    %c0_210 = arith.constant 0 : index
    %260 = vector.load %arg2[%c0_208, %259, %c2_209, %c0_210] : memref<1x18x18x3xbf16, #tpu.memory_space<vmem>>, vector<1x1x16x3xbf16>
    %261 = vector.shape_cast %260 : vector<1x1x16x3xbf16> to vector<16x3xbf16>
    %cst_211 = arith.constant dense<0.000000e+00> : vector<16x128xf32>
    %262 = tpu.matmul %261, %14, %cst_211 {dimension_numbers = #tpu.dot_dimension_numbers<[1], [0], [0], [1], [0, 0, 1, 1], [], []>} : vector<16x3xbf16>, vector<3x128xbf16>, vector<16x128xf32> -> vector<16x128xf32>
    %263 = arith.addf %257, %262 : vector<16x128xf32>
    %c2_i32_212 = arith.constant 2 : i32
    %264 = arith.addi %226, %c2_i32_212 : i32
    %c0_213 = arith.constant 0 : index
    %265 = arith.index_cast %264 : i32 to index
    %c0_214 = arith.constant 0 : index
    %c0_215 = arith.constant 0 : index
    %266 = vector.load %arg2[%c0_213, %265, %c0_214, %c0_215] : memref<1x18x18x3xbf16, #tpu.memory_space<vmem>>, vector<1x1x16x3xbf16>
    %267 = vector.shape_cast %266 : vector<1x1x16x3xbf16> to vector<16x3xbf16>
    %cst_216 = arith.constant dense<0.000000e+00> : vector<16x128xf32>
    %268 = tpu.matmul %267, %16, %cst_216 {dimension_numbers = #tpu.dot_dimension_numbers<[1], [0], [0], [1], [0, 0, 1, 1], [], []>} : vector<16x3xbf16>, vector<3x128xbf16>, vector<16x128xf32> -> vector<16x128xf32>
    %269 = arith.addf %263, %268 : vector<16x128xf32>
    %c2_i32_217 = arith.constant 2 : i32
    %270 = arith.addi %226, %c2_i32_217 : i32
    %c0_218 = arith.constant 0 : index
    %271 = arith.index_cast %270 : i32 to index
    %c1_219 = arith.constant 1 : index
    %c0_220 = arith.constant 0 : index
    %272 = vector.load %arg2[%c0_218, %271, %c1_219, %c0_220] : memref<1x18x18x3xbf16, #tpu.memory_space<vmem>>, vector<1x1x16x3xbf16>
    %273 = vector.shape_cast %272 : vector<1x1x16x3xbf16> to vector<16x3xbf16>
    %cst_221 = arith.constant dense<0.000000e+00> : vector<16x128xf32>
    %274 = tpu.matmul %273, %18, %cst_221 {dimension_numbers = #tpu.dot_dimension_numbers<[1], [0], [0], [1], [0, 0, 1, 1], [], []>} : vector<16x3xbf16>, vector<3x128xbf16>, vector<16x128xf32> -> vector<16x128xf32>
    %275 = arith.addf %269, %274 : vector<16x128xf32>
    %c2_i32_222 = arith.constant 2 : i32
    %276 = arith.addi %226, %c2_i32_222 : i32
    %c0_223 = arith.constant 0 : index
    %277 = arith.index_cast %276 : i32 to index
    %c2_224 = arith.constant 2 : index
    %c0_225 = arith.constant 0 : index
    %278 = vector.load %arg2[%c0_223, %277, %c2_224, %c0_225] : memref<1x18x18x3xbf16, #tpu.memory_space<vmem>>, vector<1x1x16x3xbf16>
    %279 = vector.shape_cast %278 : vector<1x1x16x3xbf16> to vector<16x3xbf16>
    %cst_226 = arith.constant dense<0.000000e+00> : vector<16x128xf32>
    %280 = tpu.matmul %279, %20, %cst_226 {dimension_numbers = #tpu.dot_dimension_numbers<[1], [0], [0], [1], [0, 0, 1, 1], [], []>} : vector<16x3xbf16>, vector<3x128xbf16>, vector<16x128xf32> -> vector<16x128xf32>
    %281 = arith.addf %275, %280 : vector<16x128xf32>
    %282 = vector.broadcast %2 : vector<1x128xf32> to vector<16x128xf32>
    %283 = arith.addf %281, %282 : vector<16x128xf32>
    %cst_227 = arith.constant 0.000000e+00 : f32
    %284 = vector.broadcast %cst_227 : f32 to vector<16x128xf32>
    %285 = arith.maximumf %283, %284 : vector<16x128xf32>
    %cst_228 = arith.constant dense<0.000000e+00> : vector<128xf32>
    %286 = vector.multi_reduction <add>, %285, %cst_228 [0] : vector<16x128xf32> to vector<128xf32>
    %287 = vector.shape_cast %286 : vector<128xf32> to vector<1x128xf32>
    %c16_i32_229 = arith.constant 16 : i32
    %288 = arith.cmpi slt, %226, %c16_i32_229 : i32
    %289 = arith.extui %288 : i1 to i32
    %290 = arith.sitofp %289 : i32 to f32
    %291 = vector.broadcast %290 : f32 to vector<1x128xf32>
    %292 = arith.mulf %291, %287 : vector<1x128xf32>
    %293 = arith.addf %225, %292 : vector<1x128xf32>
    %c4_i32 = arith.constant 4 : i32
    %294 = arith.addi %1, %c4_i32 : i32
    %cst_230 = arith.constant 0.000000e+00 : f32
    %295 = vector.broadcast %cst_230 : f32 to vector<16x128xf32>
    %c0_i32_231 = arith.constant 0 : i32
    %296 = arith.addi %294, %c0_i32_231 : i32
    %c0_232 = arith.constant 0 : index
    %297 = arith.index_cast %296 : i32 to index
    %c0_233 = arith.constant 0 : index
    %c0_234 = arith.constant 0 : index
    %298 = vector.load %arg2[%c0_232, %297, %c0_233, %c0_234] : memref<1x18x18x3xbf16, #tpu.memory_space<vmem>>, vector<1x1x16x3xbf16>
    %299 = vector.shape_cast %298 : vector<1x1x16x3xbf16> to vector<16x3xbf16>
    %cst_235 = arith.constant dense<0.000000e+00> : vector<16x128xf32>
    %300 = tpu.matmul %299, %4, %cst_235 {dimension_numbers = #tpu.dot_dimension_numbers<[1], [0], [0], [1], [0, 0, 1, 1], [], []>} : vector<16x3xbf16>, vector<3x128xbf16>, vector<16x128xf32> -> vector<16x128xf32>
    %301 = arith.addf %295, %300 : vector<16x128xf32>
    %c0_i32_236 = arith.constant 0 : i32
    %302 = arith.addi %294, %c0_i32_236 : i32
    %c0_237 = arith.constant 0 : index
    %303 = arith.index_cast %302 : i32 to index
    %c1_238 = arith.constant 1 : index
    %c0_239 = arith.constant 0 : index
    %304 = vector.load %arg2[%c0_237, %303, %c1_238, %c0_239] : memref<1x18x18x3xbf16, #tpu.memory_space<vmem>>, vector<1x1x16x3xbf16>
    %305 = vector.shape_cast %304 : vector<1x1x16x3xbf16> to vector<16x3xbf16>
    %cst_240 = arith.constant dense<0.000000e+00> : vector<16x128xf32>
    %306 = tpu.matmul %305, %6, %cst_240 {dimension_numbers = #tpu.dot_dimension_numbers<[1], [0], [0], [1], [0, 0, 1, 1], [], []>} : vector<16x3xbf16>, vector<3x128xbf16>, vector<16x128xf32> -> vector<16x128xf32>
    %307 = arith.addf %301, %306 : vector<16x128xf32>
    %c0_i32_241 = arith.constant 0 : i32
    %308 = arith.addi %294, %c0_i32_241 : i32
    %c0_242 = arith.constant 0 : index
    %309 = arith.index_cast %308 : i32 to index
    %c2_243 = arith.constant 2 : index
    %c0_244 = arith.constant 0 : index
    %310 = vector.load %arg2[%c0_242, %309, %c2_243, %c0_244] : memref<1x18x18x3xbf16, #tpu.memory_space<vmem>>, vector<1x1x16x3xbf16>
    %311 = vector.shape_cast %310 : vector<1x1x16x3xbf16> to vector<16x3xbf16>
    %cst_245 = arith.constant dense<0.000000e+00> : vector<16x128xf32>
    %312 = tpu.matmul %311, %8, %cst_245 {dimension_numbers = #tpu.dot_dimension_numbers<[1], [0], [0], [1], [0, 0, 1, 1], [], []>} : vector<16x3xbf16>, vector<3x128xbf16>, vector<16x128xf32> -> vector<16x128xf32>
    %313 = arith.addf %307, %312 : vector<16x128xf32>
    %c1_i32_246 = arith.constant 1 : i32
    %314 = arith.addi %294, %c1_i32_246 : i32
    %c0_247 = arith.constant 0 : index
    %315 = arith.index_cast %314 : i32 to index
    %c0_248 = arith.constant 0 : index
    %c0_249 = arith.constant 0 : index
    %316 = vector.load %arg2[%c0_247, %315, %c0_248, %c0_249] : memref<1x18x18x3xbf16, #tpu.memory_space<vmem>>, vector<1x1x16x3xbf16>
    %317 = vector.shape_cast %316 : vector<1x1x16x3xbf16> to vector<16x3xbf16>
    %cst_250 = arith.constant dense<0.000000e+00> : vector<16x128xf32>
    %318 = tpu.matmul %317, %10, %cst_250 {dimension_numbers = #tpu.dot_dimension_numbers<[1], [0], [0], [1], [0, 0, 1, 1], [], []>} : vector<16x3xbf16>, vector<3x128xbf16>, vector<16x128xf32> -> vector<16x128xf32>
    %319 = arith.addf %313, %318 : vector<16x128xf32>
    %c1_i32_251 = arith.constant 1 : i32
    %320 = arith.addi %294, %c1_i32_251 : i32
    %c0_252 = arith.constant 0 : index
    %321 = arith.index_cast %320 : i32 to index
    %c1_253 = arith.constant 1 : index
    %c0_254 = arith.constant 0 : index
    %322 = vector.load %arg2[%c0_252, %321, %c1_253, %c0_254] : memref<1x18x18x3xbf16, #tpu.memory_space<vmem>>, vector<1x1x16x3xbf16>
    %323 = vector.shape_cast %322 : vector<1x1x16x3xbf16> to vector<16x3xbf16>
    %cst_255 = arith.constant dense<0.000000e+00> : vector<16x128xf32>
    %324 = tpu.matmul %323, %12, %cst_255 {dimension_numbers = #tpu.dot_dimension_numbers<[1], [0], [0], [1], [0, 0, 1, 1], [], []>} : vector<16x3xbf16>, vector<3x128xbf16>, vector<16x128xf32> -> vector<16x128xf32>
    %325 = arith.addf %319, %324 : vector<16x128xf32>
    %c1_i32_256 = arith.constant 1 : i32
    %326 = arith.addi %294, %c1_i32_256 : i32
    %c0_257 = arith.constant 0 : index
    %327 = arith.index_cast %326 : i32 to index
    %c2_258 = arith.constant 2 : index
    %c0_259 = arith.constant 0 : index
    %328 = vector.load %arg2[%c0_257, %327, %c2_258, %c0_259] : memref<1x18x18x3xbf16, #tpu.memory_space<vmem>>, vector<1x1x16x3xbf16>
    %329 = vector.shape_cast %328 : vector<1x1x16x3xbf16> to vector<16x3xbf16>
    %cst_260 = arith.constant dense<0.000000e+00> : vector<16x128xf32>
    %330 = tpu.matmul %329, %14, %cst_260 {dimension_numbers = #tpu.dot_dimension_numbers<[1], [0], [0], [1], [0, 0, 1, 1], [], []>} : vector<16x3xbf16>, vector<3x128xbf16>, vector<16x128xf32> -> vector<16x128xf32>
    %331 = arith.addf %325, %330 : vector<16x128xf32>
    %c2_i32_261 = arith.constant 2 : i32
    %332 = arith.addi %294, %c2_i32_261 : i32
    %c0_262 = arith.constant 0 : index
    %333 = arith.index_cast %332 : i32 to index
    %c0_263 = arith.constant 0 : index
    %c0_264 = arith.constant 0 : index
    %334 = vector.load %arg2[%c0_262, %333, %c0_263, %c0_264] : memref<1x18x18x3xbf16, #tpu.memory_space<vmem>>, vector<1x1x16x3xbf16>
    %335 = vector.shape_cast %334 : vector<1x1x16x3xbf16> to vector<16x3xbf16>
    %cst_265 = arith.constant dense<0.000000e+00> : vector<16x128xf32>
    %336 = tpu.matmul %335, %16, %cst_265 {dimension_numbers = #tpu.dot_dimension_numbers<[1], [0], [0], [1], [0, 0, 1, 1], [], []>} : vector<16x3xbf16>, vector<3x128xbf16>, vector<16x128xf32> -> vector<16x128xf32>
    %337 = arith.addf %331, %336 : vector<16x128xf32>
    %c2_i32_266 = arith.constant 2 : i32
    %338 = arith.addi %294, %c2_i32_266 : i32
    %c0_267 = arith.constant 0 : index
    %339 = arith.index_cast %338 : i32 to index
    %c1_268 = arith.constant 1 : index
    %c0_269 = arith.constant 0 : index
    %340 = vector.load %arg2[%c0_267, %339, %c1_268, %c0_269] : memref<1x18x18x3xbf16, #tpu.memory_space<vmem>>, vector<1x1x16x3xbf16>
    %341 = vector.shape_cast %340 : vector<1x1x16x3xbf16> to vector<16x3xbf16>
    %cst_270 = arith.constant dense<0.000000e+00> : vector<16x128xf32>
    %342 = tpu.matmul %341, %18, %cst_270 {dimension_numbers = #tpu.dot_dimension_numbers<[1], [0], [0], [1], [0, 0, 1, 1], [], []>} : vector<16x3xbf16>, vector<3x128xbf16>, vector<16x128xf32> -> vector<16x128xf32>
    %343 = arith.addf %337, %342 : vector<16x128xf32>
    %c2_i32_271 = arith.constant 2 : i32
    %344 = arith.addi %294, %c2_i32_271 : i32
    %c0_272 = arith.constant 0 : index
    %345 = arith.index_cast %344 : i32 to index
    %c2_273 = arith.constant 2 : index
    %c0_274 = arith.constant 0 : index
    %346 = vector.load %arg2[%c0_272, %345, %c2_273, %c0_274] : memref<1x18x18x3xbf16, #tpu.memory_space<vmem>>, vector<1x1x16x3xbf16>
    %347 = vector.shape_cast %346 : vector<1x1x16x3xbf16> to vector<16x3xbf16>
    %cst_275 = arith.constant dense<0.000000e+00> : vector<16x128xf32>
    %348 = tpu.matmul %347, %20, %cst_275 {dimension_numbers = #tpu.dot_dimension_numbers<[1], [0], [0], [1], [0, 0, 1, 1], [], []>} : vector<16x3xbf16>, vector<3x128xbf16>, vector<16x128xf32> -> vector<16x128xf32>
    %349 = arith.addf %343, %348 : vector<16x128xf32>
    %350 = vector.broadcast %2 : vector<1x128xf32> to vector<16x128xf32>
    %351 = arith.addf %349, %350 : vector<16x128xf32>
    %cst_276 = arith.constant 0.000000e+00 : f32
    %352 = vector.broadcast %cst_276 : f32 to vector<16x128xf32>
    %353 = arith.maximumf %351, %352 : vector<16x128xf32>
    %cst_277 = arith.constant dense<0.000000e+00> : vector<128xf32>
    %354 = vector.multi_reduction <add>, %353, %cst_277 [0] : vector<16x128xf32> to vector<128xf32>
    %355 = vector.shape_cast %354 : vector<128xf32> to vector<1x128xf32>
    %c16_i32_278 = arith.constant 16 : i32
    %356 = arith.cmpi slt, %294, %c16_i32_278 : i32
    %357 = arith.extui %356 : i1 to i32
    %358 = arith.sitofp %357 : i32 to f32
    %359 = vector.broadcast %358 : f32 to vector<1x128xf32>
    %360 = arith.mulf %359, %355 : vector<1x128xf32>
    %361 = arith.addf %293, %360 : vector<1x128xf32>
    %c5_i32 = arith.constant 5 : i32
    %362 = arith.addi %1, %c5_i32 : i32
    %cst_279 = arith.constant 0.000000e+00 : f32
    %363 = vector.broadcast %cst_279 : f32 to vector<16x128xf32>
    %c0_i32_280 = arith.constant 0 : i32
    %364 = arith.addi %362, %c0_i32_280 : i32
    %c0_281 = arith.constant 0 : index
    %365 = arith.index_cast %364 : i32 to index
    %c0_282 = arith.constant 0 : index
    %c0_283 = arith.constant 0 : index
    %366 = vector.load %arg2[%c0_281, %365, %c0_282, %c0_283] : memref<1x18x18x3xbf16, #tpu.memory_space<vmem>>, vector<1x1x16x3xbf16>
    %367 = vector.shape_cast %366 : vector<1x1x16x3xbf16> to vector<16x3xbf16>
    %cst_284 = arith.constant dense<0.000000e+00> : vector<16x128xf32>
    %368 = tpu.matmul %367, %4, %cst_284 {dimension_numbers = #tpu.dot_dimension_numbers<[1], [0], [0], [1], [0, 0, 1, 1], [], []>} : vector<16x3xbf16>, vector<3x128xbf16>, vector<16x128xf32> -> vector<16x128xf32>
    %369 = arith.addf %363, %368 : vector<16x128xf32>
    %c0_i32_285 = arith.constant 0 : i32
    %370 = arith.addi %362, %c0_i32_285 : i32
    %c0_286 = arith.constant 0 : index
    %371 = arith.index_cast %370 : i32 to index
    %c1_287 = arith.constant 1 : index
    %c0_288 = arith.constant 0 : index
    %372 = vector.load %arg2[%c0_286, %371, %c1_287, %c0_288] : memref<1x18x18x3xbf16, #tpu.memory_space<vmem>>, vector<1x1x16x3xbf16>
    %373 = vector.shape_cast %372 : vector<1x1x16x3xbf16> to vector<16x3xbf16>
    %cst_289 = arith.constant dense<0.000000e+00> : vector<16x128xf32>
    %374 = tpu.matmul %373, %6, %cst_289 {dimension_numbers = #tpu.dot_dimension_numbers<[1], [0], [0], [1], [0, 0, 1, 1], [], []>} : vector<16x3xbf16>, vector<3x128xbf16>, vector<16x128xf32> -> vector<16x128xf32>
    %375 = arith.addf %369, %374 : vector<16x128xf32>
    %c0_i32_290 = arith.constant 0 : i32
    %376 = arith.addi %362, %c0_i32_290 : i32
    %c0_291 = arith.constant 0 : index
    %377 = arith.index_cast %376 : i32 to index
    %c2_292 = arith.constant 2 : index
    %c0_293 = arith.constant 0 : index
    %378 = vector.load %arg2[%c0_291, %377, %c2_292, %c0_293] : memref<1x18x18x3xbf16, #tpu.memory_space<vmem>>, vector<1x1x16x3xbf16>
    %379 = vector.shape_cast %378 : vector<1x1x16x3xbf16> to vector<16x3xbf16>
    %cst_294 = arith.constant dense<0.000000e+00> : vector<16x128xf32>
    %380 = tpu.matmul %379, %8, %cst_294 {dimension_numbers = #tpu.dot_dimension_numbers<[1], [0], [0], [1], [0, 0, 1, 1], [], []>} : vector<16x3xbf16>, vector<3x128xbf16>, vector<16x128xf32> -> vector<16x128xf32>
    %381 = arith.addf %375, %380 : vector<16x128xf32>
    %c1_i32_295 = arith.constant 1 : i32
    %382 = arith.addi %362, %c1_i32_295 : i32
    %c0_296 = arith.constant 0 : index
    %383 = arith.index_cast %382 : i32 to index
    %c0_297 = arith.constant 0 : index
    %c0_298 = arith.constant 0 : index
    %384 = vector.load %arg2[%c0_296, %383, %c0_297, %c0_298] : memref<1x18x18x3xbf16, #tpu.memory_space<vmem>>, vector<1x1x16x3xbf16>
    %385 = vector.shape_cast %384 : vector<1x1x16x3xbf16> to vector<16x3xbf16>
    %cst_299 = arith.constant dense<0.000000e+00> : vector<16x128xf32>
    %386 = tpu.matmul %385, %10, %cst_299 {dimension_numbers = #tpu.dot_dimension_numbers<[1], [0], [0], [1], [0, 0, 1, 1], [], []>} : vector<16x3xbf16>, vector<3x128xbf16>, vector<16x128xf32> -> vector<16x128xf32>
    %387 = arith.addf %381, %386 : vector<16x128xf32>
    %c1_i32_300 = arith.constant 1 : i32
    %388 = arith.addi %362, %c1_i32_300 : i32
    %c0_301 = arith.constant 0 : index
    %389 = arith.index_cast %388 : i32 to index
    %c1_302 = arith.constant 1 : index
    %c0_303 = arith.constant 0 : index
    %390 = vector.load %arg2[%c0_301, %389, %c1_302, %c0_303] : memref<1x18x18x3xbf16, #tpu.memory_space<vmem>>, vector<1x1x16x3xbf16>
    %391 = vector.shape_cast %390 : vector<1x1x16x3xbf16> to vector<16x3xbf16>
    %cst_304 = arith.constant dense<0.000000e+00> : vector<16x128xf32>
    %392 = tpu.matmul %391, %12, %cst_304 {dimension_numbers = #tpu.dot_dimension_numbers<[1], [0], [0], [1], [0, 0, 1, 1], [], []>} : vector<16x3xbf16>, vector<3x128xbf16>, vector<16x128xf32> -> vector<16x128xf32>
    %393 = arith.addf %387, %392 : vector<16x128xf32>
    %c1_i32_305 = arith.constant 1 : i32
    %394 = arith.addi %362, %c1_i32_305 : i32
    %c0_306 = arith.constant 0 : index
    %395 = arith.index_cast %394 : i32 to index
    %c2_307 = arith.constant 2 : index
    %c0_308 = arith.constant 0 : index
    %396 = vector.load %arg2[%c0_306, %395, %c2_307, %c0_308] : memref<1x18x18x3xbf16, #tpu.memory_space<vmem>>, vector<1x1x16x3xbf16>
    %397 = vector.shape_cast %396 : vector<1x1x16x3xbf16> to vector<16x3xbf16>
    %cst_309 = arith.constant dense<0.000000e+00> : vector<16x128xf32>
    %398 = tpu.matmul %397, %14, %cst_309 {dimension_numbers = #tpu.dot_dimension_numbers<[1], [0], [0], [1], [0, 0, 1, 1], [], []>} : vector<16x3xbf16>, vector<3x128xbf16>, vector<16x128xf32> -> vector<16x128xf32>
    %399 = arith.addf %393, %398 : vector<16x128xf32>
    %c2_i32_310 = arith.constant 2 : i32
    %400 = arith.addi %362, %c2_i32_310 : i32
    %c0_311 = arith.constant 0 : index
    %401 = arith.index_cast %400 : i32 to index
    %c0_312 = arith.constant 0 : index
    %c0_313 = arith.constant 0 : index
    %402 = vector.load %arg2[%c0_311, %401, %c0_312, %c0_313] : memref<1x18x18x3xbf16, #tpu.memory_space<vmem>>, vector<1x1x16x3xbf16>
    %403 = vector.shape_cast %402 : vector<1x1x16x3xbf16> to vector<16x3xbf16>
    %cst_314 = arith.constant dense<0.000000e+00> : vector<16x128xf32>
    %404 = tpu.matmul %403, %16, %cst_314 {dimension_numbers = #tpu.dot_dimension_numbers<[1], [0], [0], [1], [0, 0, 1, 1], [], []>} : vector<16x3xbf16>, vector<3x128xbf16>, vector<16x128xf32> -> vector<16x128xf32>
    %405 = arith.addf %399, %404 : vector<16x128xf32>
    %c2_i32_315 = arith.constant 2 : i32
    %406 = arith.addi %362, %c2_i32_315 : i32
    %c0_316 = arith.constant 0 : index
    %407 = arith.index_cast %406 : i32 to index
    %c1_317 = arith.constant 1 : index
    %c0_318 = arith.constant 0 : index
    %408 = vector.load %arg2[%c0_316, %407, %c1_317, %c0_318] : memref<1x18x18x3xbf16, #tpu.memory_space<vmem>>, vector<1x1x16x3xbf16>
    %409 = vector.shape_cast %408 : vector<1x1x16x3xbf16> to vector<16x3xbf16>
    %cst_319 = arith.constant dense<0.000000e+00> : vector<16x128xf32>
    %410 = tpu.matmul %409, %18, %cst_319 {dimension_numbers = #tpu.dot_dimension_numbers<[1], [0], [0], [1], [0, 0, 1, 1], [], []>} : vector<16x3xbf16>, vector<3x128xbf16>, vector<16x128xf32> -> vector<16x128xf32>
    %411 = arith.addf %405, %410 : vector<16x128xf32>
    %c2_i32_320 = arith.constant 2 : i32
    %412 = arith.addi %362, %c2_i32_320 : i32
    %c0_321 = arith.constant 0 : index
    %413 = arith.index_cast %412 : i32 to index
    %c2_322 = arith.constant 2 : index
    %c0_323 = arith.constant 0 : index
    %414 = vector.load %arg2[%c0_321, %413, %c2_322, %c0_323] : memref<1x18x18x3xbf16, #tpu.memory_space<vmem>>, vector<1x1x16x3xbf16>
    %415 = vector.shape_cast %414 : vector<1x1x16x3xbf16> to vector<16x3xbf16>
    %cst_324 = arith.constant dense<0.000000e+00> : vector<16x128xf32>
    %416 = tpu.matmul %415, %20, %cst_324 {dimension_numbers = #tpu.dot_dimension_numbers<[1], [0], [0], [1], [0, 0, 1, 1], [], []>} : vector<16x3xbf16>, vector<3x128xbf16>, vector<16x128xf32> -> vector<16x128xf32>
    %417 = arith.addf %411, %416 : vector<16x128xf32>
    %418 = vector.broadcast %2 : vector<1x128xf32> to vector<16x128xf32>
    %419 = arith.addf %417, %418 : vector<16x128xf32>
    %cst_325 = arith.constant 0.000000e+00 : f32
    %420 = vector.broadcast %cst_325 : f32 to vector<16x128xf32>
    %421 = arith.maximumf %419, %420 : vector<16x128xf32>
    %cst_326 = arith.constant dense<0.000000e+00> : vector<128xf32>
    %422 = vector.multi_reduction <add>, %421, %cst_326 [0] : vector<16x128xf32> to vector<128xf32>
    %423 = vector.shape_cast %422 : vector<128xf32> to vector<1x128xf32>
    %c16_i32_327 = arith.constant 16 : i32
    %424 = arith.cmpi slt, %362, %c16_i32_327 : i32
    %425 = arith.extui %424 : i1 to i32
    %426 = arith.sitofp %425 : i32 to f32
    %427 = vector.broadcast %426 : f32 to vector<1x128xf32>
    %428 = arith.mulf %427, %423 : vector<1x128xf32>
    %429 = arith.addf %361, %428 : vector<1x128xf32>
    %c6_i32 = arith.constant 6 : i32
    %430 = arith.addi %1, %c6_i32 : i32
    %cst_328 = arith.constant 0.000000e+00 : f32
    %431 = vector.broadcast %cst_328 : f32 to vector<16x128xf32>
    %c0_i32_329 = arith.constant 0 : i32
    %432 = arith.addi %430, %c0_i32_329 : i32
    %c0_330 = arith.constant 0 : index
    %433 = arith.index_cast %432 : i32 to index
    %c0_331 = arith.constant 0 : index
    %c0_332 = arith.constant 0 : index
    %434 = vector.load %arg2[%c0_330, %433, %c0_331, %c0_332] : memref<1x18x18x3xbf16, #tpu.memory_space<vmem>>, vector<1x1x16x3xbf16>
    %435 = vector.shape_cast %434 : vector<1x1x16x3xbf16> to vector<16x3xbf16>
    %cst_333 = arith.constant dense<0.000000e+00> : vector<16x128xf32>
    %436 = tpu.matmul %435, %4, %cst_333 {dimension_numbers = #tpu.dot_dimension_numbers<[1], [0], [0], [1], [0, 0, 1, 1], [], []>} : vector<16x3xbf16>, vector<3x128xbf16>, vector<16x128xf32> -> vector<16x128xf32>
    %437 = arith.addf %431, %436 : vector<16x128xf32>
    %c0_i32_334 = arith.constant 0 : i32
    %438 = arith.addi %430, %c0_i32_334 : i32
    %c0_335 = arith.constant 0 : index
    %439 = arith.index_cast %438 : i32 to index
    %c1_336 = arith.constant 1 : index
    %c0_337 = arith.constant 0 : index
    %440 = vector.load %arg2[%c0_335, %439, %c1_336, %c0_337] : memref<1x18x18x3xbf16, #tpu.memory_space<vmem>>, vector<1x1x16x3xbf16>
    %441 = vector.shape_cast %440 : vector<1x1x16x3xbf16> to vector<16x3xbf16>
    %cst_338 = arith.constant dense<0.000000e+00> : vector<16x128xf32>
    %442 = tpu.matmul %441, %6, %cst_338 {dimension_numbers = #tpu.dot_dimension_numbers<[1], [0], [0], [1], [0, 0, 1, 1], [], []>} : vector<16x3xbf16>, vector<3x128xbf16>, vector<16x128xf32> -> vector<16x128xf32>
    %443 = arith.addf %437, %442 : vector<16x128xf32>
    %c0_i32_339 = arith.constant 0 : i32
    %444 = arith.addi %430, %c0_i32_339 : i32
    %c0_340 = arith.constant 0 : index
    %445 = arith.index_cast %444 : i32 to index
    %c2_341 = arith.constant 2 : index
    %c0_342 = arith.constant 0 : index
    %446 = vector.load %arg2[%c0_340, %445, %c2_341, %c0_342] : memref<1x18x18x3xbf16, #tpu.memory_space<vmem>>, vector<1x1x16x3xbf16>
    %447 = vector.shape_cast %446 : vector<1x1x16x3xbf16> to vector<16x3xbf16>
    %cst_343 = arith.constant dense<0.000000e+00> : vector<16x128xf32>
    %448 = tpu.matmul %447, %8, %cst_343 {dimension_numbers = #tpu.dot_dimension_numbers<[1], [0], [0], [1], [0, 0, 1, 1], [], []>} : vector<16x3xbf16>, vector<3x128xbf16>, vector<16x128xf32> -> vector<16x128xf32>
    %449 = arith.addf %443, %448 : vector<16x128xf32>
    %c1_i32_344 = arith.constant 1 : i32
    %450 = arith.addi %430, %c1_i32_344 : i32
    %c0_345 = arith.constant 0 : index
    %451 = arith.index_cast %450 : i32 to index
    %c0_346 = arith.constant 0 : index
    %c0_347 = arith.constant 0 : index
    %452 = vector.load %arg2[%c0_345, %451, %c0_346, %c0_347] : memref<1x18x18x3xbf16, #tpu.memory_space<vmem>>, vector<1x1x16x3xbf16>
    %453 = vector.shape_cast %452 : vector<1x1x16x3xbf16> to vector<16x3xbf16>
    %cst_348 = arith.constant dense<0.000000e+00> : vector<16x128xf32>
    %454 = tpu.matmul %453, %10, %cst_348 {dimension_numbers = #tpu.dot_dimension_numbers<[1], [0], [0], [1], [0, 0, 1, 1], [], []>} : vector<16x3xbf16>, vector<3x128xbf16>, vector<16x128xf32> -> vector<16x128xf32>
    %455 = arith.addf %449, %454 : vector<16x128xf32>
    %c1_i32_349 = arith.constant 1 : i32
    %456 = arith.addi %430, %c1_i32_349 : i32
    %c0_350 = arith.constant 0 : index
    %457 = arith.index_cast %456 : i32 to index
    %c1_351 = arith.constant 1 : index
    %c0_352 = arith.constant 0 : index
    %458 = vector.load %arg2[%c0_350, %457, %c1_351, %c0_352] : memref<1x18x18x3xbf16, #tpu.memory_space<vmem>>, vector<1x1x16x3xbf16>
    %459 = vector.shape_cast %458 : vector<1x1x16x3xbf16> to vector<16x3xbf16>
    %cst_353 = arith.constant dense<0.000000e+00> : vector<16x128xf32>
    %460 = tpu.matmul %459, %12, %cst_353 {dimension_numbers = #tpu.dot_dimension_numbers<[1], [0], [0], [1], [0, 0, 1, 1], [], []>} : vector<16x3xbf16>, vector<3x128xbf16>, vector<16x128xf32> -> vector<16x128xf32>
    %461 = arith.addf %455, %460 : vector<16x128xf32>
    %c1_i32_354 = arith.constant 1 : i32
    %462 = arith.addi %430, %c1_i32_354 : i32
    %c0_355 = arith.constant 0 : index
    %463 = arith.index_cast %462 : i32 to index
    %c2_356 = arith.constant 2 : index
    %c0_357 = arith.constant 0 : index
    %464 = vector.load %arg2[%c0_355, %463, %c2_356, %c0_357] : memref<1x18x18x3xbf16, #tpu.memory_space<vmem>>, vector<1x1x16x3xbf16>
    %465 = vector.shape_cast %464 : vector<1x1x16x3xbf16> to vector<16x3xbf16>
    %cst_358 = arith.constant dense<0.000000e+00> : vector<16x128xf32>
    %466 = tpu.matmul %465, %14, %cst_358 {dimension_numbers = #tpu.dot_dimension_numbers<[1], [0], [0], [1], [0, 0, 1, 1], [], []>} : vector<16x3xbf16>, vector<3x128xbf16>, vector<16x128xf32> -> vector<16x128xf32>
    %467 = arith.addf %461, %466 : vector<16x128xf32>
    %c2_i32_359 = arith.constant 2 : i32
    %468 = arith.addi %430, %c2_i32_359 : i32
    %c0_360 = arith.constant 0 : index
    %469 = arith.index_cast %468 : i32 to index
    %c0_361 = arith.constant 0 : index
    %c0_362 = arith.constant 0 : index
    %470 = vector.load %arg2[%c0_360, %469, %c0_361, %c0_362] : memref<1x18x18x3xbf16, #tpu.memory_space<vmem>>, vector<1x1x16x3xbf16>
    %471 = vector.shape_cast %470 : vector<1x1x16x3xbf16> to vector<16x3xbf16>
    %cst_363 = arith.constant dense<0.000000e+00> : vector<16x128xf32>
    %472 = tpu.matmul %471, %16, %cst_363 {dimension_numbers = #tpu.dot_dimension_numbers<[1], [0], [0], [1], [0, 0, 1, 1], [], []>} : vector<16x3xbf16>, vector<3x128xbf16>, vector<16x128xf32> -> vector<16x128xf32>
    %473 = arith.addf %467, %472 : vector<16x128xf32>
    %c2_i32_364 = arith.constant 2 : i32
    %474 = arith.addi %430, %c2_i32_364 : i32
    %c0_365 = arith.constant 0 : index
    %475 = arith.index_cast %474 : i32 to index
    %c1_366 = arith.constant 1 : index
    %c0_367 = arith.constant 0 : index
    %476 = vector.load %arg2[%c0_365, %475, %c1_366, %c0_367] : memref<1x18x18x3xbf16, #tpu.memory_space<vmem>>, vector<1x1x16x3xbf16>
    %477 = vector.shape_cast %476 : vector<1x1x16x3xbf16> to vector<16x3xbf16>
    %cst_368 = arith.constant dense<0.000000e+00> : vector<16x128xf32>
    %478 = tpu.matmul %477, %18, %cst_368 {dimension_numbers = #tpu.dot_dimension_numbers<[1], [0], [0], [1], [0, 0, 1, 1], [], []>} : vector<16x3xbf16>, vector<3x128xbf16>, vector<16x128xf32> -> vector<16x128xf32>
    %479 = arith.addf %473, %478 : vector<16x128xf32>
    %c2_i32_369 = arith.constant 2 : i32
    %480 = arith.addi %430, %c2_i32_369 : i32
    %c0_370 = arith.constant 0 : index
    %481 = arith.index_cast %480 : i32 to index
    %c2_371 = arith.constant 2 : index
    %c0_372 = arith.constant 0 : index
    %482 = vector.load %arg2[%c0_370, %481, %c2_371, %c0_372] : memref<1x18x18x3xbf16, #tpu.memory_space<vmem>>, vector<1x1x16x3xbf16>
    %483 = vector.shape_cast %482 : vector<1x1x16x3xbf16> to vector<16x3xbf16>
    %cst_373 = arith.constant dense<0.000000e+00> : vector<16x128xf32>
    %484 = tpu.matmul %483, %20, %cst_373 {dimension_numbers = #tpu.dot_dimension_numbers<[1], [0], [0], [1], [0, 0, 1, 1], [], []>} : vector<16x3xbf16>, vector<3x128xbf16>, vector<16x128xf32> -> vector<16x128xf32>
    %485 = arith.addf %479, %484 : vector<16x128xf32>
    %486 = vector.broadcast %2 : vector<1x128xf32> to vector<16x128xf32>
    %487 = arith.addf %485, %486 : vector<16x128xf32>
    %cst_374 = arith.constant 0.000000e+00 : f32
    %488 = vector.broadcast %cst_374 : f32 to vector<16x128xf32>
    %489 = arith.maximumf %487, %488 : vector<16x128xf32>
    %cst_375 = arith.constant dense<0.000000e+00> : vector<128xf32>
    %490 = vector.multi_reduction <add>, %489, %cst_375 [0] : vector<16x128xf32> to vector<128xf32>
    %491 = vector.shape_cast %490 : vector<128xf32> to vector<1x128xf32>
    %c16_i32_376 = arith.constant 16 : i32
    %492 = arith.cmpi slt, %430, %c16_i32_376 : i32
    %493 = arith.extui %492 : i1 to i32
    %494 = arith.sitofp %493 : i32 to f32
    %495 = vector.broadcast %494 : f32 to vector<1x128xf32>
    %496 = arith.mulf %495, %491 : vector<1x128xf32>
    %497 = arith.addf %429, %496 : vector<1x128xf32>
    %c7_i32 = arith.constant 7 : i32
    %498 = arith.addi %1, %c7_i32 : i32
    %cst_377 = arith.constant 0.000000e+00 : f32
    %499 = vector.broadcast %cst_377 : f32 to vector<16x128xf32>
    %c0_i32_378 = arith.constant 0 : i32
    %500 = arith.addi %498, %c0_i32_378 : i32
    %c0_379 = arith.constant 0 : index
    %501 = arith.index_cast %500 : i32 to index
    %c0_380 = arith.constant 0 : index
    %c0_381 = arith.constant 0 : index
    %502 = vector.load %arg2[%c0_379, %501, %c0_380, %c0_381] : memref<1x18x18x3xbf16, #tpu.memory_space<vmem>>, vector<1x1x16x3xbf16>
    %503 = vector.shape_cast %502 : vector<1x1x16x3xbf16> to vector<16x3xbf16>
    %cst_382 = arith.constant dense<0.000000e+00> : vector<16x128xf32>
    %504 = tpu.matmul %503, %4, %cst_382 {dimension_numbers = #tpu.dot_dimension_numbers<[1], [0], [0], [1], [0, 0, 1, 1], [], []>} : vector<16x3xbf16>, vector<3x128xbf16>, vector<16x128xf32> -> vector<16x128xf32>
    %505 = arith.addf %499, %504 : vector<16x128xf32>
    %c0_i32_383 = arith.constant 0 : i32
    %506 = arith.addi %498, %c0_i32_383 : i32
    %c0_384 = arith.constant 0 : index
    %507 = arith.index_cast %506 : i32 to index
    %c1_385 = arith.constant 1 : index
    %c0_386 = arith.constant 0 : index
    %508 = vector.load %arg2[%c0_384, %507, %c1_385, %c0_386] : memref<1x18x18x3xbf16, #tpu.memory_space<vmem>>, vector<1x1x16x3xbf16>
    %509 = vector.shape_cast %508 : vector<1x1x16x3xbf16> to vector<16x3xbf16>
    %cst_387 = arith.constant dense<0.000000e+00> : vector<16x128xf32>
    %510 = tpu.matmul %509, %6, %cst_387 {dimension_numbers = #tpu.dot_dimension_numbers<[1], [0], [0], [1], [0, 0, 1, 1], [], []>} : vector<16x3xbf16>, vector<3x128xbf16>, vector<16x128xf32> -> vector<16x128xf32>
    %511 = arith.addf %505, %510 : vector<16x128xf32>
    %c0_i32_388 = arith.constant 0 : i32
    %512 = arith.addi %498, %c0_i32_388 : i32
    %c0_389 = arith.constant 0 : index
    %513 = arith.index_cast %512 : i32 to index
    %c2_390 = arith.constant 2 : index
    %c0_391 = arith.constant 0 : index
    %514 = vector.load %arg2[%c0_389, %513, %c2_390, %c0_391] : memref<1x18x18x3xbf16, #tpu.memory_space<vmem>>, vector<1x1x16x3xbf16>
    %515 = vector.shape_cast %514 : vector<1x1x16x3xbf16> to vector<16x3xbf16>
    %cst_392 = arith.constant dense<0.000000e+00> : vector<16x128xf32>
    %516 = tpu.matmul %515, %8, %cst_392 {dimension_numbers = #tpu.dot_dimension_numbers<[1], [0], [0], [1], [0, 0, 1, 1], [], []>} : vector<16x3xbf16>, vector<3x128xbf16>, vector<16x128xf32> -> vector<16x128xf32>
    %517 = arith.addf %511, %516 : vector<16x128xf32>
    %c1_i32_393 = arith.constant 1 : i32
    %518 = arith.addi %498, %c1_i32_393 : i32
    %c0_394 = arith.constant 0 : index
    %519 = arith.index_cast %518 : i32 to index
    %c0_395 = arith.constant 0 : index
    %c0_396 = arith.constant 0 : index
    %520 = vector.load %arg2[%c0_394, %519, %c0_395, %c0_396] : memref<1x18x18x3xbf16, #tpu.memory_space<vmem>>, vector<1x1x16x3xbf16>
    %521 = vector.shape_cast %520 : vector<1x1x16x3xbf16> to vector<16x3xbf16>
    %cst_397 = arith.constant dense<0.000000e+00> : vector<16x128xf32>
    %522 = tpu.matmul %521, %10, %cst_397 {dimension_numbers = #tpu.dot_dimension_numbers<[1], [0], [0], [1], [0, 0, 1, 1], [], []>} : vector<16x3xbf16>, vector<3x128xbf16>, vector<16x128xf32> -> vector<16x128xf32>
    %523 = arith.addf %517, %522 : vector<16x128xf32>
    %c1_i32_398 = arith.constant 1 : i32
    %524 = arith.addi %498, %c1_i32_398 : i32
    %c0_399 = arith.constant 0 : index
    %525 = arith.index_cast %524 : i32 to index
    %c1_400 = arith.constant 1 : index
    %c0_401 = arith.constant 0 : index
    %526 = vector.load %arg2[%c0_399, %525, %c1_400, %c0_401] : memref<1x18x18x3xbf16, #tpu.memory_space<vmem>>, vector<1x1x16x3xbf16>
    %527 = vector.shape_cast %526 : vector<1x1x16x3xbf16> to vector<16x3xbf16>
    %cst_402 = arith.constant dense<0.000000e+00> : vector<16x128xf32>
    %528 = tpu.matmul %527, %12, %cst_402 {dimension_numbers = #tpu.dot_dimension_numbers<[1], [0], [0], [1], [0, 0, 1, 1], [], []>} : vector<16x3xbf16>, vector<3x128xbf16>, vector<16x128xf32> -> vector<16x128xf32>
    %529 = arith.addf %523, %528 : vector<16x128xf32>
    %c1_i32_403 = arith.constant 1 : i32
    %530 = arith.addi %498, %c1_i32_403 : i32
    %c0_404 = arith.constant 0 : index
    %531 = arith.index_cast %530 : i32 to index
    %c2_405 = arith.constant 2 : index
    %c0_406 = arith.constant 0 : index
    %532 = vector.load %arg2[%c0_404, %531, %c2_405, %c0_406] : memref<1x18x18x3xbf16, #tpu.memory_space<vmem>>, vector<1x1x16x3xbf16>
    %533 = vector.shape_cast %532 : vector<1x1x16x3xbf16> to vector<16x3xbf16>
    %cst_407 = arith.constant dense<0.000000e+00> : vector<16x128xf32>
    %534 = tpu.matmul %533, %14, %cst_407 {dimension_numbers = #tpu.dot_dimension_numbers<[1], [0], [0], [1], [0, 0, 1, 1], [], []>} : vector<16x3xbf16>, vector<3x128xbf16>, vector<16x128xf32> -> vector<16x128xf32>
    %535 = arith.addf %529, %534 : vector<16x128xf32>
    %c2_i32_408 = arith.constant 2 : i32
    %536 = arith.addi %498, %c2_i32_408 : i32
    %c0_409 = arith.constant 0 : index
    %537 = arith.index_cast %536 : i32 to index
    %c0_410 = arith.constant 0 : index
    %c0_411 = arith.constant 0 : index
    %538 = vector.load %arg2[%c0_409, %537, %c0_410, %c0_411] : memref<1x18x18x3xbf16, #tpu.memory_space<vmem>>, vector<1x1x16x3xbf16>
    %539 = vector.shape_cast %538 : vector<1x1x16x3xbf16> to vector<16x3xbf16>
    %cst_412 = arith.constant dense<0.000000e+00> : vector<16x128xf32>
    %540 = tpu.matmul %539, %16, %cst_412 {dimension_numbers = #tpu.dot_dimension_numbers<[1], [0], [0], [1], [0, 0, 1, 1], [], []>} : vector<16x3xbf16>, vector<3x128xbf16>, vector<16x128xf32> -> vector<16x128xf32>
    %541 = arith.addf %535, %540 : vector<16x128xf32>
    %c2_i32_413 = arith.constant 2 : i32
    %542 = arith.addi %498, %c2_i32_413 : i32
    %c0_414 = arith.constant 0 : index
    %543 = arith.index_cast %542 : i32 to index
    %c1_415 = arith.constant 1 : index
    %c0_416 = arith.constant 0 : index
    %544 = vector.load %arg2[%c0_414, %543, %c1_415, %c0_416] : memref<1x18x18x3xbf16, #tpu.memory_space<vmem>>, vector<1x1x16x3xbf16>
    %545 = vector.shape_cast %544 : vector<1x1x16x3xbf16> to vector<16x3xbf16>
    %cst_417 = arith.constant dense<0.000000e+00> : vector<16x128xf32>
    %546 = tpu.matmul %545, %18, %cst_417 {dimension_numbers = #tpu.dot_dimension_numbers<[1], [0], [0], [1], [0, 0, 1, 1], [], []>} : vector<16x3xbf16>, vector<3x128xbf16>, vector<16x128xf32> -> vector<16x128xf32>
    %547 = arith.addf %541, %546 : vector<16x128xf32>
    %c2_i32_418 = arith.constant 2 : i32
    %548 = arith.addi %498, %c2_i32_418 : i32
    %c0_419 = arith.constant 0 : index
    %549 = arith.index_cast %548 : i32 to index
    %c2_420 = arith.constant 2 : index
    %c0_421 = arith.constant 0 : index
    %550 = vector.load %arg2[%c0_419, %549, %c2_420, %c0_421] : memref<1x18x18x3xbf16, #tpu.memory_space<vmem>>, vector<1x1x16x3xbf16>
    %551 = vector.shape_cast %550 : vector<1x1x16x3xbf16> to vector<16x3xbf16>
    %cst_422 = arith.constant dense<0.000000e+00> : vector<16x128xf32>
    %552 = tpu.matmul %551, %20, %cst_422 {dimension_numbers = #tpu.dot_dimension_numbers<[1], [0], [0], [1], [0, 0, 1, 1], [], []>} : vector<16x3xbf16>, vector<3x128xbf16>, vector<16x128xf32> -> vector<16x128xf32>
    %553 = arith.addf %547, %552 : vector<16x128xf32>
    %554 = vector.broadcast %2 : vector<1x128xf32> to vector<16x128xf32>
    %555 = arith.addf %553, %554 : vector<16x128xf32>
    %cst_423 = arith.constant 0.000000e+00 : f32
    %556 = vector.broadcast %cst_423 : f32 to vector<16x128xf32>
    %557 = arith.maximumf %555, %556 : vector<16x128xf32>
    %cst_424 = arith.constant dense<0.000000e+00> : vector<128xf32>
    %558 = vector.multi_reduction <add>, %557, %cst_424 [0] : vector<16x128xf32> to vector<128xf32>
    %559 = vector.shape_cast %558 : vector<128xf32> to vector<1x128xf32>
    %c16_i32_425 = arith.constant 16 : i32
    %560 = arith.cmpi slt, %498, %c16_i32_425 : i32
    %561 = arith.extui %560 : i1 to i32
    %562 = arith.sitofp %561 : i32 to f32
    %563 = vector.broadcast %562 : f32 to vector<1x128xf32>
    %564 = arith.mulf %563, %559 : vector<1x128xf32>
    %565 = arith.addf %497, %564 : vector<1x128xf32>
    %c8_i32_426 = arith.constant 8 : i32
    %c0_i32_427 = arith.constant 0 : i32
    %566 = arith.cmpi eq, %arg1, %c0_i32_427 : i32
    %567 = arith.extui %566 : i1 to i32
    %c0_i32_428 = arith.constant 0 : i32
    %568 = arith.cmpi ne, %567, %c0_i32_428 : i32
    scf.if %568 {
      %cst_437 = arith.constant 0.000000e+00 : f32
      %578 = vector.broadcast %cst_437 : f32 to vector<1x128xf32>
      %c0_438 = arith.constant 0 : index
      %c0_439 = arith.constant 0 : index
      %c0_440 = arith.constant 0 : index
      %579 = vector.load %arg5[%c0_438, %c0_439, %c0_440] : memref<1x1x128xf32, #tpu.memory_space<vmem>>, vector<1x1x128xf32>
      %580 = vector.shape_cast %579 : vector<1x1x128xf32> to vector<1x128xf32>
      %581 = vector.shape_cast %578 : vector<1x128xf32> to vector<1x1x128xf32>
      tpu.vector_store %arg5[%c0_438, %c0_439, %c0_440], %581 {strides = array<i32>} : memref<1x1x128xf32, #tpu.memory_space<vmem>>, vector<1x1x128xf32>,
    } else {
    }
    %c0_429 = arith.constant 0 : index
    %c0_430 = arith.constant 0 : index
    %c0_431 = arith.constant 0 : index
    %569 = vector.load %arg5[%c0_429, %c0_430, %c0_431] : memref<1x1x128xf32, #tpu.memory_space<vmem>>, vector<1x1x128xf32>
    %570 = vector.shape_cast %569 : vector<1x1x128xf32> to vector<1x128xf32>
    %571 = arith.addf %570, %565 : vector<1x128xf32>
    %c0_432 = arith.constant 0 : index
    %c0_433 = arith.constant 0 : index
    %c0_434 = arith.constant 0 : index
    %572 = vector.load %arg5[%c0_432, %c0_433, %c0_434] : memref<1x1x128xf32, #tpu.memory_space<vmem>>, vector<1x1x128xf32>
    %573 = vector.shape_cast %572 : vector<1x1x128xf32> to vector<1x128xf32>
    %574 = vector.shape_cast %571 : vector<1x128xf32> to vector<1x1x128xf32>
    tpu.vector_store %arg5[%c0_432, %c0_433, %c0_434], %574 {strides = array<i32>} : memref<1x1x128xf32, #tpu.memory_space<vmem>>, vector<1x1x128xf32>,
    %c1_i32_435 = arith.constant 1 : i32
    %575 = arith.cmpi eq, %arg1, %c1_i32_435 : i32
    %576 = arith.extui %575 : i1 to i32
    %c0_i32_436 = arith.constant 0 : i32
    %577 = arith.cmpi ne, %576, %c0_i32_436 : i32
    scf.if %577 {
      %c0_437 = arith.constant 0 : index
      %c0_438 = arith.constant 0 : index
      %c0_439 = arith.constant 0 : index
      %578 = vector.load %arg5[%c0_437, %c0_438, %c0_439] : memref<1x1x128xf32, #tpu.memory_space<vmem>>, vector<1x1x128xf32>
      %579 = vector.shape_cast %578 : vector<1x1x128xf32> to vector<1x128xf32>
      %cst_440 = arith.constant 3.906250e-03 : f32
      %580 = vector.broadcast %cst_440 : f32 to vector<1x128xf32>
      %581 = arith.mulf %579, %580 : vector<1x128xf32>
      %c0_441 = arith.constant 0 : index
      %c0_442 = arith.constant 0 : index
      %c0_443 = arith.constant 0 : index
      %582 = vector.load %arg5[%c0_441, %c0_442, %c0_443] : memref<1x1x128xf32, #tpu.memory_space<vmem>>, vector<1x1x128xf32>
      %583 = vector.shape_cast %582 : vector<1x1x128xf32> to vector<1x128xf32>
      %584 = vector.shape_cast %581 : vector<1x128xf32> to vector<1x1x128xf32>
      tpu.vector_store %arg5[%c0_441, %c0_442, %c0_443], %584 {strides = array<i32>} : memref<1x1x128xf32, #tpu.memory_space<vmem>>, vector<1x1x128xf32>,
    } else {
    }
    return
  }
  func.func @transform_0(%arg0: i32, %arg1: i32) -> (i32, i32, i32, i32) {
    %c0_i32 = arith.constant 0 : i32
    %c0_i32_0 = arith.constant 0 : i32
    %c0_i32_1 = arith.constant 0 : i32
    %c0_i32_2 = arith.constant 0 : i32
    return %arg0, %c0_i32, %c0_i32_0, %c0_i32_1 : i32, i32, i32, i32
  }
  func.func @transform_1(%arg0: i32, %arg1: i32) -> (i32, i32, i32, i32) {
    %c0_i32 = arith.constant 0 : i32
    %c0_i32_0 = arith.constant 0 : i32
    %c0_i32_1 = arith.constant 0 : i32
    %c0_i32_2 = arith.constant 0 : i32
    %c0_i32_3 = arith.constant 0 : i32
    return %c0_i32, %c0_i32_0, %c0_i32_1, %c0_i32_2 : i32, i32, i32, i32
  }
  func.func @transform_2(%arg0: i32, %arg1: i32) -> (i32, i32) {
    %c0_i32 = arith.constant 0 : i32
    %c0_i32_0 = arith.constant 0 : i32
    %c0_i32_1 = arith.constant 0 : i32
    return %c0_i32, %c0_i32_0 : i32, i32
  }
  func.func @transform_3(%arg0: i32, %arg1: i32) -> (i32, i32, i32) {
    %c0_i32 = arith.constant 0 : i32
    %c0_i32_0 = arith.constant 0 : i32
    %c0_i32_1 = arith.constant 0 : i32
    return %arg0, %c0_i32, %c0_i32_0 : i32, i32, i32
  }
}

module attributes {stable_mosaic.version = 11 : i64} {
  func.func @linear_bn_kernel(%arg0: i32, %arg1: memref<4x128xbf16, #tpu.memory_space<vmem>>, %arg2: memref<128x128xbf16, #tpu.memory_space<vmem>>, %arg3: memref<1x128xf32, #tpu.memory_space<vmem>>, %arg4: memref<1x128xf32, #tpu.memory_space<vmem>>, %arg5: memref<4x128xf32, #tpu.memory_space<vmem>>) attributes {dimension_semantics = [#tpu.dimension_semantics<parallel>], iteration_bounds = array<i64: 2>, scalar_prefetch = 0 : i64, scratch_operands = 0 : i64, tpu.core_type = #tpu.core_type<tc>, window_params = [{pipeline_mode = #tpu.pipeline_mode<synchronous>, transform_indices = @transform_0, window_bounds = array<i64: 4, 128>}, {transform_indices = @transform_1, window_bounds = array<i64: 128, 128>}, {transform_indices = @transform_2, window_bounds = array<i64: 1, 128>}, {transform_indices = @transform_3, window_bounds = array<i64: 1, 128>}, {transform_indices = @transform_4, window_bounds = array<i64: 4, 128>}]} {
    %c0 = arith.constant 0 : index
    %c0_0 = arith.constant 0 : index
    %0 = vector.load %arg1[%c0, %c0_0] : memref<4x128xbf16, #tpu.memory_space<vmem>>, vector<4x128xbf16>
    %c0_1 = arith.constant 0 : index
    %c0_2 = arith.constant 0 : index
    %1 = vector.load %arg2[%c0_1, %c0_2] : memref<128x128xbf16, #tpu.memory_space<vmem>>, vector<128x128xbf16>
    %cst = arith.constant dense<0.000000e+00> : vector<4x128xf32>
    %2 = tpu.matmul %0, %1, %cst {dimension_numbers = #tpu.dot_dimension_numbers<[1], [0], [0], [1], [0, 0, 1, 1], [], []>} : vector<4x128xbf16>, vector<128x128xbf16>, vector<4x128xf32> -> vector<4x128xf32>
    %cst_3 = arith.constant dense<0.000000e+00> : vector<128xf32>
    %3 = vector.multi_reduction <add>, %2, %cst_3 [0] : vector<4x128xf32> to vector<128xf32>
    %4 = vector.shape_cast %3 : vector<128xf32> to vector<1x128xf32>
    %cst_4 = arith.constant 2.500000e-01 : f32
    %5 = vector.broadcast %cst_4 : f32 to vector<1x128xf32>
    %6 = arith.mulf %4, %5 : vector<1x128xf32>
    %7 = vector.broadcast %6 : vector<1x128xf32> to vector<4x128xf32>
    %8 = arith.subf %2, %7 : vector<4x128xf32>
    %9 = arith.mulf %8, %8 : vector<4x128xf32>
    %cst_5 = arith.constant dense<0.000000e+00> : vector<128xf32>
    %10 = vector.multi_reduction <add>, %9, %cst_5 [0] : vector<4x128xf32> to vector<128xf32>
    %11 = vector.shape_cast %10 : vector<128xf32> to vector<1x128xf32>
    %cst_6 = arith.constant 2.500000e-01 : f32
    %12 = vector.broadcast %cst_6 : f32 to vector<1x128xf32>
    %13 = arith.mulf %11, %12 : vector<1x128xf32>
    %c0_7 = arith.constant 0 : index
    %c0_8 = arith.constant 0 : index
    %14 = vector.load %arg3[%c0_7, %c0_8] : memref<1x128xf32, #tpu.memory_space<vmem>>, vector<1x128xf32>
    %cst_9 = arith.constant 9.99999974E-6 : f32
    %15 = vector.broadcast %cst_9 : f32 to vector<1x128xf32>
    %16 = arith.addf %13, %15 : vector<1x128xf32>
    %17 = math.rsqrt %16 : vector<1x128xf32>
    %18 = vector.broadcast %17 : vector<1x128xf32> to vector<4x128xf32>
    %19 = arith.mulf %8, %18 : vector<4x128xf32>
    %20 = vector.broadcast %14 : vector<1x128xf32> to vector<4x128xf32>
    %21 = arith.mulf %20, %19 : vector<4x128xf32>
    %c0_10 = arith.constant 0 : index
    %c0_11 = arith.constant 0 : index
    %22 = vector.load %arg4[%c0_10, %c0_11] : memref<1x128xf32, #tpu.memory_space<vmem>>, vector<1x128xf32>
    %23 = vector.broadcast %22 : vector<1x128xf32> to vector<4x128xf32>
    %24 = arith.addf %21, %23 : vector<4x128xf32>
    %c0_12 = arith.constant 0 : index
    %c0_13 = arith.constant 0 : index
    %25 = vector.load %arg5[%c0_12, %c0_13] : memref<4x128xf32, #tpu.memory_space<vmem>>, vector<4x128xf32>
    tpu.vector_store %arg5[%c0_12, %c0_13], %24 {strides = array<i32>} : memref<4x128xf32, #tpu.memory_space<vmem>>, vector<4x128xf32>,
    return
  }
  func.func @transform_0(%arg0: i32) -> (i32, i32) {
    %c0_i32 = arith.constant 0 : i32
    %c0_i32_0 = arith.constant 0 : i32
    %c0_i32_1 = arith.constant 0 : i32
    return %c0_i32, %c0_i32_0 : i32, i32
  }
  func.func @transform_1(%arg0: i32) -> (i32, i32) {
    %c0_i32 = arith.constant 0 : i32
    %c0_i32_0 = arith.constant 0 : i32
    return %c0_i32, %arg0 : i32, i32
  }
  func.func @transform_2(%arg0: i32) -> (i32, i32) {
    %c0_i32 = arith.constant 0 : i32
    %c0_i32_0 = arith.constant 0 : i32
    return %c0_i32, %arg0 : i32, i32
  }
  func.func @transform_3(%arg0: i32) -> (i32, i32) {
    %c0_i32 = arith.constant 0 : i32
    %c0_i32_0 = arith.constant 0 : i32
    return %c0_i32, %arg0 : i32, i32
  }
  func.func @transform_4(%arg0: i32) -> (i32, i32) {
    %c0_i32 = arith.constant 0 : i32
    %c0_i32_0 = arith.constant 0 : i32
    return %c0_i32, %arg0 : i32, i32
  }
}

</mosaic_0001>

<llo_original>
// kernel: cnn_forward.3
$region0: #{cnn_forward.3}
  #allocation0 [shape = 'u32[]', space=smem, size = 0x4, offset = 0x4, fixed_abs, tag = 'smem constant byte address 0x4 - core index']
  #allocation1 [shape = 'u32[144,128]{1,0:T(1,128)}', space=vmem, size = 0x12000, scoped, tag = 'internal scratch']
  %s0 = inlined_call_operand.vmem [shape: bf16[4,128], index: 0, kind: input, shape index: {}]
  %s1 = inlined_call_operand.vmem [shape: bf16[128,256], index: 1, kind: input, shape index: {}]
  %s2 = inlined_call_operand.vmem [shape: f32[1,256], index: 2, kind: input, shape index: {}]
  %s3 = inlined_call_operand.vmem [shape: f32[1,256], index: 3, kind: input, shape index: {}]
  %s4 = inlined_call_operand.hbm [shape: f32[4,256], index: 4, kind: output, shape index: {}]
  %s5 = sld [smem:[#allocation0]]
  $region90: #{cnn_forward.3} parent=0
    _
  %s7 = ssub.s32 1, %s5
  %s8 = scalar_select 0, %s7, %s5
  $region1: #{cnn_forward.3} parent=0
    #allocation2 [shape = 'u8[65536]{0}', space=vmem, size = 0x10000, scoped, tag = 'input window, operand 1']
    #allocation3 [shape = 'u8[4096]{0}', space=vmem, size = 0x1000, scoped, tag = 'output window, operand 0']
    #allocation4 [shape = 's32[2]{0}', space=sflag, size = 0x8, scoped, tag = 'scoped memory for cnn_forward.3']
    %9 = vsyncpa [#allocation4], 0
    %s10 = scalar_lea.sflag [#allocation4], 1
    %11 = vsyncpa %s10, 0
    loop: start=0, step=1, limit=4
    $region2: #{cnn_forward.3} parent=1 // loop_pre_header
      _
    $region3: #{cnn_forward.3} parent=1 // loop_header
      %s13 = sphi 0, %s17
      %p14 = scmp.ge.s32.totalorder %s13, 4
      %s21 = sphi 0, %s21
      %s23 = sphi 0, %s21
      %s24 = sphi 0, %s23
      %s38 = sphi 0, %s24
      %s44 = sphi 0, %s46
      %s47 = sphi 0, %s44
      %s48 = sphi 0, %s47
      %s64 = sphi 0, %s48
      %s70 = sphi 0, %s72
      %s73 = sphi 0, %s70
      %s74 = sphi 0, %s73
      %s90 = sphi 0, %s74
      %s96 = sphi 0, %s98
      %s99 = sphi 0, %s96
      %s100 = sphi 0, %s99
      %s116 = sphi 0, %s100
      %s122 = sphi 0, %s124
      %s125 = sphi 0, %s122
      %s126 = sphi 0, %s125
      %s142 = sphi 0, %s126
    $region4: #{cnn_forward.3} parent=1 // loop_header_branch
      %16 = sbr.rel (%p14) target = $region8
    $region5: #{cnn_forward.3} parent=1 // loop_body
      %s18 = ssub.s32 %s13, 1
      %s19 = ssub.s32 %s13, 2
      %s20 = sadd.s32 %s13, 1
      %s22 = sadd.s32 %s21, 1
      %p25 = scmp.eq.s32.totalorder %s13, 1
      %p26 = scmp.ne.s32.totalorder %s21, %s23
      %p27 = scmp.eq.s32.totalorder %s13, 0
      %p28 = por %p26, %p27
      %p29 = scmp.ne.s32.totalorder %s21, %s23
      %p30 = scmp.eq.s32.totalorder %s18, 1
      %p31 = por %p29, %p30
      %p32 = scmp.ne.s32.totalorder %s23, %s24
      %p33 = scmp.eq.s32.totalorder %s18, 0
      %p34 = por %p32, %p33
      %p35 = scmp.ne.s32.totalorder %s23, %s24
      %p36 = scmp.eq.s32.totalorder %s19, 1
      %p37 = por %p35, %p36
      %p39 = scmp.ne.s32.totalorder %s24, %s38
      %p40 = scmp.eq.s32.totalorder %s19, 0
      %p41 = por %p39, %p40
      %s42 = ssub.s32 %s13, %s20
      %p43 = scmp.eq.s32.totalorder %s42, 0
      %s45 = sadd.s32 %s44, 1
      %s46 = scalar_select %p43, %s44, %s45
      %p49 = pneg %p43
      %p50 = scmp.eq.s32.totalorder %s13, 1
      %p51 = por %p49, %p50
      %p52 = scmp.ne.s32.totalorder %s44, %s47
      %p53 = scmp.eq.s32.totalorder %s13, 0
      %p54 = por %p52, %p53
      %p55 = scmp.ne.s32.totalorder %s44, %s47
      %p56 = scmp.eq.s32.totalorder %s18, 1
      %p57 = por %p55, %p56
      %p58 = scmp.ne.s32.totalorder %s47, %s48
      %p59 = scmp.eq.s32.totalorder %s18, 0
      %p60 = por %p58, %p59
      %p61 = scmp.ne.s32.totalorder %s47, %s48
      %p62 = scmp.eq.s32.totalorder %s19, 1
      %p63 = por %p61, %p62
      %p65 = scmp.ne.s32.totalorder %s48, %s64
      %p66 = scmp.eq.s32.totalorder %s19, 0
      %p67 = por %p65, %p66
      %s68 = ssub.s32 %s13, %s20
      %p69 = scmp.eq.s32.totalorder %s68, 0
      %s71 = sadd.s32 %s70, 1
      %s72 = scalar_select %p69, %s70, %s71
      %p75 = pneg %p69
      %p76 = scmp.eq.s32.totalorder %s13, 1
      %p77 = por %p75, %p76
      %p78 = scmp.ne.s32.totalorder %s70, %s73
      %p79 = scmp.eq.s32.totalorder %s13, 0
      %p80 = por %p78, %p79
      %p81 = scmp.ne.s32.totalorder %s70, %s73
      %p82 = scmp.eq.s32.totalorder %s18, 1
      %p83 = por %p81, %p82
      %p84 = scmp.ne.s32.totalorder %s73, %s74
      %p85 = scmp.eq.s32.totalorder %s18, 0
      %p86 = por %p84, %p85
      %p87 = scmp.ne.s32.totalorder %s73, %s74
      %p88 = scmp.eq.s32.totalorder %s19, 1
      %p89 = por %p87, %p88
      %p91 = scmp.ne.s32.totalorder %s74, %s90
      %p92 = scmp.eq.s32.totalorder %s19, 0
      %p93 = por %p91, %p92
      %s94 = ssub.s32 %s13, %s20
      %p95 = scmp.eq.s32.totalorder %s94, 0
      %s97 = sadd.s32 %s96, 1
      %s98 = scalar_select %p95, %s96, %s97
      %p101 = pneg %p95
      %p102 = scmp.eq.s32.totalorder %s13, 1
      %p103 = por %p101, %p102
      %p104 = scmp.ne.s32.totalorder %s96, %s99
      %p105 = scmp.eq.s32.totalorder %s13, 0
      %p106 = por %p104, %p105
      %p107 = scmp.ne.s32.totalorder %s96, %s99
      %p108 = scmp.eq.s32.totalorder %s18, 1
      %p109 = por %p107, %p108
      %p110 = scmp.ne.s32.totalorder %s99, %s100
      %p111 = scmp.eq.s32.totalorder %s18, 0
      %p112 = por %p110, %p111
      %p113 = scmp.ne.s32.totalorder %s99, %s100
      %p114 = scmp.eq.s32.totalorder %s19, 1
      %p115 = por %p113, %p114
      %p117 = scmp.ne.s32.totalorder %s100, %s116
      %p118 = scmp.eq.s32.totalorder %s19, 0
      %p119 = por %p117, %p118
      %s120 = ssub.s32 %s13, %s20
      %p121 = scmp.eq.s32.totalorder %s120, 0
      %s123 = sadd.s32 %s122, 1
      %s124 = scalar_select %p121, %s122, %s123
      %p127 = pneg %p121
      %p128 = scmp.eq.s32.totalorder %s13, 1
      %p129 = por %p127, %p128
      %p130 = scmp.ne.s32.totalorder %s122, %s125
      %p131 = scmp.eq.s32.totalorder %s13, 0
      %p132 = por %p130, %p131
      %p133 = scmp.ne.s32.totalorder %s122, %s125
      %p134 = scmp.eq.s32.totalorder %s18, 1
      %p135 = por %p133, %p134
      %p136 = scmp.ne.s32.totalorder %s125, %s126
      %p137 = scmp.eq.s32.totalorder %s18, 0
      %p138 = por %p136, %p137
      %p139 = scmp.ne.s32.totalorder %s125, %s126
      %p140 = scmp.eq.s32.totalorder %s19, 1
      %p141 = por %p139, %p140
      %p143 = scmp.ne.s32.totalorder %s126, %s142
      %p144 = scmp.eq.s32.totalorder %s19, 0
      %p145 = por %p143, %p144
      %p146 = scmp.le.s32.totalorder 1, %s13
      %p147 = scmp.lt.s32.totalorder %s13, 3
      %p148 = pnand %p146, %p147
      %p149 = pneg %p148
      // Predicated region
      $region9: #{cnn_forward.3} parent=5 // pred_check
        _
      $region10: #{cnn_forward.3} parent=5 // pred_check_branch
        %151 = sbr.rel (%p148) target = $region12
      $region11: #{cnn_forward.3} parent=5 // pred_region
        %s152 = ssub.s32 %s13, 1
        // Predicated region
        $region13: #{cnn_forward.3} parent=11 // pred_check
          %p153 = pneg %p34
        $region14: #{cnn_forward.3} parent=11 // pred_check_branch
          %155 = sbr.rel (%p153) target = $region16
        $region15: #{cnn_forward.3} parent=11 // pred_region
          _
        $region16: #{cnn_forward.3} parent=11 // pred_fallthru
          _
      $region12: #{cnn_forward.3} parent=5 // pred_fallthru
        _
      %p156 = scmp.lt.s32.totalorder %s13, 2
      // Predicated region
      $region17: #{cnn_forward.3} parent=5 // pred_check
        %p157 = pneg %p156
      $region18: #{cnn_forward.3} parent=5 // pred_check_branch
        %159 = sbr.rel (%p157) target = $region20
      $region19: #{cnn_forward.3} parent=5 // pred_region
        // Predicated region
        $region21: #{cnn_forward.3} parent=19 // pred_check
          %p160 = pneg %p54
        $region22: #{cnn_forward.3} parent=19 // pred_check_branch
          %162 = sbr.rel (%p160) target = $region24
        $region23: #{cnn_forward.3} parent=19 // pred_region
          %s163 = sand.u32 %s44, 1
          %s164 = sand.u32 %s44, 1
          %s165 = smul.addr %s164, 64
          %s166 = scalar_lea.vmem [#allocation2], %s165
          %s167 = smul.addr %s13, 4
          %s168 = scalar_lea.vmem %s1, %s167
          // Predicated region
          $region25: #{cnn_forward.3} parent=23 // pred_check
            _
          $region26: #{cnn_forward.3} parent=23 // pred_check_branch
            %170 = sbr.rel (0) target = $region28
          $region27: #{cnn_forward.3} parent=23 // pred_region
            // Predicated region
            $region29: #{cnn_forward.3} parent=27 // pred_check
              _
            $region30: #{cnn_forward.3} parent=27 // pred_check_branch
              %172 = sbr.rel target = $region32
            $region31: #{cnn_forward.3} parent=27 // pred_region
              // Predicated region
              $region44: #{cnn_forward.3} parent=31 // pred_check
                _
              $region45: #{cnn_forward.3} parent=31 // pred_check_branch
                %217 = sbr.rel (0) target = $region47
              $region46: #{cnn_forward.3} parent=31 // pred_region
                loop: start=0, step=1, limit=1
                $region48: #{cnn_forward.3} parent=46 // loop_pre_header
                  _
                $region49: #{cnn_forward.3} parent=46 // loop_header
                  %s219 = sphi 0, %s223
                  %p220 = scmp.ge.s32.totalorder %s219, 1
                  %s224 = sphi %s168, %s168
                  %s225 = sphi %s166, %s166
                $region50: #{cnn_forward.3} parent=46 // loop_header_branch
                  %222 = sbr.rel (%p220) target = $region54
                $region51: #{cnn_forward.3} parent=46 // loop_body
                  _
                $region52: #{cnn_forward.3} parent=46 // loop_footer
                  %s223 = sadd.s32 1, %s219
                $region53: #{cnn_forward.3} parent=46 // loop_footer_branch
                  %218 = sbr.rel target = $region49
                $region54: #{cnn_forward.3} parent=46 // loop_exit
                  _
                loop: start=0, step=1, limit=1
                $region55: #{cnn_forward.3} parent=46 // loop_pre_header
                  _
                $region56: #{cnn_forward.3} parent=46 // loop_header
                  %s228 = sphi 0, %s232
                  %p229 = scmp.ge.s32.totalorder %s228, 1
                  %s233 = sphi %s168, %s168
                  %s234 = sphi %s166, %s166
                $region57: #{cnn_forward.3} parent=46 // loop_header_branch
                  %231 = sbr.rel (%p229) target = $region61
                $region58: #{cnn_forward.3} parent=46 // loop_body
                  %v235 = vld [vmem:[%s233] sm:$0xf]
                  %236 = vst [vmem:[%s234] sm:$0xf] %v235
                  %v237 = vld [vmem:[%s233 + $0x8] sm:$0xf]
                  %238 = vst [vmem:[%s234 + $0x4] sm:$0xf] %v237
                  %v239 = vld [vmem:[%s233 + $0x10] sm:$0xf]
                  %240 = vst [vmem:[%s234 + $0x8] sm:$0xf] %v239
                  %v241 = vld [vmem:[%s233 + $0x18] sm:$0xf]
                  %242 = vst [vmem:[%s234 + $0xc] sm:$0xf] %v241
                  %v243 = vld [vmem:[%s233 + $0x20] sm:$0xf]
                  %244 = vst [vmem:[%s234 + $0x10] sm:$0xf] %v243
                  %v245 = vld [vmem:[%s233 + $0x28] sm:$0xf]
                  %246 = vst [vmem:[%s234 + $0x14] sm:$0xf] %v245
                  %v247 = vld [vmem:[%s233 + $0x30] sm:$0xf]
                  %248 = vst [vmem:[%s234 + $0x18] sm:$0xf] %v247
                  %v249 = vld [vmem:[%s233 + $0x38] sm:$0xf]
                  %250 = vst [vmem:[%s234 + $0x1c] sm:$0xf] %v249
                  %v251 = vld [vmem:[%s233 + $0x40] sm:$0xf]
                  %252 = vst [vmem:[%s234 + $0x20] sm:$0xf] %v251
                  %v253 = vld [vmem:[%s233 + $0x48] sm:$0xf]
                  %254 = vst [vmem:[%s234 + $0x24] sm:$0xf] %v253
                  %v255 = vld [vmem:[%s233 + $0x50] sm:$0xf]
                  %256 = vst [vmem:[%s234 + $0x28] sm:$0xf] %v255
                  %v257 = vld [vmem:[%s233 + $0x58] sm:$0xf]
                  %258 = vst [vmem:[%s234 + $0x2c] sm:$0xf] %v257
                  %v259 = vld [vmem:[%s233 + $0x60] sm:$0xf]
                  %260 = vst [vmem:[%s234 + $0x30] sm:$0xf] %v259
                  %v261 = vld [vmem:[%s233 + $0x68] sm:$0xf]
                  %262 = vst [vmem:[%s234 + $0x34] sm:$0xf] %v261
                  %v263 = vld [vmem:[%s233 + $0x70] sm:$0xf]
                  %264 = vst [vmem:[%s234 + $0x38] sm:$0xf] %v263
                  %v265 = vld [vmem:[%s233 + $0x78] sm:$0xf]
                  %266 = vst [vmem:[%s234 + $0x3c] sm:$0xf] %v265
                $region59: #{cnn_forward.3} parent=46 // loop_footer
                  %s232 = sadd.s32 1, %s228
                $region60: #{cnn_forward.3} parent=46 // loop_footer_branch
                  %227 = sbr.rel target = $region56
                $region61: #{cnn_forward.3} parent=46 // loop_exit
                  _
              $region47: #{cnn_forward.3} parent=31 // pred_fallthru
                _
            $region32: #{cnn_forward.3} parent=27 // pred_fallthru
              _
            // Predicated region
            $region33: #{cnn_forward.3} parent=27 // pred_check
              _
            $region34: #{cnn_forward.3} parent=27 // pred_check_branch
              %174 = sbr.rel (0) target = $region36
            $region35: #{cnn_forward.3} parent=27 // pred_region
              loop: start=0, step=1, limit=1
              $region37: #{cnn_forward.3} parent=35 // loop_pre_header
                _
              $region38: #{cnn_forward.3} parent=35 // loop_header
                %s177 = sphi 0, %s181
                %p178 = scmp.ge.s32.totalorder %s177, 1
                %s182 = sphi %s168, %s168
                %s183 = sphi %s166, %s166
              $region39: #{cnn_forward.3} parent=35 // loop_header_branch
                %180 = sbr.rel (%p178) target = $region43
              $region40: #{cnn_forward.3} parent=35 // loop_body
                %v184 = vld [vmem:[%s182] sm:$0xf]
                %185 = vst [vmem:[%s183] sm:$0xf] %v184
                %v186 = vld [vmem:[%s182 + $0x8] sm:$0xf]
                %187 = vst [vmem:[%s183 + $0x4] sm:$0xf] %v186
                %v188 = vld [vmem:[%s182 + $0x10] sm:$0xf]
                %189 = vst [vmem:[%s183 + $0x8] sm:$0xf] %v188
                %v190 = vld [vmem:[%s182 + $0x18] sm:$0xf]
                %191 = vst [vmem:[%s183 + $0xc] sm:$0xf] %v190
                %v192 = vld [vmem:[%s182 + $0x20] sm:$0xf]
                %193 = vst [vmem:[%s183 + $0x10] sm:$0xf] %v192
                %v194 = vld [vmem:[%s182 + $0x28] sm:$0xf]
                %195 = vst [vmem:[%s183 + $0x14] sm:$0xf] %v194
                %v196 = vld [vmem:[%s182 + $0x30] sm:$0xf]
                %197 = vst [vmem:[%s183 + $0x18] sm:$0xf] %v196
                %v198 = vld [vmem:[%s182 + $0x38] sm:$0xf]
                %199 = vst [vmem:[%s183 + $0x1c] sm:$0xf] %v198
                %v200 = vld [vmem:[%s182 + $0x40] sm:$0xf]
                %201 = vst [vmem:[%s183 + $0x20] sm:$0xf] %v200
                %v202 = vld [vmem:[%s182 + $0x48] sm:$0xf]
                %203 = vst [vmem:[%s183 + $0x24] sm:$0xf] %v202
                %v204 = vld [vmem:[%s182 + $0x50] sm:$0xf]
                %205 = vst [vmem:[%s183 + $0x28] sm:$0xf] %v204
                %v206 = vld [vmem:[%s182 + $0x58] sm:$0xf]
                %207 = vst [vmem:[%s183 + $0x2c] sm:$0xf] %v206
                %v208 = vld [vmem:[%s182 + $0x60] sm:$0xf]
                %209 = vst [vmem:[%s183 + $0x30] sm:$0xf] %v208
                %v210 = vld [vmem:[%s182 + $0x68] sm:$0xf]
                %211 = vst [vmem:[%s183 + $0x34] sm:$0xf] %v210
                %v212 = vld [vmem:[%s182 + $0x70] sm:$0xf]
                %213 = vst [vmem:[%s183 + $0x38] sm:$0xf] %v212
                %v214 = vld [vmem:[%s182 + $0x78] sm:$0xf]
                %215 = vst [vmem:[%s183 + $0x3c] sm:$0xf] %v214
              $region41: #{cnn_forward.3} parent=35 // loop_footer
                %s181 = sadd.s32 1, %s177
              $region42: #{cnn_forward.3} parent=35 // loop_footer_branch
                %176 = sbr.rel target = $region38
              $region43: #{cnn_forward.3} parent=35 // loop_exit
                _
            $region36: #{cnn_forward.3} parent=27 // pred_fallthru
              _
          $region28: #{cnn_forward.3} parent=23 // pred_fallthru
            _
          %267 = vnop
        $region24: #{cnn_forward.3} parent=19 // pred_fallthru
          _
        // Predicated region
        $region62: #{cnn_forward.3} parent=19 // pred_check
          %p268 = pneg %p80
        $region63: #{cnn_forward.3} parent=19 // pred_check_branch
          %270 = sbr.rel (%p268) target = $region65
        $region64: #{cnn_forward.3} parent=19 // pred_region
          %p271 = scmp.lt.s32.totalorder %s13, 1
          %s272 = scalar_select %p271, %s13, 1
          %s273 = scalar_lea.vmem %s2, %s272
        $region65: #{cnn_forward.3} parent=19 // pred_fallthru
          _
        // Predicated region
        $region66: #{cnn_forward.3} parent=19 // pred_check
          %p274 = pneg %p106
        $region67: #{cnn_forward.3} parent=19 // pred_check_branch
          %276 = sbr.rel (%p274) target = $region69
        $region68: #{cnn_forward.3} parent=19 // pred_region
          %p277 = scmp.lt.s32.totalorder %s13, 1
          %s278 = scalar_select %p277, %s13, 1
          %s279 = scalar_lea.vmem %s3, %s278
        $region69: #{cnn_forward.3} parent=19 // pred_fallthru
          _
      $region20: #{cnn_forward.3} parent=5 // pred_fallthru
        _
      %p280 = scmp.le.s32.totalorder 1, %s13
      %p281 = scmp.lt.s32.totalorder %s13, 3
      %p282 = pnand %p280, %p281
      %p283 = pneg %p282
      // Predicated region
      $region70: #{cnn_forward.3} parent=5 // pred_check
        _
      $region71: #{cnn_forward.3} parent=5 // pred_check_branch
        %285 = sbr.rel (%p282) target = $region73
      $region72: #{cnn_forward.3} parent=5 // pred_region
        %s286 = ssub.s32 %s13, 1
        %s287 = sand.u32 %s47, 1
        %s288 = sand.u32 %s47, 1
        %s289 = smul.addr %s288, 64
        %s290 = scalar_lea.vmem [#allocation2], %s289
        // Predicated region
        $region74: #{cnn_forward.3} parent=72 // pred_check
          %p291 = pneg %p60
        $region75: #{cnn_forward.3} parent=72 // pred_check_branch
          %293 = sbr.rel (%p291) target = $region77
        $region76: #{cnn_forward.3} parent=72 // pred_region
          _
        $region77: #{cnn_forward.3} parent=72 // pred_fallthru
          _
        %p294 = pneg %p34
        %p295 = pneg %p31
        %s296 = sand.u32 %s47, 1
        %s297 = sand.u32 %s47, 1
        %s298 = smul.addr %s297, 64
        %s299 = scalar_lea.vmem [#allocation2], %s298
        %p300 = pneg %p60
        %p301 = pneg %p57
        %p302 = scmp.lt.s32.totalorder %s18, 1
        %s303 = scalar_select %p302, %s18, 1
        %s304 = scalar_lea.vmem %s2, %s303
        %p305 = pneg %p86
        %p306 = pneg %p83
        %p307 = scmp.lt.s32.totalorder %s18, 1
        %s308 = scalar_select %p307, %s18, 1
        %s309 = scalar_lea.vmem %s3, %s308
        %p310 = pneg %p112
        %p311 = pneg %p109
        %p312 = pneg %p138
        %p313 = pneg %p135
        %s314 = sand.u32 %s125, 1
        %s315 = scalar_lea.sflag [#allocation4], %s314
        %s316 = sand.u32 %s125, 1
        %s317 = smul.addr %s316, 4
        %s318 = scalar_lea.vmem [#allocation3], %s317
        %p319 = scmp.lt.s32.totalorder %s18, 1
        %s320 = scalar_select %p319, %s18, 1
        %s321 = scalar_lea.vmem %s2, %s320
        %p322 = scmp.lt.s32.totalorder %s18, 1
        %s323 = scalar_select %p322, %s18, 1
        %s324 = scalar_lea.vmem %s3, %s323
        %v326 = vld [vmem:[%s0] sm:$0x3]
        %v327 = vld [vmem:[%s290] sm:$0xf]
        %v328 = vld [vmem:[%s290 + $0x4] sm:$0xf]
        %v329 = vld [vmem:[%s290 + $0x8] sm:$0xf]
        %v330 = vld [vmem:[%s290 + $0xc] sm:$0xf]
        %v331 = vld [vmem:[%s290 + $0x10] sm:$0xf]
        %v332 = vld [vmem:[%s290 + $0x14] sm:$0xf]
        %v333 = vld [vmem:[%s290 + $0x18] sm:$0xf]
        %v334 = vld [vmem:[%s290 + $0x1c] sm:$0xf]
        %v335 = vld [vmem:[%s290 + $0x20] sm:$0xf]
        %v336 = vld [vmem:[%s290 + $0x24] sm:$0xf]
        %v337 = vld [vmem:[%s290 + $0x28] sm:$0xf]
        %v338 = vld [vmem:[%s290 + $0x2c] sm:$0xf]
        %v339 = vld [vmem:[%s290 + $0x30] sm:$0xf]
        %v340 = vld [vmem:[%s290 + $0x34] sm:$0xf]
        %v341 = vld [vmem:[%s290 + $0x38] sm:$0xf]
        %v342 = vld [vmem:[%s290 + $0x3c] sm:$0xf]
        %v359 = vunpack.c.l.b16 %v327
        %v360 = vunpack.c.l.b16 %v328
        %v361 = vunpack.c.l.b16 %v329
        %v362 = vunpack.c.l.b16 %v330
        %v363 = vunpack.c.l.b16 %v331
        %v364 = vunpack.c.l.b16 %v332
        %v365 = vunpack.c.l.b16 %v333
        %v366 = vunpack.c.l.b16 %v334
        %v367 = vunpack.c.l.b16 %v335
        %v368 = vunpack.c.l.b16 %v336
        %v369 = vunpack.c.l.b16 %v337
        %v370 = vunpack.c.l.b16 %v338
        %v371 = vunpack.c.l.b16 %v339
        %v372 = vunpack.c.l.b16 %v340
        %v373 = vunpack.c.l.b16 %v341
        %v374 = vunpack.c.l.b16 %v342
        %v375 = vpack.c.b16 %v360, %v359
        %v376 = vpack.c.b16 %v362, %v361
        %v377 = vpack.c.b16 %v364, %v363
        %v378 = vpack.c.b16 %v366, %v365
        %v379 = vpack.c.b16 %v368, %v367
        %v380 = vpack.c.b16 %v370, %v369
        %v381 = vpack.c.b16 %v372, %v371
        %v382 = vpack.c.b16 %v374, %v373
        %391 = vmatprep.subr.bf16.mxu0 0
        %392 = vmatpush1.bf16.msra.mxu0 %v375
        %393 = vmatprep.subr.bf16.mxu0 0
        %394 = vmatpush1.bf16.msra.mxu0 %v376
        %395 = vmatprep.subr.bf16.mxu0 0
        %396 = vmatpush1.bf16.msra.mxu0 %v377
        %397 = vmatprep.subr.bf16.mxu0 0
        %398 = vmatpush1.bf16.msra.mxu0 %v378
        %399 = vmatprep.subr.bf16.mxu0 0
        %400 = vmatpush1.bf16.msra.mxu0 %v379
        %401 = vmatprep.subr.bf16.mxu0 0
        %402 = vmatpush1.bf16.msra.mxu0 %v380
        %403 = vmatprep.subr.bf16.mxu0 0
        %404 = vmatpush1.bf16.msra.mxu0 %v381
        %405 = vmatprep.subr.bf16.mxu0 0
        %406 = vmatpush1.bf16.msra.mxu0 %v382
        %407 = vmatprep.subr.bf16.mxu0 0
        %408 = vmatpush1.bf16.msra.mxu0 0
        %409 = vmatprep.subr.bf16.mxu0 0
        %410 = vmatpush1.bf16.msra.mxu0 0
        %411 = vmatprep.subr.bf16.mxu0 0
        %412 = vmatpush1.bf16.msra.mxu0 0
        %413 = vmatprep.subr.bf16.mxu0 0
        %414 = vmatpush1.bf16.msra.mxu0 0
        %415 = vmatprep.subr.bf16.mxu0 0
        %416 = vmatpush1.bf16.msra.mxu0 0
        %417 = vmatprep.subr.bf16.mxu0 0
        %418 = vmatpush1.bf16.msra.mxu0 0
        %419 = vmatprep.subr.bf16.mxu0 0
        %420 = vmatpush1.bf16.msra.mxu0 0
        %421 = vmatprep.subr.bf16.mxu0 0
        %422 = vmatpush1.bf16.msra.mxu0 0
        %423 = vmatprep.mubr.bf16.mxu0 0
        %424 = vmatmul.mubr.bf16.gmra.mrb[0].mxu0 %v326
        %v425 = vpop.f32.mrb[0].mxu0
        %v426 = vadd.f32 0.0, %v425
        %v427 = vpop.f32.mrb[0].mxu0
        %v428 = vpop.f32.mrb[0].mxu0
        %v429 = vpop.f32.mrb[0].mxu0
        %430 = vdwg.mxu0
        %vm431 = vcmask 1043456
        %v432 = vsel %vm431, %v426, 0.0
        %v433 = vrot.slane %v432, 4
        %v434 = vadd.f32 %v432, %v433
        %v435 = vrot.slane %v434, 2
        %v436 = vadd.f32 %v434, %v435
        %v437 = vrot.slane %v436, 1
        %v438 = vadd.f32 %v436, %v437
        %v439 = vmul.f32 %v438, 0.25
        %v440 = vsub.f32 %v426, %v439
        %v441 = vmul.f32 %v440, %v440
        %v442 = vsel %vm431, %v441, 0.0
        %v443 = vrot.slane %v442, 4
        %v444 = vadd.f32 %v442, %v443
        %v445 = vrot.slane %v444, 2
        %v446 = vadd.f32 %v444, %v445
        %v447 = vrot.slane %v446, 1
        %v448 = vadd.f32 %v446, %v447
        %v449 = vmul.f32 %v448, 0.25
        %v450 = vld [vmem:[%s321] sm:$0x1]
        %v451 = vadd.f32 %v449, 1e-05
        %v452 = vrsqrt.pop %v451
        %v453 = vmul.f32 %v440, %v452
        %v455 = vlaneseq
        %v456 = vshrl.u32 %v455, 7
        %v457 = vsub.s32 0, %v456
        %v458 = vrot.slane %v450, %v457
        %v460 = vmul.f32 %v458, %v453
        %v461 = vld [vmem:[%s324] sm:$0x1]
        %v463 = vlaneseq
        %v464 = vshrl.u32 %v463, 7
        %v465 = vsub.s32 0, %v464
        %v466 = vrot.slane %v461, %v465
        %v468 = vadd.f32 %v460, %v466
        %469 = vst [vmem:[%s318] sm:$0xf] %v468
        %s470 = sand.u32 %s125, 1
        %s471 = scalar_lea.sflag [#allocation4], %s470
        %s472 = sand.u32 %s125, 1
        %s473 = smul.addr %s472, 4
        %s474 = scalar_lea.vmem [#allocation3], %s473
        // Predicated region
        $region78: #{cnn_forward.3} parent=72 // pred_check
          %p475 = pneg %p135
        $region79: #{cnn_forward.3} parent=72 // pred_check_branch
          %477 = sbr.rel (%p475) target = $region81
        $region80: #{cnn_forward.3} parent=72 // pred_region
          %s479 = ssub.s32 64, 64
          %480 = vsyncadd %s471, %s479
          %s481 = smul.addr %s18, 64
          %s482 = scalar_lea.hbm %s4, %s481
          %s484 = sshll.u32 %s474, 4
          %s485 = int_to_ptr.vmem [resolvable:$true] %s484
          %487 = dma.vmem_to_hbm [thread:$0]  %s485, 64, %s482, %s471
        $region81: #{cnn_forward.3} parent=72 // pred_fallthru
          _
      $region73: #{cnn_forward.3} parent=5 // pred_fallthru
        _
      %p488 = scmp.le.s32.totalorder 2, %s13
      // Predicated region
      $region82: #{cnn_forward.3} parent=5 // pred_check
        %p489 = pneg %p488
      $region83: #{cnn_forward.3} parent=5 // pred_check_branch
        %491 = sbr.rel (%p489) target = $region85
      $region84: #{cnn_forward.3} parent=5 // pred_region
        %s492 = ssub.s32 %s13, 2
        // Predicated region
        $region86: #{cnn_forward.3} parent=84 // pred_check
          %p493 = pneg %p141
        $region87: #{cnn_forward.3} parent=84 // pred_check_branch
          %495 = sbr.rel (%p493) target = $region89
        $region88: #{cnn_forward.3} parent=84 // pred_region
          %s496 = sand.u32 %s126, 1
          %s497 = scalar_lea.sflag [#allocation4], %s496
          %s498 = sand.u32 %s126, 1
          %s499 = smul.addr %s498, 4
          %s500 = scalar_lea.vmem [#allocation3], %s499
          %501 = dma.done %s497, 64
        $region89: #{cnn_forward.3} parent=84 // pred_fallthru
          _
      $region85: #{cnn_forward.3} parent=5 // pred_fallthru
        _
    $region6: #{cnn_forward.3} parent=1 // loop_footer
      %s17 = sadd.s32 1, %s13
    $region7: #{cnn_forward.3} parent=1 // loop_footer_branch
      %12 = sbr.rel target = $region3
    $region8: #{cnn_forward.3} parent=1 // loop_exit
      _
    %502 = vsyncpa [#allocation4], 1
    %s503 = scalar_lea.sflag [#allocation4], 1
    %504 = vsyncpa %s503, 1

// kernel: cnn_forward.2
$region0: #{cnn_forward.2}
  #allocation0 [shape = 'u32[]', space=smem, size = 0x4, offset = 0x4, fixed_abs, tag = 'smem constant byte address 0x4 - core index']
  #allocation1 [shape = 'u32[144,128]{1,0:T(1,128)}', space=vmem, size = 0x12000, scoped, tag = 'internal scratch']
  %s0 = inlined_call_operand.vmem [shape: bf16[4,18,18,3], index: 0, kind: input, shape index: {}]
  %s1 = inlined_call_operand.vmem [shape: bf16[3,3,3,128], index: 1, kind: input, shape index: {}]
  %s2 = inlined_call_operand.vmem [shape: f32[1,128], index: 2, kind: input, shape index: {}]
  %s3 = inlined_call_operand.vmem [shape: f32[4,1,128], index: 3, kind: output, shape index: {}]
  %s4 = sld [smem:[#allocation0]]
  $region53: #{cnn_forward.2} parent=0
    _
  %s6 = ssub.s32 1, %s4
  %s7 = scalar_select 0, %s6, %s4
  loop: start=0, step=1, limit=10
  $region2: #{cnn_forward.2} parent=0 // loop_pre_header
    _
  $region3: #{cnn_forward.2} parent=0 // loop_header
    %s9 = sphi 0, %s13
    %p10 = scmp.ge.s32.totalorder %s9, 10
    %s16 = sphi 0, %s28
    %s17 = sphi 0, %s24
    %s18 = sphi 0, %s16
    %s19 = sphi 0, %s17
    %s20 = sphi 0, %s18
    %s21 = sphi 0, %s19
    %s31 = sphi 0, %s33
    %s34 = sphi 0, %s31
    %s35 = sphi 0, %s34
    %s51 = sphi 0, %s35
    %s55 = sphi 0, %s55
    %s57 = sphi 0, %s55
    %s58 = sphi 0, %s57
    %s72 = sphi 0, %s58
    %s76 = sphi 0, %s76
    %s78 = sphi 0, %s76
    %s79 = sphi 0, %s78
    %s93 = sphi 0, %s79
    %s99 = sphi 0, %s101
    %s102 = sphi 0, %s99
    %s103 = sphi 0, %s102
    %s119 = sphi 0, %s103
  $region4: #{cnn_forward.2} parent=0 // loop_header_branch
    %12 = sbr.rel (%p10) target = $region8
  $region5: #{cnn_forward.2} parent=0 // loop_body
    %s14 = ssub.s32 %s9, 1
    %s15 = ssub.s32 %s9, 2
    %s22 = sadd.s32 1, %s17
    %p23 = scmp.ge.s32.totalorder %s22, 2
    %s24 = scalar_select %p23, 0, %s22
    %s25 = sadd.s32 1, %s16
    %s26 = scalar_select %p23, %s25, %s16
    %p27 = scmp.ge.s32.totalorder %s26, 4
    %s28 = scalar_select %p27, 0, %s26
    %s29 = ssub.s32 %s16, %s28
    %p30 = scmp.eq.s32.totalorder %s29, 0
    %s32 = sadd.s32 %s31, 1
    %s33 = scalar_select %p30, %s31, %s32
    %p36 = pneg %p30
    %p37 = scmp.eq.s32.totalorder %s9, 7
    %p38 = por %p36, %p37
    %p39 = scmp.ne.s32.totalorder %s31, %s34
    %p40 = scmp.eq.s32.totalorder %s9, 0
    %p41 = por %p39, %p40
    %p42 = scmp.ne.s32.totalorder %s31, %s34
    %p43 = scmp.eq.s32.totalorder %s14, 7
    %p44 = por %p42, %p43
    %p45 = scmp.ne.s32.totalorder %s34, %s35
    %p46 = scmp.eq.s32.totalorder %s14, 0
    %p47 = por %p45, %p46
    %p48 = scmp.ne.s32.totalorder %s34, %s35
    %p49 = scmp.eq.s32.totalorder %s15, 7
    %p50 = por %p48, %p49
    %p52 = scmp.ne.s32.totalorder %s35, %s51
    %p53 = scmp.eq.s32.totalorder %s15, 0
    %p54 = por %p52, %p53
    %s56 = sadd.s32 %s55, 1
    %p59 = scmp.eq.s32.totalorder %s9, 7
    %p60 = scmp.ne.s32.totalorder %s55, %s57
    %p61 = scmp.eq.s32.totalorder %s9, 0
    %p62 = por %p60, %p61
    %p63 = scmp.ne.s32.totalorder %s55, %s57
    %p64 = scmp.eq.s32.totalorder %s14, 7
    %p65 = por %p63, %p64
    %p66 = scmp.ne.s32.totalorder %s57, %s58
    %p67 = scmp.eq.s32.totalorder %s14, 0
    %p68 = por %p66, %p67
    %p69 = scmp.ne.s32.totalorder %s57, %s58
    %p70 = scmp.eq.s32.totalorder %s15, 7
    %p71 = por %p69, %p70
    %p73 = scmp.ne.s32.totalorder %s58, %s72
    %p74 = scmp.eq.s32.totalorder %s15, 0
    %p75 = por %p73, %p74
    %s77 = sadd.s32 %s76, 1
    %p80 = scmp.eq.s32.totalorder %s9, 7
    %p81 = scmp.ne.s32.totalorder %s76, %s78
    %p82 = scmp.eq.s32.totalorder %s9, 0
    %p83 = por %p81, %p82
    %p84 = scmp.ne.s32.totalorder %s76, %s78
    %p85 = scmp.eq.s32.totalorder %s14, 7
    %p86 = por %p84, %p85
    %p87 = scmp.ne.s32.totalorder %s78, %s79
    %p88 = scmp.eq.s32.totalorder %s14, 0
    %p89 = por %p87, %p88
    %p90 = scmp.ne.s32.totalorder %s78, %s79
    %p91 = scmp.eq.s32.totalorder %s15, 7
    %p92 = por %p90, %p91
    %p94 = scmp.ne.s32.totalorder %s79, %s93
    %p95 = scmp.eq.s32.totalorder %s15, 0
    %p96 = por %p94, %p95
    %s97 = ssub.s32 %s16, %s28
    %p98 = scmp.eq.s32.totalorder %s97, 0
    %s100 = sadd.s32 %s99, 1
    %s101 = scalar_select %p98, %s99, %s100
    %p104 = pneg %p98
    %p105 = scmp.eq.s32.totalorder %s9, 7
    %p106 = por %p104, %p105
    %p107 = scmp.ne.s32.totalorder %s99, %s102
    %p108 = scmp.eq.s32.totalorder %s9, 0
    %p109 = por %p107, %p108
    %p110 = scmp.ne.s32.totalorder %s99, %s102
    %p111 = scmp.eq.s32.totalorder %s14, 7
    %p112 = por %p110, %p111
    %p113 = scmp.ne.s32.totalorder %s102, %s103
    %p114 = scmp.eq.s32.totalorder %s14, 0
    %p115 = por %p113, %p114
    %p116 = scmp.ne.s32.totalorder %s102, %s103
    %p117 = scmp.eq.s32.totalorder %s15, 7
    %p118 = por %p116, %p117
    %p120 = scmp.ne.s32.totalorder %s103, %s119
    %p121 = scmp.eq.s32.totalorder %s15, 0
    %p122 = por %p120, %p121
    %p123 = scmp.le.s32.totalorder 1, %s9
    %p124 = scmp.lt.s32.totalorder %s9, 9
    %p125 = pnand %p123, %p124
    %p126 = pneg %p125
    // Predicated region
    $region9: #{cnn_forward.2} parent=5 // pred_check
      _
    $region10: #{cnn_forward.2} parent=5 // pred_check_branch
      %128 = sbr.rel (%p125) target = $region12
    $region11: #{cnn_forward.2} parent=5 // pred_region
      %s129 = ssub.s32 %s9, 1
      // Predicated region
      $region13: #{cnn_forward.2} parent=11 // pred_check
        %p130 = pneg %p68
      $region14: #{cnn_forward.2} parent=11 // pred_check_branch
        %132 = sbr.rel (%p130) target = $region16
      $region15: #{cnn_forward.2} parent=11 // pred_region
        _
      $region16: #{cnn_forward.2} parent=11 // pred_fallthru
        _
      // Predicated region
      $region17: #{cnn_forward.2} parent=11 // pred_check
        %p133 = pneg %p89
      $region18: #{cnn_forward.2} parent=11 // pred_check_branch
        %135 = sbr.rel (%p133) target = $region20
      $region19: #{cnn_forward.2} parent=11 // pred_region
        _
      $region20: #{cnn_forward.2} parent=11 // pred_fallthru
        _
    $region12: #{cnn_forward.2} parent=5 // pred_fallthru
      _
    %p136 = scmp.lt.s32.totalorder %s9, 8
    // Predicated region
    $region21: #{cnn_forward.2} parent=5 // pred_check
      %p137 = pneg %p136
    $region22: #{cnn_forward.2} parent=5 // pred_check_branch
      %139 = sbr.rel (%p137) target = $region24
    $region23: #{cnn_forward.2} parent=5 // pred_region
      // Predicated region
      $region25: #{cnn_forward.2} parent=23 // pred_check
        %p140 = pneg %p41
      $region26: #{cnn_forward.2} parent=23 // pred_check_branch
        %142 = sbr.rel (%p140) target = $region28
      $region27: #{cnn_forward.2} parent=23 // pred_region
        %p143 = scmp.lt.s32.totalorder %s16, 3
        %s144 = scalar_select %p143, %s16, 3
        %s145 = smul.addr %s144, 54
        %s146 = smul.addr %s145, 4
        %s147 = scalar_lea.vmem %s0, %s146
      $region28: #{cnn_forward.2} parent=23 // pred_fallthru
        _
    $region24: #{cnn_forward.2} parent=5 // pred_fallthru
      _
    %p148 = scmp.le.s32.totalorder 1, %s9
    %p149 = scmp.lt.s32.totalorder %s9, 9
    %p150 = pnand %p148, %p149
    %p151 = pneg %p150
    // Predicated region
    $region29: #{cnn_forward.2} parent=5 // pred_check
      _
    $region30: #{cnn_forward.2} parent=5 // pred_check_branch
      %153 = sbr.rel (%p150) target = $region32
    $region31: #{cnn_forward.2} parent=5 // pred_region
      %s154 = ssub.s32 %s9, 1
      %p155 = scmp.lt.s32.totalorder %s18, 3
      %s156 = scalar_select %p155, %s18, 3
      %s157 = smul.addr %s156, 54
      %s158 = smul.addr %s157, 4
      %s159 = scalar_lea.vmem %s0, %s158
      %p160 = pneg %p47
      %p161 = pneg %p44
      %p162 = pneg %p68
      %p163 = pneg %p65
      %p164 = pneg %p89
      %p165 = pneg %p86
      %p166 = pneg %p115
      %p167 = pneg %p112
      %p168 = scmp.lt.s32.totalorder %s18, 3
      %s169 = scalar_select %p168, %s18, 3
      %s170 = scalar_lea.vmem %s3, %s169
      %p171 = scmp.lt.s32.totalorder %s18, 3
      %s172 = scalar_select %p171, %s18, 3
      %s173 = smul.addr %s172, 54
      %s174 = smul.addr %s173, 4
      %s175 = scalar_lea.vmem %s0, %s174
      %p176 = scmp.lt.s32.totalorder %s18, 3
      %s177 = scalar_select %p176, %s18, 3
      %s178 = scalar_lea.vmem %s3, %s177
      %s180 = smul.u32 %s19, 8
      %v181 = vld [vmem:[%s2] sm:$0x1]
      %v182 = vld [vmem:[%s1] sm:$0x3]
      %s183 = scalar_lea.vmem %s1, 2
      %v184 = vld [vmem:[%s183] sm:$0x3]
      %s185 = scalar_lea.vmem %s1, 4
      %v186 = vld [vmem:[%s185] sm:$0x3]
      %s187 = scalar_lea.vmem %s1, 6
      %v188 = vld [vmem:[%s187] sm:$0x3]
      %s189 = scalar_lea.vmem %s1, 8
      %v190 = vld [vmem:[%s189] sm:$0x3]
      %s191 = scalar_lea.vmem %s1, 10
      %v192 = vld [vmem:[%s191] sm:$0x3]
      %s193 = scalar_lea.vmem %s1, 12
      %v194 = vld [vmem:[%s193] sm:$0x3]
      %s195 = scalar_lea.vmem %s1, 14
      %v196 = vld [vmem:[%s195] sm:$0x3]
      %s197 = scalar_lea.vmem %s1, 16
      %v198 = vld [vmem:[%s197] sm:$0x3]
      %s199 = smul.u32 %s180, 3
      %s200 = smul.addr %s199, 4
      %s201 = scalar_lea.vmem %s175, %s200
      %v202 = vld [vmem:[%s201] sm:$0xf]
      %v203 = vld [vmem:[%s201 + $0x4] sm:$0xf]
      %v204 = vld [vmem:[%s201 + $0x8] sm:$0x1]
      %v208 = vunpack.c.l.b16 %v202
      %v209 = vunpack.c.l.b16 %v203
      %v210 = vunpack.c.l.b16 %v204
      %v211 = vpack.c.b16 %v209, %v208
      %v212 = vpack.c.b16 %v210, %v210
      %vm213 = vsmask.f32 7424
      %v215 = vshrl.u32 %v211, 16
      %v217 = vshll.u32 %v211, 16
      %v219 = vrot.slane %v217, 1
      %v220 = vor.u32 %v215, %v219
      %v222 = vshll.u32 %v212, 16
      %v224 = vrot.slane %v222, 1
      %v225 = vsel %vm213, %v220, %v224
      %vm226 = vcmask 23552
      %v228 = vsel %vm226, %v225, 0
      %vm230 = vcmask 1040384
      %vm231 = vcmask 1041408
      %v232 = vsel %vm230, 4294967295, 65535
      %v233 = vsel %vm231, %v232, 0
      %v235 = vand.u32 %v184, %v233
      %237 = vmatprep.subr.bf16.mxu0 0
      %238 = vmatpush1.bf16.msra.mxu0 %v235
      %239 = vmatprep.subr.bf16.mxu0 0
      %240 = vmatpush1.bf16.msra.mxu0 0
      %241 = vmatprep.subr.bf16.mxu0 0
      %242 = vmatpush1.bf16.msra.mxu0 0
      %243 = vmatprep.subr.bf16.mxu0 0
      %244 = vmatpush1.bf16.msra.mxu0 0
      %245 = vmatprep.subr.bf16.mxu0 0
      %246 = vmatpush1.bf16.msra.mxu0 0
      %247 = vmatprep.subr.bf16.mxu0 0
      %248 = vmatpush1.bf16.msra.mxu0 0
      %249 = vmatprep.subr.bf16.mxu0 0
      %250 = vmatpush1.bf16.msra.mxu0 0
      %251 = vmatprep.subr.bf16.mxu0 0
      %252 = vmatpush1.bf16.msra.mxu0 0
      %253 = vmatprep.subr.bf16.mxu0 0
      %254 = vmatpush1.bf16.msra.mxu0 0
      %255 = vmatprep.subr.bf16.mxu0 0
      %256 = vmatpush1.bf16.msra.mxu0 0
      %257 = vmatprep.subr.bf16.mxu0 0
      %258 = vmatpush1.bf16.msra.mxu0 0
      %259 = vmatprep.subr.bf16.mxu0 0
      %260 = vmatpush1.bf16.msra.mxu0 0
      %261 = vmatprep.subr.bf16.mxu0 0
      %262 = vmatpush1.bf16.msra.mxu0 0
      %263 = vmatprep.subr.bf16.mxu0 0
      %264 = vmatpush1.bf16.msra.mxu0 0
      %265 = vmatprep.subr.bf16.mxu0 0
      %266 = vmatpush1.bf16.msra.mxu0 0
      %267 = vmatprep.subr.bf16.mxu0 0
      %268 = vmatpush1.bf16.msra.mxu0 0
      %269 = vmatprep.mubr.bf16.mxu0 0
      %270 = vmatmul.mubr.bf16.gmra.mrb[0].mxu0 %v228
      %v271 = vpop.f32.mrb[0].mxu0
      %v272 = vadd.f32 0.0, %v271
      %v273 = vpop.f32.mrb[0].mxu0
      %v274 = vpop.f32.mrb[0].mxu0
      %v275 = vadd.f32 0.0, %v274
      %v276 = vpop.f32.mrb[0].mxu0
      %277 = vdwg.mxu0
      %v278 = vsel %vm226, %v211, 0
      %v281 = vand.u32 %v182, %v233
      %283 = vmatprep.subr.bf16.mxu0 0
      %284 = vmatpush1.bf16.msra.mxu0 %v281
      %285 = vmatprep.subr.bf16.mxu0 0
      %286 = vmatpush1.bf16.msra.mxu0 0
      %287 = vmatprep.subr.bf16.mxu0 0
      %288 = vmatpush1.bf16.msra.mxu0 0
      %289 = vmatprep.subr.bf16.mxu0 0
      %290 = vmatpush1.bf16.msra.mxu0 0
      %291 = vmatprep.subr.bf16.mxu0 0
      %292 = vmatpush1.bf16.msra.mxu0 0
      %293 = vmatprep.subr.bf16.mxu0 0
      %294 = vmatpush1.bf16.msra.mxu0 0
      %295 = vmatprep.subr.bf16.mxu0 0
      %296 = vmatpush1.bf16.msra.mxu0 0
      %297 = vmatprep.subr.bf16.mxu0 0
      %298 = vmatpush1.bf16.msra.mxu0 0
      %299 = vmatprep.subr.bf16.mxu0 0
      %300 = vmatpush1.bf16.msra.mxu0 0
      %301 = vmatprep.subr.bf16.mxu0 0
      %302 = vmatpush1.bf16.msra.mxu0 0
      %303 = vmatprep.subr.bf16.mxu0 0
      %304 = vmatpush1.bf16.msra.mxu0 0
      %305 = vmatprep.subr.bf16.mxu0 0
      %306 = vmatpush1.bf16.msra.mxu0 0
      %307 = vmatprep.subr.bf16.mxu0 0
      %308 = vmatpush1.bf16.msra.mxu0 0
      %309 = vmatprep.subr.bf16.mxu0 0
      %310 = vmatpush1.bf16.msra.mxu0 0
      %311 = vmatprep.subr.bf16.mxu0 0
      %312 = vmatpush1.bf16.msra.mxu0 0
      %313 = vmatprep.subr.bf16.mxu0 0
      %314 = vmatpush1.bf16.msra.mxu0 0
      %315 = vmatprep.mubr.bf16.mxu0 0
      %316 = vmatmul.mubr.bf16.gmra.mrb[0].mxu0 %v278
      %v317 = vpop.f32.mrb[0].mxu0
      %v318 = vadd.f32 %v272, %v317
      %v319 = vpop.f32.mrb[0].mxu0
      %v320 = vpop.f32.mrb[0].mxu0
      %v321 = vadd.f32 %v275, %v320
      %v322 = vpop.f32.mrb[0].mxu0
      %323 = vdwg.mxu0
      %v324 = vld [vmem:[%s201] sm:$0xe]
      %v326 = vunpack.c.l.b16 %v324
      %v327 = vpack.c.b16 %v209, %v326
      %vm328 = vcmask 1046528
      %v329 = vrot.slane %v327, 1
      %v330 = vrot.slane %v212, 1
      %v331 = vsel %vm328, %v329, %v330
      %v333 = vsel %vm226, %v331, 0
      %v336 = vand.u32 %v186, %v233
      %338 = vmatprep.subr.bf16.mxu0 0
      %339 = vmatpush1.bf16.msra.mxu0 %v336
      %340 = vmatprep.subr.bf16.mxu0 0
      %341 = vmatpush1.bf16.msra.mxu0 0
      %342 = vmatprep.subr.bf16.mxu0 0
      %343 = vmatpush1.bf16.msra.mxu0 0
      %344 = vmatprep.subr.bf16.mxu0 0
      %345 = vmatpush1.bf16.msra.mxu0 0
      %346 = vmatprep.subr.bf16.mxu0 0
      %347 = vmatpush1.bf16.msra.mxu0 0
      %348 = vmatprep.subr.bf16.mxu0 0
      %349 = vmatpush1.bf16.msra.mxu0 0
      %350 = vmatprep.subr.bf16.mxu0 0
      %351 = vmatpush1.bf16.msra.mxu0 0
      %352 = vmatprep.subr.bf16.mxu0 0
      %353 = vmatpush1.bf16.msra.mxu0 0
      %354 = vmatprep.subr.bf16.mxu0 0
      %355 = vmatpush1.bf16.msra.mxu0 0
      %356 = vmatprep.subr.bf16.mxu0 0
      %357 = vmatpush1.bf16.msra.mxu0 0
      %358 = vmatprep.subr.bf16.mxu0 0
      %359 = vmatpush1.bf16.msra.mxu0 0
      %360 = vmatprep.subr.bf16.mxu0 0
      %361 = vmatpush1.bf16.msra.mxu0 0
      %362 = vmatprep.subr.bf16.mxu0 0
      %363 = vmatpush1.bf16.msra.mxu0 0
      %364 = vmatprep.subr.bf16.mxu0 0
      %365 = vmatpush1.bf16.msra.mxu0 0
      %366 = vmatprep.subr.bf16.mxu0 0
      %367 = vmatpush1.bf16.msra.mxu0 0
      %368 = vmatprep.subr.bf16.mxu0 0
      %369 = vmatpush1.bf16.msra.mxu0 0
      %370 = vmatprep.mubr.bf16.mxu0 0
      %371 = vmatmul.mubr.bf16.gmra.mrb[0].mxu0 %v333
      %v372 = vpop.f32.mrb[0].mxu0
      %v373 = vadd.f32 0.0, %v372
      %v374 = vpop.f32.mrb[0].mxu0
      %v375 = vpop.f32.mrb[0].mxu0
      %v376 = vadd.f32 0.0, %v375
      %v377 = vpop.f32.mrb[0].mxu0
      %378 = vdwg.mxu0
      %v379 = vadd.f32 %v318, %v373
      %v380 = vadd.f32 %v321, %v376
      %s381 = sadd.s32 %s180, 1
      %s382 = smul.u32 %s381, 3
      %s383 = smul.addr %s382, 4
      %s384 = scalar_lea.vmem %s175, %s383
      %v385 = vld [vmem:[%s384] sm:$0xf]
      %v386 = vld [vmem:[%s384 + $0x4] sm:$0xf]
      %v389 = vunpack.c.l.b16 %v385
      %v390 = vunpack.c.l.b16 %v386
      %v391 = vpack.c.b16 %v390, %v389
      %v393 = vsel %vm226, %v391, 0
      %v396 = vand.u32 %v188, %v233
      %398 = vmatprep.subr.bf16.mxu0 0
      %399 = vmatpush1.bf16.msra.mxu0 %v396
      %400 = vmatprep.subr.bf16.mxu0 0
      %401 = vmatpush1.bf16.msra.mxu0 0
      %402 = vmatprep.subr.bf16.mxu0 0
      %403 = vmatpush1.bf16.msra.mxu0 0
      %404 = vmatprep.subr.bf16.mxu0 0
      %405 = vmatpush1.bf16.msra.mxu0 0
      %406 = vmatprep.subr.bf16.mxu0 0
      %407 = vmatpush1.bf16.msra.mxu0 0
      %408 = vmatprep.subr.bf16.mxu0 0
      %409 = vmatpush1.bf16.msra.mxu0 0
      %410 = vmatprep.subr.bf16.mxu0 0
      %411 = vmatpush1.bf16.msra.mxu0 0
      %412 = vmatprep.subr.bf16.mxu0 0
      %413 = vmatpush1.bf16.msra.mxu0 0
      %414 = vmatprep.subr.bf16.mxu0 0
      %415 = vmatpush1.bf16.msra.mxu0 0
      %416 = vmatprep.subr.bf16.mxu0 0
      %417 = vmatpush1.bf16.msra.mxu0 0
      %418 = vmatprep.subr.bf16.mxu0 0
      %419 = vmatpush1.bf16.msra.mxu0 0
      %420 = vmatprep.subr.bf16.mxu0 0
      %421 = vmatpush1.bf16.msra.mxu0 0
      %422 = vmatprep.subr.bf16.mxu0 0
      %423 = vmatpush1.bf16.msra.mxu0 0
      %424 = vmatprep.subr.bf16.mxu0 0
      %425 = vmatpush1.bf16.msra.mxu0 0
      %426 = vmatprep.subr.bf16.mxu0 0
      %427 = vmatpush1.bf16.msra.mxu0 0
      %428 = vmatprep.subr.bf16.mxu0 0
      %429 = vmatpush1.bf16.msra.mxu0 0
      %430 = vmatprep.mubr.bf16.mxu0 0
      %431 = vmatmul.mubr.bf16.gmra.mrb[0].mxu0 %v393
      %v432 = vpop.f32.mrb[0].mxu0
      %v433 = vadd.f32 0.0, %v432
      %v434 = vpop.f32.mrb[0].mxu0
      %v435 = vpop.f32.mrb[0].mxu0
      %v436 = vadd.f32 0.0, %v435
      %v437 = vpop.f32.mrb[0].mxu0
      %438 = vdwg.mxu0
      %v439 = vadd.f32 %v379, %v433
      %v440 = vadd.f32 %v380, %v436
      %v441 = vld [vmem:[%s384] sm:$0xf]
      %v442 = vld [vmem:[%s384 + $0x4] sm:$0xf]
      %v443 = vld [vmem:[%s384 + $0x8] sm:$0x1]
      %v447 = vunpack.c.l.b16 %v441
      %v448 = vunpack.c.l.b16 %v442
      %v449 = vunpack.c.l.b16 %v443
      %v450 = vpack.c.b16 %v448, %v447
      %v451 = vpack.c.b16 %v449, %v449
      %v453 = vshrl.u32 %v450, 16
      %v455 = vshll.u32 %v450, 16
      %v457 = vrot.slane %v455, 1
      %v458 = vor.u32 %v453, %v457
      %v460 = vshll.u32 %v451, 16
      %v462 = vrot.slane %v460, 1
      %v463 = vsel %vm213, %v458, %v462
      %v465 = vsel %vm226, %v463, 0
      %v468 = vand.u32 %v190, %v233
      %470 = vmatprep.subr.bf16.mxu0 0
      %471 = vmatpush1.bf16.msra.mxu0 %v468
      %472 = vmatprep.subr.bf16.mxu0 0
      %473 = vmatpush1.bf16.msra.mxu0 0
      %474 = vmatprep.subr.bf16.mxu0 0
      %475 = vmatpush1.bf16.msra.mxu0 0
      %476 = vmatprep.subr.bf16.mxu0 0
      %477 = vmatpush1.bf16.msra.mxu0 0
      %478 = vmatprep.subr.bf16.mxu0 0
      %479 = vmatpush1.bf16.msra.mxu0 0
      %480 = vmatprep.subr.bf16.mxu0 0
      %481 = vmatpush1.bf16.msra.mxu0 0
      %482 = vmatprep.subr.bf16.mxu0 0
      %483 = vmatpush1.bf16.msra.mxu0 0
      %484 = vmatprep.subr.bf16.mxu0 0
      %485 = vmatpush1.bf16.msra.mxu0 0
      %486 = vmatprep.subr.bf16.mxu0 0
      %487 = vmatpush1.bf16.msra.mxu0 0
      %488 = vmatprep.subr.bf16.mxu0 0
      %489 = vmatpush1.bf16.msra.mxu0 0
      %490 = vmatprep.subr.bf16.mxu0 0
      %491 = vmatpush1.bf16.msra.mxu0 0
      %492 = vmatprep.subr.bf16.mxu0 0
      %493 = vmatpush1.bf16.msra.mxu0 0
      %494 = vmatprep.subr.bf16.mxu0 0
      %495 = vmatpush1.bf16.msra.mxu0 0
      %496 = vmatprep.subr.bf16.mxu0 0
      %497 = vmatpush1.bf16.msra.mxu0 0
      %498 = vmatprep.subr.bf16.mxu0 0
      %499 = vmatpush1.bf16.msra.mxu0 0
      %500 = vmatprep.subr.bf16.mxu0 0
      %501 = vmatpush1.bf16.msra.mxu0 0
      %502 = vmatprep.mubr.bf16.mxu0 0
      %503 = vmatmul.mubr.bf16.gmra.mrb[0].mxu0 %v465
      %v504 = vpop.f32.mrb[0].mxu0
      %v505 = vadd.f32 0.0, %v504
      %v506 = vpop.f32.mrb[0].mxu0
      %v507 = vpop.f32.mrb[0].mxu0
      %v508 = vadd.f32 0.0, %v507
      %v509 = vpop.f32.mrb[0].mxu0
      %510 = vdwg.mxu0
      %v511 = vadd.f32 %v439, %v505
      %v512 = vadd.f32 %v440, %v508
      %v513 = vld [vmem:[%s384] sm:$0xe]
      %v515 = vunpack.c.l.b16 %v513
      %v516 = vpack.c.b16 %v448, %v515
      %v517 = vrot.slane %v516, 1
      %v518 = vrot.slane %v451, 1
      %v519 = vsel %vm328, %v517, %v518
      %v521 = vsel %vm226, %v519, 0
      %v524 = vand.u32 %v192, %v233
      %526 = vmatprep.subr.bf16.mxu0 0
      %527 = vmatpush1.bf16.msra.mxu0 %v524
      %528 = vmatprep.subr.bf16.mxu0 0
      %529 = vmatpush1.bf16.msra.mxu0 0
      %530 = vmatprep.subr.bf16.mxu0 0
      %531 = vmatpush1.bf16.msra.mxu0 0
      %532 = vmatprep.subr.bf16.mxu0 0
      %533 = vmatpush1.bf16.msra.mxu0 0
      %534 = vmatprep.subr.bf16.mxu0 0
      %535 = vmatpush1.bf16.msra.mxu0 0
      %536 = vmatprep.subr.bf16.mxu0 0
      %537 = vmatpush1.bf16.msra.mxu0 0
      %538 = vmatprep.subr.bf16.mxu0 0
      %539 = vmatpush1.bf16.msra.mxu0 0
      %540 = vmatprep.subr.bf16.mxu0 0
      %541 = vmatpush1.bf16.msra.mxu0 0
      %542 = vmatprep.subr.bf16.mxu0 0
      %543 = vmatpush1.bf16.msra.mxu0 0
      %544 = vmatprep.subr.bf16.mxu0 0
      %545 = vmatpush1.bf16.msra.mxu0 0
      %546 = vmatprep.subr.bf16.mxu0 0
      %547 = vmatpush1.bf16.msra.mxu0 0
      %548 = vmatprep.subr.bf16.mxu0 0
      %549 = vmatpush1.bf16.msra.mxu0 0
      %550 = vmatprep.subr.bf16.mxu0 0
      %551 = vmatpush1.bf16.msra.mxu0 0
      %552 = vmatprep.subr.bf16.mxu0 0
      %553 = vmatpush1.bf16.msra.mxu0 0
      %554 = vmatprep.subr.bf16.mxu0 0
      %555 = vmatpush1.bf16.msra.mxu0 0
      %556 = vmatprep.subr.bf16.mxu0 0
      %557 = vmatpush1.bf16.msra.mxu0 0
      %558 = vmatprep.mubr.bf16.mxu0 0
      %559 = vmatmul.mubr.bf16.gmra.mrb[0].mxu0 %v521
      %v560 = vpop.f32.mrb[0].mxu0
      %v561 = vadd.f32 0.0, %v560
      %v562 = vpop.f32.mrb[0].mxu0
      %v563 = vpop.f32.mrb[0].mxu0
      %v564 = vadd.f32 0.0, %v563
      %v565 = vpop.f32.mrb[0].mxu0
      %566 = vdwg.mxu0
      %v567 = vadd.f32 %v511, %v561
      %v568 = vadd.f32 %v512, %v564
      %s569 = sadd.s32 %s180, 2
      %s570 = smul.u32 %s569, 3
      %s571 = smul.addr %s570, 4
      %s572 = scalar_lea.vmem %s175, %s571
      %v573 = vld [vmem:[%s572] sm:$0xf]
      %v574 = vld [vmem:[%s572 + $0x4] sm:$0xf]
      %v577 = vunpack.c.l.b16 %v573
      %v578 = vunpack.c.l.b16 %v574
      %v579 = vpack.c.b16 %v578, %v577
      %v581 = vsel %vm226, %v579, 0
      %v584 = vand.u32 %v194, %v233
      %586 = vmatprep.subr.bf16.mxu0 0
      %587 = vmatpush1.bf16.msra.mxu0 %v584
      %588 = vmatprep.subr.bf16.mxu0 0
      %589 = vmatpush1.bf16.msra.mxu0 0
      %590 = vmatprep.subr.bf16.mxu0 0
      %591 = vmatpush1.bf16.msra.mxu0 0
      %592 = vmatprep.subr.bf16.mxu0 0
      %593 = vmatpush1.bf16.msra.mxu0 0
      %594 = vmatprep.subr.bf16.mxu0 0
      %595 = vmatpush1.bf16.msra.mxu0 0
      %596 = vmatprep.subr.bf16.mxu0 0
      %597 = vmatpush1.bf16.msra.mxu0 0
      %598 = vmatprep.subr.bf16.mxu0 0
      %599 = vmatpush1.bf16.msra.mxu0 0
      %600 = vmatprep.subr.bf16.mxu0 0
      %601 = vmatpush1.bf16.msra.mxu0 0
      %602 = vmatprep.subr.bf16.mxu0 0
      %603 = vmatpush1.bf16.msra.mxu0 0
      %604 = vmatprep.subr.bf16.mxu0 0
      %605 = vmatpush1.bf16.msra.mxu0 0
      %606 = vmatprep.subr.bf16.mxu0 0
      %607 = vmatpush1.bf16.msra.mxu0 0
      %608 = vmatprep.subr.bf16.mxu0 0
      %609 = vmatpush1.bf16.msra.mxu0 0
      %610 = vmatprep.subr.bf16.mxu0 0
      %611 = vmatpush1.bf16.msra.mxu0 0
      %612 = vmatprep.subr.bf16.mxu0 0
      %613 = vmatpush1.bf16.msra.mxu0 0
      %614 = vmatprep.subr.bf16.mxu0 0
      %615 = vmatpush1.bf16.msra.mxu0 0
      %616 = vmatprep.subr.bf16.mxu0 0
      %617 = vmatpush1.bf16.msra.mxu0 0
      %618 = vmatprep.mubr.bf16.mxu0 0
      %619 = vmatmul.mubr.bf16.gmra.mrb[0].mxu0 %v581
      %v620 = vpop.f32.mrb[0].mxu0
      %v621 = vadd.f32 0.0, %v620
      %v622 = vpop.f32.mrb[0].mxu0
      %v623 = vpop.f32.mrb[0].mxu0
      %v624 = vadd.f32 0.0, %v623
      %v625 = vpop.f32.mrb[0].mxu0
      %626 = vdwg.mxu0
      %v627 = vadd.f32 %v567, %v621
      %v628 = vadd.f32 %v568, %v624
      %v629 = vld [vmem:[%s572] sm:$0xf]
      %v630 = vld [vmem:[%s572 + $0x4] sm:$0xf]
      %v631 = vld [vmem:[%s572 + $0x8] sm:$0x1]
      %v635 = vunpack.c.l.b16 %v629
      %v636 = vunpack.c.l.b16 %v630
      %v637 = vunpack.c.l.b16 %v631
      %v638 = vpack.c.b16 %v636, %v635
      %v639 = vpack.c.b16 %v637, %v637
      %v641 = vshrl.u32 %v638, 16
      %v643 = vshll.u32 %v638, 16
      %v645 = vrot.slane %v643, 1
      %v646 = vor.u32 %v641, %v645
      %v648 = vshll.u32 %v639, 16
      %v650 = vrot.slane %v648, 1
      %v651 = vsel %vm213, %v646, %v650
      %v653 = vsel %vm226, %v651, 0
      %v656 = vand.u32 %v196, %v233
      %658 = vmatprep.subr.bf16.mxu0 0
      %659 = vmatpush1.bf16.msra.mxu0 %v656
      %660 = vmatprep.subr.bf16.mxu0 0
      %661 = vmatpush1.bf16.msra.mxu0 0
      %662 = vmatprep.subr.bf16.mxu0 0
      %663 = vmatpush1.bf16.msra.mxu0 0
      %664 = vmatprep.subr.bf16.mxu0 0
      %665 = vmatpush1.bf16.msra.mxu0 0
      %666 = vmatprep.subr.bf16.mxu0 0
      %667 = vmatpush1.bf16.msra.mxu0 0
      %668 = vmatprep.subr.bf16.mxu0 0
      %669 = vmatpush1.bf16.msra.mxu0 0
      %670 = vmatprep.subr.bf16.mxu0 0
      %671 = vmatpush1.bf16.msra.mxu0 0
      %672 = vmatprep.subr.bf16.mxu0 0
      %673 = vmatpush1.bf16.msra.mxu0 0
      %674 = vmatprep.subr.bf16.mxu0 0
      %675 = vmatpush1.bf16.msra.mxu0 0
      %676 = vmatprep.subr.bf16.mxu0 0
      %677 = vmatpush1.bf16.msra.mxu0 0
      %678 = vmatprep.subr.bf16.mxu0 0
      %679 = vmatpush1.bf16.msra.mxu0 0
      %680 = vmatprep.subr.bf16.mxu0 0
      %681 = vmatpush1.bf16.msra.mxu0 0
      %682 = vmatprep.subr.bf16.mxu0 0
      %683 = vmatpush1.bf16.msra.mxu0 0
      %684 = vmatprep.subr.bf16.mxu0 0
      %685 = vmatpush1.bf16.msra.mxu0 0
      %686 = vmatprep.subr.bf16.mxu0 0
      %687 = vmatpush1.bf16.msra.mxu0 0
      %688 = vmatprep.subr.bf16.mxu0 0
      %689 = vmatpush1.bf16.msra.mxu0 0
      %690 = vmatprep.mubr.bf16.mxu0 0
      %691 = vmatmul.mubr.bf16.gmra.mrb[0].mxu0 %v653
      %v692 = vpop.f32.mrb[0].mxu0
      %v693 = vadd.f32 0.0, %v692
      %v694 = vpop.f32.mrb[0].mxu0
      %v695 = vpop.f32.mrb[0].mxu0
      %v696 = vadd.f32 0.0, %v695
      %v697 = vpop.f32.mrb[0].mxu0
      %698 = vdwg.mxu0
      %v699 = vadd.f32 %v627, %v693
      %v700 = vadd.f32 %v628, %v696
      %v701 = vld [vmem:[%s572] sm:$0xe]
      %v703 = vunpack.c.l.b16 %v701
      %v704 = vpack.c.b16 %v636, %v703
      %v705 = vrot.slane %v704, 1
      %v706 = vrot.slane %v639, 1
      %v707 = vsel %vm328, %v705, %v706
      %v709 = vsel %vm226, %v707, 0
      %v712 = vand.u32 %v198, %v233
      %714 = vmatprep.subr.bf16.mxu0 0
      %715 = vmatpush1.bf16.msra.mxu0 %v712
      %716 = vmatprep.subr.bf16.mxu0 0
      %717 = vmatpush1.bf16.msra.mxu0 0
      %718 = vmatprep.subr.bf16.mxu0 0
      %719 = vmatpush1.bf16.msra.mxu0 0
      %720 = vmatprep.subr.bf16.mxu0 0
      %721 = vmatpush1.bf16.msra.mxu0 0
      %722 = vmatprep.subr.bf16.mxu0 0
      %723 = vmatpush1.bf16.msra.mxu0 0
      %724 = vmatprep.subr.bf16.mxu0 0
      %725 = vmatpush1.bf16.msra.mxu0 0
      %726 = vmatprep.subr.bf16.mxu0 0
      %727 = vmatpush1.bf16.msra.mxu0 0
      %728 = vmatprep.subr.bf16.mxu0 0
      %729 = vmatpush1.bf16.msra.mxu0 0
      %730 = vmatprep.subr.bf16.mxu0 0
      %731 = vmatpush1.bf16.msra.mxu0 0
      %732 = vmatprep.subr.bf16.mxu0 0
      %733 = vmatpush1.bf16.msra.mxu0 0
      %734 = vmatprep.subr.bf16.mxu0 0
      %735 = vmatpush1.bf16.msra.mxu0 0
      %736 = vmatprep.subr.bf16.mxu0 0
      %737 = vmatpush1.bf16.msra.mxu0 0
      %738 = vmatprep.subr.bf16.mxu0 0
      %739 = vmatpush1.bf16.msra.mxu0 0
      %740 = vmatprep.subr.bf16.mxu0 0
      %741 = vmatpush1.bf16.msra.mxu0 0
      %742 = vmatprep.subr.bf16.mxu0 0
      %743 = vmatpush1.bf16.msra.mxu0 0
      %744 = vmatprep.subr.bf16.mxu0 0
      %745 = vmatpush1.bf16.msra.mxu0 0
      %746 = vmatprep.mubr.bf16.mxu0 0
      %747 = vmatmul.mubr.bf16.gmra.mrb[0].mxu0 %v709
      %v748 = vpop.f32.mrb[0].mxu0
      %v749 = vadd.f32 0.0, %v748
      %v750 = vpop.f32.mrb[0].mxu0
      %v751 = vpop.f32.mrb[0].mxu0
      %v752 = vadd.f32 0.0, %v751
      %v753 = vpop.f32.mrb[0].mxu0
      %754 = vdwg.mxu0
      %v755 = vadd.f32 %v699, %v749
      %v756 = vadd.f32 %v700, %v752
      %v758 = vlaneseq
      %v759 = vshrl.u32 %v758, 7
      %v760 = vsub.s32 0, %v759
      %v761 = vrot.slane %v181, %v760
      %v763 = vadd.f32 %v755, %v761
      %v764 = vadd.f32 %v756, %v761
      %v765 = vmax.f32 %v763, 0.0
      %v766 = vmax.f32 %v764, 0.0
      %v767 = vadd.f32 %v765, %v766
      %v768 = vrot.slane %v767, 4
      %v769 = vadd.f32 %v767, %v768
      %v770 = vrot.slane %v769, 2
      %v771 = vadd.f32 %v769, %v770
      %v772 = vrot.slane %v771, 1
      %v773 = vadd.f32 %v771, %v772
      %p774 = scmp.lt.s32.totalorder %s180, 16
      %s775 = scalar_select %p774, 1, 0
      %s776 = scvt.s32.f32 %s775
      %v777 = vstv %s776
      %v778 = vmul.f32 %v777, %v773
      %v779 = vadd.f32 %v778, 0.0
      %780 = vmatprep.subr.bf16.mxu0 0
      %781 = vmatpush1.bf16.msra.mxu0 %v235
      %782 = vmatprep.subr.bf16.mxu0 0
      %783 = vmatpush1.bf16.msra.mxu0 0
      %784 = vmatprep.subr.bf16.mxu0 0
      %785 = vmatpush1.bf16.msra.mxu0 0
      %786 = vmatprep.subr.bf16.mxu0 0
      %787 = vmatpush1.bf16.msra.mxu0 0
      %788 = vmatprep.subr.bf16.mxu0 0
      %789 = vmatpush1.bf16.msra.mxu0 0
      %790 = vmatprep.subr.bf16.mxu0 0
      %791 = vmatpush1.bf16.msra.mxu0 0
      %792 = vmatprep.subr.bf16.mxu0 0
      %793 = vmatpush1.bf16.msra.mxu0 0
      %794 = vmatprep.subr.bf16.mxu0 0
      %795 = vmatpush1.bf16.msra.mxu0 0
      %796 = vmatprep.subr.bf16.mxu0 0
      %797 = vmatpush1.bf16.msra.mxu0 0
      %798 = vmatprep.subr.bf16.mxu0 0
      %799 = vmatpush1.bf16.msra.mxu0 0
      %800 = vmatprep.subr.bf16.mxu0 0
      %801 = vmatpush1.bf16.msra.mxu0 0
      %802 = vmatprep.subr.bf16.mxu0 0
      %803 = vmatpush1.bf16.msra.mxu0 0
      %804 = vmatprep.subr.bf16.mxu0 0
      %805 = vmatpush1.bf16.msra.mxu0 0
      %806 = vmatprep.subr.bf16.mxu0 0
      %807 = vmatpush1.bf16.msra.mxu0 0
      %808 = vmatprep.subr.bf16.mxu0 0
      %809 = vmatpush1.bf16.msra.mxu0 0
      %810 = vmatprep.subr.bf16.mxu0 0
      %811 = vmatpush1.bf16.msra.mxu0 0
      %812 = vmatprep.mubr.bf16.mxu0 0
      %813 = vmatmul.mubr.bf16.gmra.mrb[0].mxu0 %v465
      %v814 = vpop.f32.mrb[0].mxu0
      %v815 = vadd.f32 0.0, %v814
      %v816 = vpop.f32.mrb[0].mxu0
      %v817 = vpop.f32.mrb[0].mxu0
      %v818 = vadd.f32 0.0, %v817
      %v819 = vpop.f32.mrb[0].mxu0
      %820 = vdwg.mxu0
      %821 = vmatprep.subr.bf16.mxu0 0
      %822 = vmatpush1.bf16.msra.mxu0 %v281
      %823 = vmatprep.subr.bf16.mxu0 0
      %824 = vmatpush1.bf16.msra.mxu0 0
      %825 = vmatprep.subr.bf16.mxu0 0
      %826 = vmatpush1.bf16.msra.mxu0 0
      %827 = vmatprep.subr.bf16.mxu0 0
      %828 = vmatpush1.bf16.msra.mxu0 0
      %829 = vmatprep.subr.bf16.mxu0 0
      %830 = vmatpush1.bf16.msra.mxu0 0
      %831 = vmatprep.subr.bf16.mxu0 0
      %832 = vmatpush1.bf16.msra.mxu0 0
      %833 = vmatprep.subr.bf16.mxu0 0
      %834 = vmatpush1.bf16.msra.mxu0 0
      %835 = vmatprep.subr.bf16.mxu0 0
      %836 = vmatpush1.bf16.msra.mxu0 0
      %837 = vmatprep.subr.bf16.mxu0 0
      %838 = vmatpush1.bf16.msra.mxu0 0
      %839 = vmatprep.subr.bf16.mxu0 0
      %840 = vmatpush1.bf16.msra.mxu0 0
      %841 = vmatprep.subr.bf16.mxu0 0
      %842 = vmatpush1.bf16.msra.mxu0 0
      %843 = vmatprep.subr.bf16.mxu0 0
      %844 = vmatpush1.bf16.msra.mxu0 0
      %845 = vmatprep.subr.bf16.mxu0 0
      %846 = vmatpush1.bf16.msra.mxu0 0
      %847 = vmatprep.subr.bf16.mxu0 0
      %848 = vmatpush1.bf16.msra.mxu0 0
      %849 = vmatprep.subr.bf16.mxu0 0
      %850 = vmatpush1.bf16.msra.mxu0 0
      %851 = vmatprep.subr.bf16.mxu0 0
      %852 = vmatpush1.bf16.msra.mxu0 0
      %853 = vmatprep.mubr.bf16.mxu0 0
      %854 = vmatmul.mubr.bf16.gmra.mrb[0].mxu0 %v393
      %v855 = vpop.f32.mrb[0].mxu0
      %v856 = vadd.f32 %v815, %v855
      %v857 = vpop.f32.mrb[0].mxu0
      %v858 = vpop.f32.mrb[0].mxu0
      %v859 = vadd.f32 %v818, %v858
      %v860 = vpop.f32.mrb[0].mxu0
      %861 = vdwg.mxu0
      %862 = vmatprep.subr.bf16.mxu0 0
      %863 = vmatpush1.bf16.msra.mxu0 %v336
      %864 = vmatprep.subr.bf16.mxu0 0
      %865 = vmatpush1.bf16.msra.mxu0 0
      %866 = vmatprep.subr.bf16.mxu0 0
      %867 = vmatpush1.bf16.msra.mxu0 0
      %868 = vmatprep.subr.bf16.mxu0 0
      %869 = vmatpush1.bf16.msra.mxu0 0
      %870 = vmatprep.subr.bf16.mxu0 0
      %871 = vmatpush1.bf16.msra.mxu0 0
      %872 = vmatprep.subr.bf16.mxu0 0
      %873 = vmatpush1.bf16.msra.mxu0 0
      %874 = vmatprep.subr.bf16.mxu0 0
      %875 = vmatpush1.bf16.msra.mxu0 0
      %876 = vmatprep.subr.bf16.mxu0 0
      %877 = vmatpush1.bf16.msra.mxu0 0
      %878 = vmatprep.subr.bf16.mxu0 0
      %879 = vmatpush1.bf16.msra.mxu0 0
      %880 = vmatprep.subr.bf16.mxu0 0
      %881 = vmatpush1.bf16.msra.mxu0 0
      %882 = vmatprep.subr.bf16.mxu0 0
      %883 = vmatpush1.bf16.msra.mxu0 0
      %884 = vmatprep.subr.bf16.mxu0 0
      %885 = vmatpush1.bf16.msra.mxu0 0
      %886 = vmatprep.subr.bf16.mxu0 0
      %887 = vmatpush1.bf16.msra.mxu0 0
      %888 = vmatprep.subr.bf16.mxu0 0
      %889 = vmatpush1.bf16.msra.mxu0 0
      %890 = vmatprep.subr.bf16.mxu0 0
      %891 = vmatpush1.bf16.msra.mxu0 0
      %892 = vmatprep.subr.bf16.mxu0 0
      %893 = vmatpush1.bf16.msra.mxu0 0
      %894 = vmatprep.mubr.bf16.mxu0 0
      %895 = vmatmul.mubr.bf16.gmra.mrb[0].mxu0 %v521
      %v896 = vpop.f32.mrb[0].mxu0
      %v897 = vadd.f32 0.0, %v896
      %v898 = vpop.f32.mrb[0].mxu0
      %v899 = vpop.f32.mrb[0].mxu0
      %v900 = vadd.f32 0.0, %v899
      %v901 = vpop.f32.mrb[0].mxu0
      %902 = vdwg.mxu0
      %v903 = vadd.f32 %v856, %v897
      %v904 = vadd.f32 %v859, %v900
      %905 = vmatprep.subr.bf16.mxu0 0
      %906 = vmatpush1.bf16.msra.mxu0 %v396
      %907 = vmatprep.subr.bf16.mxu0 0
      %908 = vmatpush1.bf16.msra.mxu0 0
      %909 = vmatprep.subr.bf16.mxu0 0
      %910 = vmatpush1.bf16.msra.mxu0 0
      %911 = vmatprep.subr.bf16.mxu0 0
      %912 = vmatpush1.bf16.msra.mxu0 0
      %913 = vmatprep.subr.bf16.mxu0 0
      %914 = vmatpush1.bf16.msra.mxu0 0
      %915 = vmatprep.subr.bf16.mxu0 0
      %916 = vmatpush1.bf16.msra.mxu0 0
      %917 = vmatprep.subr.bf16.mxu0 0
      %918 = vmatpush1.bf16.msra.mxu0 0
      %919 = vmatprep.subr.bf16.mxu0 0
      %920 = vmatpush1.bf16.msra.mxu0 0
      %921 = vmatprep.subr.bf16.mxu0 0
      %922 = vmatpush1.bf16.msra.mxu0 0
      %923 = vmatprep.subr.bf16.mxu0 0
      %924 = vmatpush1.bf16.msra.mxu0 0
      %925 = vmatprep.subr.bf16.mxu0 0
      %926 = vmatpush1.bf16.msra.mxu0 0
      %927 = vmatprep.subr.bf16.mxu0 0
      %928 = vmatpush1.bf16.msra.mxu0 0
      %929 = vmatprep.subr.bf16.mxu0 0
      %930 = vmatpush1.bf16.msra.mxu0 0
      %931 = vmatprep.subr.bf16.mxu0 0
      %932 = vmatpush1.bf16.msra.mxu0 0
      %933 = vmatprep.subr.bf16.mxu0 0
      %934 = vmatpush1.bf16.msra.mxu0 0
      %935 = vmatprep.subr.bf16.mxu0 0
      %936 = vmatpush1.bf16.msra.mxu0 0
      %937 = vmatprep.mubr.bf16.mxu0 0
      %938 = vmatmul.mubr.bf16.gmra.mrb[0].mxu0 %v581
      %v939 = vpop.f32.mrb[0].mxu0
      %v940 = vadd.f32 0.0, %v939
      %v941 = vpop.f32.mrb[0].mxu0
      %v942 = vpop.f32.mrb[0].mxu0
      %v943 = vadd.f32 0.0, %v942
      %v944 = vpop.f32.mrb[0].mxu0
      %945 = vdwg.mxu0
      %v946 = vadd.f32 %v903, %v940
      %v947 = vadd.f32 %v904, %v943
      %948 = vmatprep.subr.bf16.mxu0 0
      %949 = vmatpush1.bf16.msra.mxu0 %v468
      %950 = vmatprep.subr.bf16.mxu0 0
      %951 = vmatpush1.bf16.msra.mxu0 0
      %952 = vmatprep.subr.bf16.mxu0 0
      %953 = vmatpush1.bf16.msra.mxu0 0
      %954 = vmatprep.subr.bf16.mxu0 0
      %955 = vmatpush1.bf16.msra.mxu0 0
      %956 = vmatprep.subr.bf16.mxu0 0
      %957 = vmatpush1.bf16.msra.mxu0 0
      %958 = vmatprep.subr.bf16.mxu0 0
      %959 = vmatpush1.bf16.msra.mxu0 0
      %960 = vmatprep.subr.bf16.mxu0 0
      %961 = vmatpush1.bf16.msra.mxu0 0
      %962 = vmatprep.subr.bf16.mxu0 0
      %963 = vmatpush1.bf16.msra.mxu0 0
      %964 = vmatprep.subr.bf16.mxu0 0
      %965 = vmatpush1.bf16.msra.mxu0 0
      %966 = vmatprep.subr.bf16.mxu0 0
      %967 = vmatpush1.bf16.msra.mxu0 0
      %968 = vmatprep.subr.bf16.mxu0 0
      %969 = vmatpush1.bf16.msra.mxu0 0
      %970 = vmatprep.subr.bf16.mxu0 0
      %971 = vmatpush1.bf16.msra.mxu0 0
      %972 = vmatprep.subr.bf16.mxu0 0
      %973 = vmatpush1.bf16.msra.mxu0 0
      %974 = vmatprep.subr.bf16.mxu0 0
      %975 = vmatpush1.bf16.msra.mxu0 0
      %976 = vmatprep.subr.bf16.mxu0 0
      %977 = vmatpush1.bf16.msra.mxu0 0
      %978 = vmatprep.subr.bf16.mxu0 0
      %979 = vmatpush1.bf16.msra.mxu0 0
      %980 = vmatprep.mubr.bf16.mxu0 0
      %981 = vmatmul.mubr.bf16.gmra.mrb[0].mxu0 %v653
      %v982 = vpop.f32.mrb[0].mxu0
      %v983 = vadd.f32 0.0, %v982
      %v984 = vpop.f32.mrb[0].mxu0
      %v985 = vpop.f32.mrb[0].mxu0
      %v986 = vadd.f32 0.0, %v985
      %v987 = vpop.f32.mrb[0].mxu0
      %988 = vdwg.mxu0
      %v989 = vadd.f32 %v946, %v983
      %v990 = vadd.f32 %v947, %v986
      %991 = vmatprep.subr.bf16.mxu0 0
      %992 = vmatpush1.bf16.msra.mxu0 %v524
      %993 = vmatprep.subr.bf16.mxu0 0
      %994 = vmatpush1.bf16.msra.mxu0 0
      %995 = vmatprep.subr.bf16.mxu0 0
      %996 = vmatpush1.bf16.msra.mxu0 0
      %997 = vmatprep.subr.bf16.mxu0 0
      %998 = vmatpush1.bf16.msra.mxu0 0
      %999 = vmatprep.subr.bf16.mxu0 0
      %1000 = vmatpush1.bf16.msra.mxu0 0
      %1001 = vmatprep.subr.bf16.mxu0 0
      %1002 = vmatpush1.bf16.msra.mxu0 0
      %1003 = vmatprep.subr.bf16.mxu0 0
      %1004 = vmatpush1.bf16.msra.mxu0 0
      %1005 = vmatprep.subr.bf16.mxu0 0
      %1006 = vmatpush1.bf16.msra.mxu0 0
      %1007 = vmatprep.subr.bf16.mxu0 0
      %1008 = vmatpush1.bf16.msra.mxu0 0
      %1009 = vmatprep.subr.bf16.mxu0 0
      %1010 = vmatpush1.bf16.msra.mxu0 0
      %1011 = vmatprep.subr.bf16.mxu0 0
      %1012 = vmatpush1.bf16.msra.mxu0 0
      %1013 = vmatprep.subr.bf16.mxu0 0
      %1014 = vmatpush1.bf16.msra.mxu0 0
      %1015 = vmatprep.subr.bf16.mxu0 0
      %1016 = vmatpush1.bf16.msra.mxu0 0
      %1017 = vmatprep.subr.bf16.mxu0 0
      %1018 = vmatpush1.bf16.msra.mxu0 0
      %1019 = vmatprep.subr.bf16.mxu0 0
      %1020 = vmatpush1.bf16.msra.mxu0 0
      %1021 = vmatprep.subr.bf16.mxu0 0
      %1022 = vmatpush1.bf16.msra.mxu0 0
      %1023 = vmatprep.mubr.bf16.mxu0 0
      %1024 = vmatmul.mubr.bf16.gmra.mrb[0].mxu0 %v709
      %v1025 = vpop.f32.mrb[0].mxu0
      %v1026 = vadd.f32 0.0, %v1025
      %v1027 = vpop.f32.mrb[0].mxu0
      %v1028 = vpop.f32.mrb[0].mxu0
      %v1029 = vadd.f32 0.0, %v1028
      %v1030 = vpop.f32.mrb[0].mxu0
      %1031 = vdwg.mxu0
      %v1032 = vadd.f32 %v989, %v1026
      %v1033 = vadd.f32 %v990, %v1029
      %s1034 = sadd.s32 %s180, 3
      %s1035 = smul.u32 %s1034, 3
      %s1036 = smul.addr %s1035, 4
      %s1037 = scalar_lea.vmem %s175, %s1036
      %v1038 = vld [vmem:[%s1037] sm:$0xf]
      %v1039 = vld [vmem:[%s1037 + $0x4] sm:$0xf]
      %v1042 = vunpack.c.l.b16 %v1038
      %v1043 = vunpack.c.l.b16 %v1039
      %v1044 = vpack.c.b16 %v1043, %v1042
      %v1046 = vsel %vm226, %v1044, 0
      %1048 = vmatprep.subr.bf16.mxu0 0
      %1049 = vmatpush1.bf16.msra.mxu0 %v584
      %1050 = vmatprep.subr.bf16.mxu0 0
      %1051 = vmatpush1.bf16.msra.mxu0 0
      %1052 = vmatprep.subr.bf16.mxu0 0
      %1053 = vmatpush1.bf16.msra.mxu0 0
      %1054 = vmatprep.subr.bf16.mxu0 0
      %1055 = vmatpush1.bf16.msra.mxu0 0
      %1056 = vmatprep.subr.bf16.mxu0 0
      %1057 = vmatpush1.bf16.msra.mxu0 0
      %1058 = vmatprep.subr.bf16.mxu0 0
      %1059 = vmatpush1.bf16.msra.mxu0 0
      %1060 = vmatprep.subr.bf16.mxu0 0
      %1061 = vmatpush1.bf16.msra.mxu0 0
      %1062 = vmatprep.subr.bf16.mxu0 0
      %1063 = vmatpush1.bf16.msra.mxu0 0
      %1064 = vmatprep.subr.bf16.mxu0 0
      %1065 = vmatpush1.bf16.msra.mxu0 0
      %1066 = vmatprep.subr.bf16.mxu0 0
      %1067 = vmatpush1.bf16.msra.mxu0 0
      %1068 = vmatprep.subr.bf16.mxu0 0
      %1069 = vmatpush1.bf16.msra.mxu0 0
      %1070 = vmatprep.subr.bf16.mxu0 0
      %1071 = vmatpush1.bf16.msra.mxu0 0
      %1072 = vmatprep.subr.bf16.mxu0 0
      %1073 = vmatpush1.bf16.msra.mxu0 0
      %1074 = vmatprep.subr.bf16.mxu0 0
      %1075 = vmatpush1.bf16.msra.mxu0 0
      %1076 = vmatprep.subr.bf16.mxu0 0
      %1077 = vmatpush1.bf16.msra.mxu0 0
      %1078 = vmatprep.subr.bf16.mxu0 0
      %1079 = vmatpush1.bf16.msra.mxu0 0
      %1080 = vmatprep.mubr.bf16.mxu0 0
      %1081 = vmatmul.mubr.bf16.gmra.mrb[0].mxu0 %v1046
      %v1082 = vpop.f32.mrb[0].mxu0
      %v1083 = vadd.f32 0.0, %v1082
      %v1084 = vpop.f32.mrb[0].mxu0
      %v1085 = vpop.f32.mrb[0].mxu0
      %v1086 = vadd.f32 0.0, %v1085
      %v1087 = vpop.f32.mrb[0].mxu0
      %1088 = vdwg.mxu0
      %v1089 = vadd.f32 %v1032, %v1083
      %v1090 = vadd.f32 %v1033, %v1086
      %v1091 = vld [vmem:[%s1037] sm:$0xf]
      %v1092 = vld [vmem:[%s1037 + $0x4] sm:$0xf]
      %v1093 = vld [vmem:[%s1037 + $0x8] sm:$0x1]
      %v1097 = vunpack.c.l.b16 %v1091
      %v1098 = vunpack.c.l.b16 %v1092
      %v1099 = vunpack.c.l.b16 %v1093
      %v1100 = vpack.c.b16 %v1098, %v1097
      %v1101 = vpack.c.b16 %v1099, %v1099
      %v1103 = vshrl.u32 %v1100, 16
      %v1105 = vshll.u32 %v1100, 16
      %v1107 = vrot.slane %v1105, 1
      %v1108 = vor.u32 %v1103, %v1107
      %v1110 = vshll.u32 %v1101, 16
      %v1112 = vrot.slane %v1110, 1
      %v1113 = vsel %vm213, %v1108, %v1112
      %v1115 = vsel %vm226, %v1113, 0
      %1117 = vmatprep.subr.bf16.mxu0 0
      %1118 = vmatpush1.bf16.msra.mxu0 %v656
      %1119 = vmatprep.subr.bf16.mxu0 0
      %1120 = vmatpush1.bf16.msra.mxu0 0
      %1121 = vmatprep.subr.bf16.mxu0 0
      %1122 = vmatpush1.bf16.msra.mxu0 0
      %1123 = vmatprep.subr.bf16.mxu0 0
      %1124 = vmatpush1.bf16.msra.mxu0 0
      %1125 = vmatprep.subr.bf16.mxu0 0
      %1126 = vmatpush1.bf16.msra.mxu0 0
      %1127 = vmatprep.subr.bf16.mxu0 0
      %1128 = vmatpush1.bf16.msra.mxu0 0
      %1129 = vmatprep.subr.bf16.mxu0 0
      %1130 = vmatpush1.bf16.msra.mxu0 0
      %1131 = vmatprep.subr.bf16.mxu0 0
      %1132 = vmatpush1.bf16.msra.mxu0 0
      %1133 = vmatprep.subr.bf16.mxu0 0
      %1134 = vmatpush1.bf16.msra.mxu0 0
      %1135 = vmatprep.subr.bf16.mxu0 0
      %1136 = vmatpush1.bf16.msra.mxu0 0
      %1137 = vmatprep.subr.bf16.mxu0 0
      %1138 = vmatpush1.bf16.msra.mxu0 0
      %1139 = vmatprep.subr.bf16.mxu0 0
      %1140 = vmatpush1.bf16.msra.mxu0 0
      %1141 = vmatprep.subr.bf16.mxu0 0
      %1142 = vmatpush1.bf16.msra.mxu0 0
      %1143 = vmatprep.subr.bf16.mxu0 0
      %1144 = vmatpush1.bf16.msra.mxu0 0
      %1145 = vmatprep.subr.bf16.mxu0 0
      %1146 = vmatpush1.bf16.msra.mxu0 0
      %1147 = vmatprep.subr.bf16.mxu0 0
      %1148 = vmatpush1.bf16.msra.mxu0 0
      %1149 = vmatprep.mubr.bf16.mxu0 0
      %1150 = vmatmul.mubr.bf16.gmra.mrb[0].mxu0 %v1115
      %v1151 = vpop.f32.mrb[0].mxu0
      %v1152 = vadd.f32 0.0, %v1151
      %v1153 = vpop.f32.mrb[0].mxu0
      %v1154 = vpop.f32.mrb[0].mxu0
      %v1155 = vadd.f32 0.0, %v1154
      %v1156 = vpop.f32.mrb[0].mxu0
      %1157 = vdwg.mxu0
      %v1158 = vadd.f32 %v1089, %v1152
      %v1159 = vadd.f32 %v1090, %v1155
      %v1160 = vld [vmem:[%s1037] sm:$0xe]
      %v1162 = vunpack.c.l.b16 %v1160
      %v1163 = vpack.c.b16 %v1098, %v1162
      %v1164 = vrot.slane %v1163, 1
      %v1165 = vrot.slane %v1101, 1
      %v1166 = vsel %vm328, %v1164, %v1165
      %v1168 = vsel %vm226, %v1166, 0
      %1170 = vmatprep.subr.bf16.mxu0 0
      %1171 = vmatpush1.bf16.msra.mxu0 %v712
      %1172 = vmatprep.subr.bf16.mxu0 0
      %1173 = vmatpush1.bf16.msra.mxu0 0
      %1174 = vmatprep.subr.bf16.mxu0 0
      %1175 = vmatpush1.bf16.msra.mxu0 0
      %1176 = vmatprep.subr.bf16.mxu0 0
      %1177 = vmatpush1.bf16.msra.mxu0 0
      %1178 = vmatprep.subr.bf16.mxu0 0
      %1179 = vmatpush1.bf16.msra.mxu0 0
      %1180 = vmatprep.subr.bf16.mxu0 0
      %1181 = vmatpush1.bf16.msra.mxu0 0
      %1182 = vmatprep.subr.bf16.mxu0 0
      %1183 = vmatpush1.bf16.msra.mxu0 0
      %1184 = vmatprep.subr.bf16.mxu0 0
      %1185 = vmatpush1.bf16.msra.mxu0 0
      %1186 = vmatprep.subr.bf16.mxu0 0
      %1187 = vmatpush1.bf16.msra.mxu0 0
      %1188 = vmatprep.subr.bf16.mxu0 0
      %1189 = vmatpush1.bf16.msra.mxu0 0
      %1190 = vmatprep.subr.bf16.mxu0 0
      %1191 = vmatpush1.bf16.msra.mxu0 0
      %1192 = vmatprep.subr.bf16.mxu0 0
      %1193 = vmatpush1.bf16.msra.mxu0 0
      %1194 = vmatprep.subr.bf16.mxu0 0
      %1195 = vmatpush1.bf16.msra.mxu0 0
      %1196 = vmatprep.subr.bf16.mxu0 0
      %1197 = vmatpush1.bf16.msra.mxu0 0
      %1198 = vmatprep.subr.bf16.mxu0 0
      %1199 = vmatpush1.bf16.msra.mxu0 0
      %1200 = vmatprep.subr.bf16.mxu0 0
      %1201 = vmatpush1.bf16.msra.mxu0 0
      %1202 = vmatprep.mubr.bf16.mxu0 0
      %1203 = vmatmul.mubr.bf16.gmra.mrb[0].mxu0 %v1168
      %v1204 = vpop.f32.mrb[0].mxu0
      %v1205 = vadd.f32 0.0, %v1204
      %v1206 = vpop.f32.mrb[0].mxu0
      %v1207 = vpop.f32.mrb[0].mxu0
      %v1208 = vadd.f32 0.0, %v1207
      %v1209 = vpop.f32.mrb[0].mxu0
      %1210 = vdwg.mxu0
      %v1211 = vadd.f32 %v1158, %v1205
      %v1212 = vadd.f32 %v1159, %v1208
      %v1213 = vadd.f32 %v1211, %v761
      %v1214 = vadd.f32 %v1212, %v761
      %v1215 = vmax.f32 %v1213, 0.0
      %v1216 = vmax.f32 %v1214, 0.0
      %v1217 = vadd.f32 %v1215, %v1216
      %v1218 = vrot.slane %v1217, 4
      %v1219 = vadd.f32 %v1217, %v1218
      %v1220 = vrot.slane %v1219, 2
      %v1221 = vadd.f32 %v1219, %v1220
      %v1222 = vrot.slane %v1221, 1
      %v1223 = vadd.f32 %v1221, %v1222
      %p1224 = scmp.lt.s32.totalorder %s381, 16
      %s1225 = scalar_select %p1224, 1, 0
      %s1226 = scvt.s32.f32 %s1225
      %v1227 = vstv %s1226
      %v1228 = vmul.f32 %v1227, %v1223
      %v1229 = vadd.f32 %v779, %v1228
      %1230 = vmatprep.subr.bf16.mxu0 0
      %1231 = vmatpush1.bf16.msra.mxu0 %v235
      %1232 = vmatprep.subr.bf16.mxu0 0
      %1233 = vmatpush1.bf16.msra.mxu0 0
      %1234 = vmatprep.subr.bf16.mxu0 0
      %1235 = vmatpush1.bf16.msra.mxu0 0
      %1236 = vmatprep.subr.bf16.mxu0 0
      %1237 = vmatpush1.bf16.msra.mxu0 0
      %1238 = vmatprep.subr.bf16.mxu0 0
      %1239 = vmatpush1.bf16.msra.mxu0 0
      %1240 = vmatprep.subr.bf16.mxu0 0
      %1241 = vmatpush1.bf16.msra.mxu0 0
      %1242 = vmatprep.subr.bf16.mxu0 0
      %1243 = vmatpush1.bf16.msra.mxu0 0
      %1244 = vmatprep.subr.bf16.mxu0 0
      %1245 = vmatpush1.bf16.msra.mxu0 0
      %1246 = vmatprep.subr.bf16.mxu0 0
      %1247 = vmatpush1.bf16.msra.mxu0 0
      %1248 = vmatprep.subr.bf16.mxu0 0
      %1249 = vmatpush1.bf16.msra.mxu0 0
      %1250 = vmatprep.subr.bf16.mxu0 0
      %1251 = vmatpush1.bf16.msra.mxu0 0
      %1252 = vmatprep.subr.bf16.mxu0 0
      %1253 = vmatpush1.bf16.msra.mxu0 0
      %1254 = vmatprep.subr.bf16.mxu0 0
      %1255 = vmatpush1.bf16.msra.mxu0 0
      %1256 = vmatprep.subr.bf16.mxu0 0
      %1257 = vmatpush1.bf16.msra.mxu0 0
      %1258 = vmatprep.subr.bf16.mxu0 0
      %1259 = vmatpush1.bf16.msra.mxu0 0
      %1260 = vmatprep.subr.bf16.mxu0 0
      %1261 = vmatpush1.bf16.msra.mxu0 0
      %1262 = vmatprep.mubr.bf16.mxu0 0
      %1263 = vmatmul.mubr.bf16.gmra.mrb[0].mxu0 %v653
      %v1264 = vpop.f32.mrb[0].mxu0
      %v1265 = vadd.f32 0.0, %v1264
      %v1266 = vpop.f32.mrb[0].mxu0
      %v1267 = vpop.f32.mrb[0].mxu0
      %v1268 = vadd.f32 0.0, %v1267
      %v1269 = vpop.f32.mrb[0].mxu0
      %1270 = vdwg.mxu0
      %1271 = vmatprep.subr.bf16.mxu0 0
      %1272 = vmatpush1.bf16.msra.mxu0 %v281
      %1273 = vmatprep.subr.bf16.mxu0 0
      %1274 = vmatpush1.bf16.msra.mxu0 0
      %1275 = vmatprep.subr.bf16.mxu0 0
      %1276 = vmatpush1.bf16.msra.mxu0 0
      %1277 = vmatprep.subr.bf16.mxu0 0
      %1278 = vmatpush1.bf16.msra.mxu0 0
      %1279 = vmatprep.subr.bf16.mxu0 0
      %1280 = vmatpush1.bf16.msra.mxu0 0
      %1281 = vmatprep.subr.bf16.mxu0 0
      %1282 = vmatpush1.bf16.msra.mxu0 0
      %1283 = vmatprep.subr.bf16.mxu0 0
      %1284 = vmatpush1.bf16.msra.mxu0 0
      %1285 = vmatprep.subr.bf16.mxu0 0
      %1286 = vmatpush1.bf16.msra.mxu0 0
      %1287 = vmatprep.subr.bf16.mxu0 0
      %1288 = vmatpush1.bf16.msra.mxu0 0
      %1289 = vmatprep.subr.bf16.mxu0 0
      %1290 = vmatpush1.bf16.msra.mxu0 0
      %1291 = vmatprep.subr.bf16.mxu0 0
      %1292 = vmatpush1.bf16.msra.mxu0 0
      %1293 = vmatprep.subr.bf16.mxu0 0
      %1294 = vmatpush1.bf16.msra.mxu0 0
      %1295 = vmatprep.subr.bf16.mxu0 0
      %1296 = vmatpush1.bf16.msra.mxu0 0
      %1297 = vmatprep.subr.bf16.mxu0 0
      %1298 = vmatpush1.bf16.msra.mxu0 0
      %1299 = vmatprep.subr.bf16.mxu0 0
      %1300 = vmatpush1.bf16.msra.mxu0 0
      %1301 = vmatprep.subr.bf16.mxu0 0
      %1302 = vmatpush1.bf16.msra.mxu0 0
      %1303 = vmatprep.mubr.bf16.mxu0 0
      %1304 = vmatmul.mubr.bf16.gmra.mrb[0].mxu0 %v581
      %v1305 = vpop.f32.mrb[0].mxu0
      %v1306 = vadd.f32 %v1265, %v1305
      %v1307 = vpop.f32.mrb[0].mxu0
      %v1308 = vpop.f32.mrb[0].mxu0
      %v1309 = vadd.f32 %v1268, %v1308
      %v1310 = vpop.f32.mrb[0].mxu0
      %1311 = vdwg.mxu0
      %1312 = vmatprep.subr.bf16.mxu0 0
      %1313 = vmatpush1.bf16.msra.mxu0 %v336
      %1314 = vmatprep.subr.bf16.mxu0 0
      %1315 = vmatpush1.bf16.msra.mxu0 0
      %1316 = vmatprep.subr.bf16.mxu0 0
      %1317 = vmatpush1.bf16.msra.mxu0 0
      %1318 = vmatprep.subr.bf16.mxu0 0
      %1319 = vmatpush1.bf16.msra.mxu0 0
      %1320 = vmatprep.subr.bf16.mxu0 0
      %1321 = vmatpush1.bf16.msra.mxu0 0
      %1322 = vmatprep.subr.bf16.mxu0 0
      %1323 = vmatpush1.bf16.msra.mxu0 0
      %1324 = vmatprep.subr.bf16.mxu0 0
      %1325 = vmatpush1.bf16.msra.mxu0 0
      %1326 = vmatprep.subr.bf16.mxu0 0
      %1327 = vmatpush1.bf16.msra.mxu0 0
      %1328 = vmatprep.subr.bf16.mxu0 0
      %1329 = vmatpush1.bf16.msra.mxu0 0
      %1330 = vmatprep.subr.bf16.mxu0 0
      %1331 = vmatpush1.bf16.msra.mxu0 0
      %1332 = vmatprep.subr.bf16.mxu0 0
      %1333 = vmatpush1.bf16.msra.mxu0 0
      %1334 = vmatprep.subr.bf16.mxu0 0
      %1335 = vmatpush1.bf16.msra.mxu0 0
      %1336 = vmatprep.subr.bf16.mxu0 0
      %1337 = vmatpush1.bf16.msra.mxu0 0
      %1338 = vmatprep.subr.bf16.mxu0 0
      %1339 = vmatpush1.bf16.msra.mxu0 0
      %1340 = vmatprep.subr.bf16.mxu0 0
      %1341 = vmatpush1.bf16.msra.mxu0 0
      %1342 = vmatprep.subr.bf16.mxu0 0
      %1343 = vmatpush1.bf16.msra.mxu0 0
      %1344 = vmatprep.mubr.bf16.mxu0 0
      %1345 = vmatmul.mubr.bf16.gmra.mrb[0].mxu0 %v709
      %v1346 = vpop.f32.mrb[0].mxu0
      %v1347 = vadd.f32 0.0, %v1346
      %v1348 = vpop.f32.mrb[0].mxu0
      %v1349 = vpop.f32.mrb[0].mxu0
      %v1350 = vadd.f32 0.0, %v1349
      %v1351 = vpop.f32.mrb[0].mxu0
      %1352 = vdwg.mxu0
      %v1353 = vadd.f32 %v1306, %v1347
      %v1354 = vadd.f32 %v1309, %v1350
      %1355 = vmatprep.subr.bf16.mxu0 0
      %1356 = vmatpush1.bf16.msra.mxu0 %v396
      %1357 = vmatprep.subr.bf16.mxu0 0
      %1358 = vmatpush1.bf16.msra.mxu0 0
      %1359 = vmatprep.subr.bf16.mxu0 0
      %1360 = vmatpush1.bf16.msra.mxu0 0
      %1361 = vmatprep.subr.bf16.mxu0 0
      %1362 = vmatpush1.bf16.msra.mxu0 0
      %1363 = vmatprep.subr.bf16.mxu0 0
      %1364 = vmatpush1.bf16.msra.mxu0 0
      %1365 = vmatprep.subr.bf16.mxu0 0
      %1366 = vmatpush1.bf16.msra.mxu0 0
      %1367 = vmatprep.subr.bf16.mxu0 0
      %1368 = vmatpush1.bf16.msra.mxu0 0
      %1369 = vmatprep.subr.bf16.mxu0 0
      %1370 = vmatpush1.bf16.msra.mxu0 0
      %1371 = vmatprep.subr.bf16.mxu0 0
      %1372 = vmatpush1.bf16.msra.mxu0 0
      %1373 = vmatprep.subr.bf16.mxu0 0
      %1374 = vmatpush1.bf16.msra.mxu0 0
      %1375 = vmatprep.subr.bf16.mxu0 0
      %1376 = vmatpush1.bf16.msra.mxu0 0
      %1377 = vmatprep.subr.bf16.mxu0 0
      %1378 = vmatpush1.bf16.msra.mxu0 0
      %1379 = vmatprep.subr.bf16.mxu0 0
      %1380 = vmatpush1.bf16.msra.mxu0 0
      %1381 = vmatprep.subr.bf16.mxu0 0
      %1382 = vmatpush1.bf16.msra.mxu0 0
      %1383 = vmatprep.subr.bf16.mxu0 0
      %1384 = vmatpush1.bf16.msra.mxu0 0
      %1385 = vmatprep.subr.bf16.mxu0 0
      %1386 = vmatpush1.bf16.msra.mxu0 0
      %1387 = vmatprep.mubr.bf16.mxu0 0
      %1388 = vmatmul.mubr.bf16.gmra.mrb[0].mxu0 %v1046
      %v1389 = vpop.f32.mrb[0].mxu0
      %v1390 = vadd.f32 0.0, %v1389
      %v1391 = vpop.f32.mrb[0].mxu0
      %v1392 = vpop.f32.mrb[0].mxu0
      %v1393 = vadd.f32 0.0, %v1392
      %v1394 = vpop.f32.mrb[0].mxu0
      %1395 = vdwg.mxu0
      %v1396 = vadd.f32 %v1353, %v1390
      %v1397 = vadd.f32 %v1354, %v1393
      %1398 = vmatprep.subr.bf16.mxu0 0
      %1399 = vmatpush1.bf16.msra.mxu0 %v468
      %1400 = vmatprep.subr.bf16.mxu0 0
      %1401 = vmatpush1.bf16.msra.mxu0 0
      %1402 = vmatprep.subr.bf16.mxu0 0
      %1403 = vmatpush1.bf16.msra.mxu0 0
      %1404 = vmatprep.subr.bf16.mxu0 0
      %1405 = vmatpush1.bf16.msra.mxu0 0
      %1406 = vmatprep.subr.bf16.mxu0 0
      %1407 = vmatpush1.bf16.msra.mxu0 0
      %1408 = vmatprep.subr.bf16.mxu0 0
      %1409 = vmatpush1.bf16.msra.mxu0 0
      %1410 = vmatprep.subr.bf16.mxu0 0
      %1411 = vmatpush1.bf16.msra.mxu0 0
      %1412 = vmatprep.subr.bf16.mxu0 0
      %1413 = vmatpush1.bf16.msra.mxu0 0
      %1414 = vmatprep.subr.bf16.mxu0 0
      %1415 = vmatpush1.bf16.msra.mxu0 0
      %1416 = vmatprep.subr.bf16.mxu0 0
      %1417 = vmatpush1.bf16.msra.mxu0 0
      %1418 = vmatprep.subr.bf16.mxu0 0
      %1419 = vmatpush1.bf16.msra.mxu0 0
      %1420 = vmatprep.subr.bf16.mxu0 0
      %1421 = vmatpush1.bf16.msra.mxu0 0
      %1422 = vmatprep.subr.bf16.mxu0 0
      %1423 = vmatpush1.bf16.msra.mxu0 0
      %1424 = vmatprep.subr.bf16.mxu0 0
      %1425 = vmatpush1.bf16.msra.mxu0 0
      %1426 = vmatprep.subr.bf16.mxu0 0
      %1427 = vmatpush1.bf16.msra.mxu0 0
      %1428 = vmatprep.subr.bf16.mxu0 0
      %1429 = vmatpush1.bf16.msra.mxu0 0
      %1430 = vmatprep.mubr.bf16.mxu0 0
      %1431 = vmatmul.mubr.bf16.gmra.mrb[0].mxu0 %v1115
      %v1432 = vpop.f32.mrb[0].mxu0
      %v1433 = vadd.f32 0.0, %v1432
      %v1434 = vpop.f32.mrb[0].mxu0
      %v1435 = vpop.f32.mrb[0].mxu0
      %v1436 = vadd.f32 0.0, %v1435
      %v1437 = vpop.f32.mrb[0].mxu0
      %1438 = vdwg.mxu0
      %v1439 = vadd.f32 %v1396, %v1433
      %v1440 = vadd.f32 %v1397, %v1436
      %1441 = vmatprep.subr.bf16.mxu0 0
      %1442 = vmatpush1.bf16.msra.mxu0 %v524
      %1443 = vmatprep.subr.bf16.mxu0 0
      %1444 = vmatpush1.bf16.msra.mxu0 0
      %1445 = vmatprep.subr.bf16.mxu0 0
      %1446 = vmatpush1.bf16.msra.mxu0 0
      %1447 = vmatprep.subr.bf16.mxu0 0
      %1448 = vmatpush1.bf16.msra.mxu0 0
      %1449 = vmatprep.subr.bf16.mxu0 0
      %1450 = vmatpush1.bf16.msra.mxu0 0
      %1451 = vmatprep.subr.bf16.mxu0 0
      %1452 = vmatpush1.bf16.msra.mxu0 0
      %1453 = vmatprep.subr.bf16.mxu0 0
      %1454 = vmatpush1.bf16.msra.mxu0 0
      %1455 = vmatprep.subr.bf16.mxu0 0
      %1456 = vmatpush1.bf16.msra.mxu0 0
      %1457 = vmatprep.subr.bf16.mxu0 0
      %1458 = vmatpush1.bf16.msra.mxu0 0
      %1459 = vmatprep.subr.bf16.mxu0 0
      %1460 = vmatpush1.bf16.msra.mxu0 0
      %1461 = vmatprep.subr.bf16.mxu0 0
      %1462 = vmatpush1.bf16.msra.mxu0 0
      %1463 = vmatprep.subr.bf16.mxu0 0
      %1464 = vmatpush1.bf16.msra.mxu0 0
      %1465 = vmatprep.subr.bf16.mxu0 0
      %1466 = vmatpush1.bf16.msra.mxu0 0
      %1467 = vmatprep.subr.bf16.mxu0 0
      %1468 = vmatpush1.bf16.msra.mxu0 0
      %1469 = vmatprep.subr.bf16.mxu0 0
      %1470 = vmatpush1.bf16.msra.mxu0 0
      %1471 = vmatprep.subr.bf16.mxu0 0
      %1472 = vmatpush1.bf16.msra.mxu0 0
      %1473 = vmatprep.mubr.bf16.mxu0 0
      %1474 = vmatmul.mubr.bf16.gmra.mrb[0].mxu0 %v1168
      %v1475 = vpop.f32.mrb[0].mxu0
      %v1476 = vadd.f32 0.0, %v1475
      %v1477 = vpop.f32.mrb[0].mxu0
      %v1478 = vpop.f32.mrb[0].mxu0
      %v1479 = vadd.f32 0.0, %v1478
      %v1480 = vpop.f32.mrb[0].mxu0
      %1481 = vdwg.mxu0
      %v1482 = vadd.f32 %v1439, %v1476
      %v1483 = vadd.f32 %v1440, %v1479
      %s1484 = sadd.s32 %s180, 4
      %s1485 = smul.u32 %s1484, 3
      %s1486 = smul.addr %s1485, 4
      %s1487 = scalar_lea.vmem %s175, %s1486
      %v1488 = vld [vmem:[%s1487] sm:$0xf]
      %v1489 = vld [vmem:[%s1487 + $0x4] sm:$0xf]
      %v1492 = vunpack.c.l.b16 %v1488
      %v1493 = vunpack.c.l.b16 %v1489
      %v1494 = vpack.c.b16 %v1493, %v1492
      %v1496 = vsel %vm226, %v1494, 0
      %1498 = vmatprep.subr.bf16.mxu0 0
      %1499 = vmatpush1.bf16.msra.mxu0 %v584
      %1500 = vmatprep.subr.bf16.mxu0 0
      %1501 = vmatpush1.bf16.msra.mxu0 0
      %1502 = vmatprep.subr.bf16.mxu0 0
      %1503 = vmatpush1.bf16.msra.mxu0 0
      %1504 = vmatprep.subr.bf16.mxu0 0
      %1505 = vmatpush1.bf16.msra.mxu0 0
      %1506 = vmatprep.subr.bf16.mxu0 0
      %1507 = vmatpush1.bf16.msra.mxu0 0
      %1508 = vmatprep.subr.bf16.mxu0 0
      %1509 = vmatpush1.bf16.msra.mxu0 0
      %1510 = vmatprep.subr.bf16.mxu0 0
      %1511 = vmatpush1.bf16.msra.mxu0 0
      %1512 = vmatprep.subr.bf16.mxu0 0
      %1513 = vmatpush1.bf16.msra.mxu0 0
      %1514 = vmatprep.subr.bf16.mxu0 0
      %1515 = vmatpush1.bf16.msra.mxu0 0
      %1516 = vmatprep.subr.bf16.mxu0 0
      %1517 = vmatpush1.bf16.msra.mxu0 0
      %1518 = vmatprep.subr.bf16.mxu0 0
      %1519 = vmatpush1.bf16.msra.mxu0 0
      %1520 = vmatprep.subr.bf16.mxu0 0
      %1521 = vmatpush1.bf16.msra.mxu0 0
      %1522 = vmatprep.subr.bf16.mxu0 0
      %1523 = vmatpush1.bf16.msra.mxu0 0
      %1524 = vmatprep.subr.bf16.mxu0 0
      %1525 = vmatpush1.bf16.msra.mxu0 0
      %1526 = vmatprep.subr.bf16.mxu0 0
      %1527 = vmatpush1.bf16.msra.mxu0 0
      %1528 = vmatprep.subr.bf16.mxu0 0
      %1529 = vmatpush1.bf16.msra.mxu0 0
      %1530 = vmatprep.mubr.bf16.mxu0 0
      %1531 = vmatmul.mubr.bf16.gmra.mrb[0].mxu0 %v1496
      %v1532 = vpop.f32.mrb[0].mxu0
      %v1533 = vadd.f32 0.0, %v1532
      %v1534 = vpop.f32.mrb[0].mxu0
      %v1535 = vpop.f32.mrb[0].mxu0
      %v1536 = vadd.f32 0.0, %v1535
      %v1537 = vpop.f32.mrb[0].mxu0
      %1538 = vdwg.mxu0
      %v1539 = vadd.f32 %v1482, %v1533
      %v1540 = vadd.f32 %v1483, %v1536
      %v1541 = vld [vmem:[%s1487] sm:$0xf]
      %v1542 = vld [vmem:[%s1487 + $0x4] sm:$0xf]
      %v1543 = vld [vmem:[%s1487 + $0x8] sm:$0x1]
      %v1547 = vunpack.c.l.b16 %v1541
      %v1548 = vunpack.c.l.b16 %v1542
      %v1549 = vunpack.c.l.b16 %v1543
      %v1550 = vpack.c.b16 %v1548, %v1547
      %v1551 = vpack.c.b16 %v1549, %v1549
      %v1553 = vshrl.u32 %v1550, 16
      %v1555 = vshll.u32 %v1550, 16
      %v1557 = vrot.slane %v1555, 1
      %v1558 = vor.u32 %v1553, %v1557
      %v1560 = vshll.u32 %v1551, 16
      %v1562 = vrot.slane %v1560, 1
      %v1563 = vsel %vm213, %v1558, %v1562
      %v1565 = vsel %vm226, %v1563, 0
      %1567 = vmatprep.subr.bf16.mxu0 0
      %1568 = vmatpush1.bf16.msra.mxu0 %v656
      %1569 = vmatprep.subr.bf16.mxu0 0
      %1570 = vmatpush1.bf16.msra.mxu0 0
      %1571 = vmatprep.subr.bf16.mxu0 0
      %1572 = vmatpush1.bf16.msra.mxu0 0
      %1573 = vmatprep.subr.bf16.mxu0 0
      %1574 = vmatpush1.bf16.msra.mxu0 0
      %1575 = vmatprep.subr.bf16.mxu0 0
      %1576 = vmatpush1.bf16.msra.mxu0 0
      %1577 = vmatprep.subr.bf16.mxu0 0
      %1578 = vmatpush1.bf16.msra.mxu0 0
      %1579 = vmatprep.subr.bf16.mxu0 0
      %1580 = vmatpush1.bf16.msra.mxu0 0
      %1581 = vmatprep.subr.bf16.mxu0 0
      %1582 = vmatpush1.bf16.msra.mxu0 0
      %1583 = vmatprep.subr.bf16.mxu0 0
      %1584 = vmatpush1.bf16.msra.mxu0 0
      %1585 = vmatprep.subr.bf16.mxu0 0
      %1586 = vmatpush1.bf16.msra.mxu0 0
      %1587 = vmatprep.subr.bf16.mxu0 0
      %1588 = vmatpush1.bf16.msra.mxu0 0
      %1589 = vmatprep.subr.bf16.mxu0 0
      %1590 = vmatpush1.bf16.msra.mxu0 0
      %1591 = vmatprep.subr.bf16.mxu0 0
      %1592 = vmatpush1.bf16.msra.mxu0 0
      %1593 = vmatprep.subr.bf16.mxu0 0
      %1594 = vmatpush1.bf16.msra.mxu0 0
      %1595 = vmatprep.subr.bf16.mxu0 0
      %1596 = vmatpush1.bf16.msra.mxu0 0
      %1597 = vmatprep.subr.bf16.mxu0 0
      %1598 = vmatpush1.bf16.msra.mxu0 0
      %1599 = vmatprep.mubr.bf16.mxu0 0
      %1600 = vmatmul.mubr.bf16.gmra.mrb[0].mxu0 %v1565
      %v1601 = vpop.f32.mrb[0].mxu0
      %v1602 = vadd.f32 0.0, %v1601
      %v1603 = vpop.f32.mrb[0].mxu0
      %v1604 = vpop.f32.mrb[0].mxu0
      %v1605 = vadd.f32 0.0, %v1604
      %v1606 = vpop.f32.mrb[0].mxu0
      %1607 = vdwg.mxu0
      %v1608 = vadd.f32 %v1539, %v1602
      %v1609 = vadd.f32 %v1540, %v1605
      %v1610 = vld [vmem:[%s1487] sm:$0xe]
      %v1612 = vunpack.c.l.b16 %v1610
      %v1613 = vpack.c.b16 %v1548, %v1612
      %v1614 = vrot.slane %v1613, 1
      %v1615 = vrot.slane %v1551, 1
      %v1616 = vsel %vm328, %v1614, %v1615
      %v1618 = vsel %vm226, %v1616, 0
      %1620 = vmatprep.subr.bf16.mxu0 0
      %1621 = vmatpush1.bf16.msra.mxu0 %v712
      %1622 = vmatprep.subr.bf16.mxu0 0
      %1623 = vmatpush1.bf16.msra.mxu0 0
      %1624 = vmatprep.subr.bf16.mxu0 0
      %1625 = vmatpush1.bf16.msra.mxu0 0
      %1626 = vmatprep.subr.bf16.mxu0 0
      %1627 = vmatpush1.bf16.msra.mxu0 0
      %1628 = vmatprep.subr.bf16.mxu0 0
      %1629 = vmatpush1.bf16.msra.mxu0 0
      %1630 = vmatprep.subr.bf16.mxu0 0
      %1631 = vmatpush1.bf16.msra.mxu0 0
      %1632 = vmatprep.subr.bf16.mxu0 0
      %1633 = vmatpush1.bf16.msra.mxu0 0
      %1634 = vmatprep.subr.bf16.mxu0 0
      %1635 = vmatpush1.bf16.msra.mxu0 0
      %1636 = vmatprep.subr.bf16.mxu0 0
      %1637 = vmatpush1.bf16.msra.mxu0 0
      %1638 = vmatprep.subr.bf16.mxu0 0
      %1639 = vmatpush1.bf16.msra.mxu0 0
      %1640 = vmatprep.subr.bf16.mxu0 0
      %1641 = vmatpush1.bf16.msra.mxu0 0
      %1642 = vmatprep.subr.bf16.mxu0 0
      %1643 = vmatpush1.bf16.msra.mxu0 0
      %1644 = vmatprep.subr.bf16.mxu0 0
      %1645 = vmatpush1.bf16.msra.mxu0 0
      %1646 = vmatprep.subr.bf16.mxu0 0
      %1647 = vmatpush1.bf16.msra.mxu0 0
      %1648 = vmatprep.subr.bf16.mxu0 0
      %1649 = vmatpush1.bf16.msra.mxu0 0
      %1650 = vmatprep.subr.bf16.mxu0 0
      %1651 = vmatpush1.bf16.msra.mxu0 0
      %1652 = vmatprep.mubr.bf16.mxu0 0
      %1653 = vmatmul.mubr.bf16.gmra.mrb[0].mxu0 %v1618
      %v1654 = vpop.f32.mrb[0].mxu0
      %v1655 = vadd.f32 0.0, %v1654
      %v1656 = vpop.f32.mrb[0].mxu0
      %v1657 = vpop.f32.mrb[0].mxu0
      %v1658 = vadd.f32 0.0, %v1657
      %v1659 = vpop.f32.mrb[0].mxu0
      %1660 = vdwg.mxu0
      %v1661 = vadd.f32 %v1608, %v1655
      %v1662 = vadd.f32 %v1609, %v1658
      %v1663 = vadd.f32 %v1661, %v761
      %v1664 = vadd.f32 %v1662, %v761
      %v1665 = vmax.f32 %v1663, 0.0
      %v1666 = vmax.f32 %v1664, 0.0
      %v1667 = vadd.f32 %v1665, %v1666
      %v1668 = vrot.slane %v1667, 4
      %v1669 = vadd.f32 %v1667, %v1668
      %v1670 = vrot.slane %v1669, 2
      %v1671 = vadd.f32 %v1669, %v1670
      %v1672 = vrot.slane %v1671, 1
      %v1673 = vadd.f32 %v1671, %v1672
      %p1674 = scmp.lt.s32.totalorder %s569, 16
      %s1675 = scalar_select %p1674, 1, 0
      %s1676 = scvt.s32.f32 %s1675
      %v1677 = vstv %s1676
      %v1678 = vmul.f32 %v1677, %v1673
      %v1679 = vadd.f32 %v1229, %v1678
      %1680 = vmatprep.subr.bf16.mxu0 0
      %1681 = vmatpush1.bf16.msra.mxu0 %v235
      %1682 = vmatprep.subr.bf16.mxu0 0
      %1683 = vmatpush1.bf16.msra.mxu0 0
      %1684 = vmatprep.subr.bf16.mxu0 0
      %1685 = vmatpush1.bf16.msra.mxu0 0
      %1686 = vmatprep.subr.bf16.mxu0 0
      %1687 = vmatpush1.bf16.msra.mxu0 0
      %1688 = vmatprep.subr.bf16.mxu0 0
      %1689 = vmatpush1.bf16.msra.mxu0 0
      %1690 = vmatprep.subr.bf16.mxu0 0
      %1691 = vmatpush1.bf16.msra.mxu0 0
      %1692 = vmatprep.subr.bf16.mxu0 0
      %1693 = vmatpush1.bf16.msra.mxu0 0
      %1694 = vmatprep.subr.bf16.mxu0 0
      %1695 = vmatpush1.bf16.msra.mxu0 0
      %1696 = vmatprep.subr.bf16.mxu0 0
      %1697 = vmatpush1.bf16.msra.mxu0 0
      %1698 = vmatprep.subr.bf16.mxu0 0
      %1699 = vmatpush1.bf16.msra.mxu0 0
      %1700 = vmatprep.subr.bf16.mxu0 0
      %1701 = vmatpush1.bf16.msra.mxu0 0
      %1702 = vmatprep.subr.bf16.mxu0 0
      %1703 = vmatpush1.bf16.msra.mxu0 0
      %1704 = vmatprep.subr.bf16.mxu0 0
      %1705 = vmatpush1.bf16.msra.mxu0 0
      %1706 = vmatprep.subr.bf16.mxu0 0
      %1707 = vmatpush1.bf16.msra.mxu0 0
      %1708 = vmatprep.subr.bf16.mxu0 0
      %1709 = vmatpush1.bf16.msra.mxu0 0
      %1710 = vmatprep.subr.bf16.mxu0 0
      %1711 = vmatpush1.bf16.msra.mxu0 0
      %1712 = vmatprep.mubr.bf16.mxu0 0
      %1713 = vmatmul.mubr.bf16.gmra.mrb[0].mxu0 %v1115
      %v1714 = vpop.f32.mrb[0].mxu0
      %v1715 = vadd.f32 0.0, %v1714
      %v1716 = vpop.f32.mrb[0].mxu0
      %v1717 = vpop.f32.mrb[0].mxu0
      %v1718 = vadd.f32 0.0, %v1717
      %v1719 = vpop.f32.mrb[0].mxu0
      %1720 = vdwg.mxu0
      %1721 = vmatprep.subr.bf16.mxu0 0
      %1722 = vmatpush1.bf16.msra.mxu0 %v281
      %1723 = vmatprep.subr.bf16.mxu0 0
      %1724 = vmatpush1.bf16.msra.mxu0 0
      %1725 = vmatprep.subr.bf16.mxu0 0
      %1726 = vmatpush1.bf16.msra.mxu0 0
      %1727 = vmatprep.subr.bf16.mxu0 0
      %1728 = vmatpush1.bf16.msra.mxu0 0
      %1729 = vmatprep.subr.bf16.mxu0 0
      %1730 = vmatpush1.bf16.msra.mxu0 0
      %1731 = vmatprep.subr.bf16.mxu0 0
      %1732 = vmatpush1.bf16.msra.mxu0 0
      %1733 = vmatprep.subr.bf16.mxu0 0
      %1734 = vmatpush1.bf16.msra.mxu0 0
      %1735 = vmatprep.subr.bf16.mxu0 0
      %1736 = vmatpush1.bf16.msra.mxu0 0
      %1737 = vmatprep.subr.bf16.mxu0 0
      %1738 = vmatpush1.bf16.msra.mxu0 0
      %1739 = vmatprep.subr.bf16.mxu0 0
      %1740 = vmatpush1.bf16.msra.mxu0 0
      %1741 = vmatprep.subr.bf16.mxu0 0
      %1742 = vmatpush1.bf16.msra.mxu0 0
      %1743 = vmatprep.subr.bf16.mxu0 0
      %1744 = vmatpush1.bf16.msra.mxu0 0
      %1745 = vmatprep.subr.bf16.mxu0 0
      %1746 = vmatpush1.bf16.msra.mxu0 0
      %1747 = vmatprep.subr.bf16.mxu0 0
      %1748 = vmatpush1.bf16.msra.mxu0 0
      %1749 = vmatprep.subr.bf16.mxu0 0
      %1750 = vmatpush1.bf16.msra.mxu0 0
      %1751 = vmatprep.subr.bf16.mxu0 0
      %1752 = vmatpush1.bf16.msra.mxu0 0
      %1753 = vmatprep.mubr.bf16.mxu0 0
      %1754 = vmatmul.mubr.bf16.gmra.mrb[0].mxu0 %v1046
      %v1755 = vpop.f32.mrb[0].mxu0
      %v1756 = vadd.f32 %v1715, %v1755
      %v1757 = vpop.f32.mrb[0].mxu0
      %v1758 = vpop.f32.mrb[0].mxu0
      %v1759 = vadd.f32 %v1718, %v1758
      %v1760 = vpop.f32.mrb[0].mxu0
      %1761 = vdwg.mxu0
      %1762 = vmatprep.subr.bf16.mxu0 0
      %1763 = vmatpush1.bf16.msra.mxu0 %v336
      %1764 = vmatprep.subr.bf16.mxu0 0
      %1765 = vmatpush1.bf16.msra.mxu0 0
      %1766 = vmatprep.subr.bf16.mxu0 0
      %1767 = vmatpush1.bf16.msra.mxu0 0
      %1768 = vmatprep.subr.bf16.mxu0 0
      %1769 = vmatpush1.bf16.msra.mxu0 0
      %1770 = vmatprep.subr.bf16.mxu0 0
      %1771 = vmatpush1.bf16.msra.mxu0 0
      %1772 = vmatprep.subr.bf16.mxu0 0
      %1773 = vmatpush1.bf16.msra.mxu0 0
      %1774 = vmatprep.subr.bf16.mxu0 0
      %1775 = vmatpush1.bf16.msra.mxu0 0
      %1776 = vmatprep.subr.bf16.mxu0 0
      %1777 = vmatpush1.bf16.msra.mxu0 0
      %1778 = vmatprep.subr.bf16.mxu0 0
      %1779 = vmatpush1.bf16.msra.mxu0 0
      %1780 = vmatprep.subr.bf16.mxu0 0
      %1781 = vmatpush1.bf16.msra.mxu0 0
      %1782 = vmatprep.subr.bf16.mxu0 0
      %1783 = vmatpush1.bf16.msra.mxu0 0
      %1784 = vmatprep.subr.bf16.mxu0 0
      %1785 = vmatpush1.bf16.msra.mxu0 0
      %1786 = vmatprep.subr.bf16.mxu0 0
      %1787 = vmatpush1.bf16.msra.mxu0 0
      %1788 = vmatprep.subr.bf16.mxu0 0
      %1789 = vmatpush1.bf16.msra.mxu0 0
      %1790 = vmatprep.subr.bf16.mxu0 0
      %1791 = vmatpush1.bf16.msra.mxu0 0
      %1792 = vmatprep.subr.bf16.mxu0 0
      %1793 = vmatpush1.bf16.msra.mxu0 0
      %1794 = vmatprep.mubr.bf16.mxu0 0
      %1795 = vmatmul.mubr.bf16.gmra.mrb[0].mxu0 %v1168
      %v1796 = vpop.f32.mrb[0].mxu0
      %v1797 = vadd.f32 0.0, %v1796
      %v1798 = vpop.f32.mrb[0].mxu0
      %v1799 = vpop.f32.mrb[0].mxu0
      %v1800 = vadd.f32 0.0, %v1799
      %v1801 = vpop.f32.mrb[0].mxu0
      %1802 = vdwg.mxu0
      %v1803 = vadd.f32 %v1756, %v1797
      %v1804 = vadd.f32 %v1759, %v1800
      %1805 = vmatprep.subr.bf16.mxu0 0
      %1806 = vmatpush1.bf16.msra.mxu0 %v396
      %1807 = vmatprep.subr.bf16.mxu0 0
      %1808 = vmatpush1.bf16.msra.mxu0 0
      %1809 = vmatprep.subr.bf16.mxu0 0
      %1810 = vmatpush1.bf16.msra.mxu0 0
      %1811 = vmatprep.subr.bf16.mxu0 0
      %1812 = vmatpush1.bf16.msra.mxu0 0
      %1813 = vmatprep.subr.bf16.mxu0 0
      %1814 = vmatpush1.bf16.msra.mxu0 0
      %1815 = vmatprep.subr.bf16.mxu0 0
      %1816 = vmatpush1.bf16.msra.mxu0 0
      %1817 = vmatprep.subr.bf16.mxu0 0
      %1818 = vmatpush1.bf16.msra.mxu0 0
      %1819 = vmatprep.subr.bf16.mxu0 0
      %1820 = vmatpush1.bf16.msra.mxu0 0
      %1821 = vmatprep.subr.bf16.mxu0 0
      %1822 = vmatpush1.bf16.msra.mxu0 0
      %1823 = vmatprep.subr.bf16.mxu0 0
      %1824 = vmatpush1.bf16.msra.mxu0 0
      %1825 = vmatprep.subr.bf16.mxu0 0
      %1826 = vmatpush1.bf16.msra.mxu0 0
      %1827 = vmatprep.subr.bf16.mxu0 0
      %1828 = vmatpush1.bf16.msra.mxu0 0
      %1829 = vmatprep.subr.bf16.mxu0 0
      %1830 = vmatpush1.bf16.msra.mxu0 0
      %1831 = vmatprep.subr.bf16.mxu0 0
      %1832 = vmatpush1.bf16.msra.mxu0 0
      %1833 = vmatprep.subr.bf16.mxu0 0
      %1834 = vmatpush1.bf16.msra.mxu0 0
      %1835 = vmatprep.subr.bf16.mxu0 0
      %1836 = vmatpush1.bf16.msra.mxu0 0
      %1837 = vmatprep.mubr.bf16.mxu0 0
      %1838 = vmatmul.mubr.bf16.gmra.mrb[0].mxu0 %v1496
      %v1839 = vpop.f32.mrb[0].mxu0
      %v1840 = vadd.f32 0.0, %v1839
      %v1841 = vpop.f32.mrb[0].mxu0
      %v1842 = vpop.f32.mrb[0].mxu0
      %v1843 = vadd.f32 0.0, %v1842
      %v1844 = vpop.f32.mrb[0].mxu0
      %1845 = vdwg.mxu0
      %v1846 = vadd.f32 %v1803, %v1840
      %v1847 = vadd.f32 %v1804, %v1843
      %1848 = vmatprep.subr.bf16.mxu0 0
      %1849 = vmatpush1.bf16.msra.mxu0 %v468
      %1850 = vmatprep.subr.bf16.mxu0 0
      %1851 = vmatpush1.bf16.msra.mxu0 0
      %1852 = vmatprep.subr.bf16.mxu0 0
      %1853 = vmatpush1.bf16.msra.mxu0 0
      %1854 = vmatprep.subr.bf16.mxu0 0
      %1855 = vmatpush1.bf16.msra.mxu0 0
      %1856 = vmatprep.subr.bf16.mxu0 0
      %1857 = vmatpush1.bf16.msra.mxu0 0
      %1858 = vmatprep.subr.bf16.mxu0 0
      %1859 = vmatpush1.bf16.msra.mxu0 0
      %1860 = vmatprep.subr.bf16.mxu0 0
      %1861 = vmatpush1.bf16.msra.mxu0 0
      %1862 = vmatprep.subr.bf16.mxu0 0
      %1863 = vmatpush1.bf16.msra.mxu0 0
      %1864 = vmatprep.subr.bf16.mxu0 0
      %1865 = vmatpush1.bf16.msra.mxu0 0
      %1866 = vmatprep.subr.bf16.mxu0 0
      %1867 = vmatpush1.bf16.msra.mxu0 0
      %1868 = vmatprep.subr.bf16.mxu0 0
      %1869 = vmatpush1.bf16.msra.mxu0 0
      %1870 = vmatprep.subr.bf16.mxu0 0
      %1871 = vmatpush1.bf16.msra.mxu0 0
      %1872 = vmatprep.subr.bf16.mxu0 0
      %1873 = vmatpush1.bf16.msra.mxu0 0
      %1874 = vmatprep.subr.bf16.mxu0 0
      %1875 = vmatpush1.bf16.msra.mxu0 0
      %1876 = vmatprep.subr.bf16.mxu0 0
      %1877 = vmatpush1.bf16.msra.mxu0 0
      %1878 = vmatprep.subr.bf16.mxu0 0
      %1879 = vmatpush1.bf16.msra.mxu0 0
      %1880 = vmatprep.mubr.bf16.mxu0 0
      %1881 = vmatmul.mubr.bf16.gmra.mrb[0].mxu0 %v1565
      %v1882 = vpop.f32.mrb[0].mxu0
      %v1883 = vadd.f32 0.0, %v1882
      %v1884 = vpop.f32.mrb[0].mxu0
      %v1885 = vpop.f32.mrb[0].mxu0
      %v1886 = vadd.f32 0.0, %v1885
      %v1887 = vpop.f32.mrb[0].mxu0
      %1888 = vdwg.mxu0
      %v1889 = vadd.f32 %v1846, %v1883
      %v1890 = vadd.f32 %v1847, %v1886
      %1891 = vmatprep.subr.bf16.mxu0 0
      %1892 = vmatpush1.bf16.msra.mxu0 %v524
      %1893 = vmatprep.subr.bf16.mxu0 0
      %1894 = vmatpush1.bf16.msra.mxu0 0
      %1895 = vmatprep.subr.bf16.mxu0 0
      %1896 = vmatpush1.bf16.msra.mxu0 0
      %1897 = vmatprep.subr.bf16.mxu0 0
      %1898 = vmatpush1.bf16.msra.mxu0 0
      %1899 = vmatprep.subr.bf16.mxu0 0
      %1900 = vmatpush1.bf16.msra.mxu0 0
      %1901 = vmatprep.subr.bf16.mxu0 0
      %1902 = vmatpush1.bf16.msra.mxu0 0
      %1903 = vmatprep.subr.bf16.mxu0 0
      %1904 = vmatpush1.bf16.msra.mxu0 0
      %1905 = vmatprep.subr.bf16.mxu0 0
      %1906 = vmatpush1.bf16.msra.mxu0 0
      %1907 = vmatprep.subr.bf16.mxu0 0
      %1908 = vmatpush1.bf16.msra.mxu0 0
      %1909 = vmatprep.subr.bf16.mxu0 0
      %1910 = vmatpush1.bf16.msra.mxu0 0
      %1911 = vmatprep.subr.bf16.mxu0 0
      %1912 = vmatpush1.bf16.msra.mxu0 0
      %1913 = vmatprep.subr.bf16.mxu0 0
      %1914 = vmatpush1.bf16.msra.mxu0 0
      %1915 = vmatprep.subr.bf16.mxu0 0
      %1916 = vmatpush1.bf16.msra.mxu0 0
      %1917 = vmatprep.subr.bf16.mxu0 0
      %1918 = vmatpush1.bf16.msra.mxu0 0
      %1919 = vmatprep.subr.bf16.mxu0 0
      %1920 = vmatpush1.bf16.msra.mxu0 0
      %1921 = vmatprep.subr.bf16.mxu0 0
      %1922 = vmatpush1.bf16.msra.mxu0 0
      %1923 = vmatprep.mubr.bf16.mxu0 0
      %1924 = vmatmul.mubr.bf16.gmra.mrb[0].mxu0 %v1618
      %v1925 = vpop.f32.mrb[0].mxu0
      %v1926 = vadd.f32 0.0, %v1925
      %v1927 = vpop.f32.mrb[0].mxu0
      %v1928 = vpop.f32.mrb[0].mxu0
      %v1929 = vadd.f32 0.0, %v1928
      %v1930 = vpop.f32.mrb[0].mxu0
      %1931 = vdwg.mxu0
      %v1932 = vadd.f32 %v1889, %v1926
      %v1933 = vadd.f32 %v1890, %v1929
      %s1934 = sadd.s32 %s180, 5
      %s1935 = smul.u32 %s1934, 3
      %s1936 = smul.addr %s1935, 4
      %s1937 = scalar_lea.vmem %s175, %s1936
      %v1938 = vld [vmem:[%s1937] sm:$0xf]
      %v1939 = vld [vmem:[%s1937 + $0x4] sm:$0xf]
      %v1942 = vunpack.c.l.b16 %v1938
      %v1943 = vunpack.c.l.b16 %v1939
      %v1944 = vpack.c.b16 %v1943, %v1942
      %v1946 = vsel %vm226, %v1944, 0
      %1948 = vmatprep.subr.bf16.mxu0 0
      %1949 = vmatpush1.bf16.msra.mxu0 %v584
      %1950 = vmatprep.subr.bf16.mxu0 0
      %1951 = vmatpush1.bf16.msra.mxu0 0
      %1952 = vmatprep.subr.bf16.mxu0 0
      %1953 = vmatpush1.bf16.msra.mxu0 0
      %1954 = vmatprep.subr.bf16.mxu0 0
      %1955 = vmatpush1.bf16.msra.mxu0 0
      %1956 = vmatprep.subr.bf16.mxu0 0
      %1957 = vmatpush1.bf16.msra.mxu0 0
      %1958 = vmatprep.subr.bf16.mxu0 0
      %1959 = vmatpush1.bf16.msra.mxu0 0
      %1960 = vmatprep.subr.bf16.mxu0 0
      %1961 = vmatpush1.bf16.msra.mxu0 0
      %1962 = vmatprep.subr.bf16.mxu0 0
      %1963 = vmatpush1.bf16.msra.mxu0 0
      %1964 = vmatprep.subr.bf16.mxu0 0
      %1965 = vmatpush1.bf16.msra.mxu0 0
      %1966 = vmatprep.subr.bf16.mxu0 0
      %1967 = vmatpush1.bf16.msra.mxu0 0
      %1968 = vmatprep.subr.bf16.mxu0 0
      %1969 = vmatpush1.bf16.msra.mxu0 0
      %1970 = vmatprep.subr.bf16.mxu0 0
      %1971 = vmatpush1.bf16.msra.mxu0 0
      %1972 = vmatprep.subr.bf16.mxu0 0
      %1973 = vmatpush1.bf16.msra.mxu0 0
      %1974 = vmatprep.subr.bf16.mxu0 0
      %1975 = vmatpush1.bf16.msra.mxu0 0
      %1976 = vmatprep.subr.bf16.mxu0 0
      %1977 = vmatpush1.bf16.msra.mxu0 0
      %1978 = vmatprep.subr.bf16.mxu0 0
      %1979 = vmatpush1.bf16.msra.mxu0 0
      %1980 = vmatprep.mubr.bf16.mxu0 0
      %1981 = vmatmul.mubr.bf16.gmra.mrb[0].mxu0 %v1946
      %v1982 = vpop.f32.mrb[0].mxu0
      %v1983 = vadd.f32 0.0, %v1982
      %v1984 = vpop.f32.mrb[0].mxu0
      %v1985 = vpop.f32.mrb[0].mxu0
      %v1986 = vadd.f32 0.0, %v1985
      %v1987 = vpop.f32.mrb[0].mxu0
      %1988 = vdwg.mxu0
      %v1989 = vadd.f32 %v1932, %v1983
      %v1990 = vadd.f32 %v1933, %v1986
      %v1991 = vld [vmem:[%s1937] sm:$0xf]
      %v1992 = vld [vmem:[%s1937 + $0x4] sm:$0xf]
      %v1993 = vld [vmem:[%s1937 + $0x8] sm:$0x1]
      %v1997 = vunpack.c.l.b16 %v1991
      %v1998 = vunpack.c.l.b16 %v1992
      %v1999 = vunpack.c.l.b16 %v1993
      %v2000 = vpack.c.b16 %v1998, %v1997
      %v2001 = vpack.c.b16 %v1999, %v1999
      %v2003 = vshrl.u32 %v2000, 16
      %v2005 = vshll.u32 %v2000, 16
      %v2007 = vrot.slane %v2005, 1
      %v2008 = vor.u32 %v2003, %v2007
      %v2010 = vshll.u32 %v2001, 16
      %v2012 = vrot.slane %v2010, 1
      %v2013 = vsel %vm213, %v2008, %v2012
      %v2015 = vsel %vm226, %v2013, 0
      %2017 = vmatprep.subr.bf16.mxu0 0
      %2018 = vmatpush1.bf16.msra.mxu0 %v656
      %2019 = vmatprep.subr.bf16.mxu0 0
      %2020 = vmatpush1.bf16.msra.mxu0 0
      %2021 = vmatprep.subr.bf16.mxu0 0
      %2022 = vmatpush1.bf16.msra.mxu0 0
      %2023 = vmatprep.subr.bf16.mxu0 0
      %2024 = vmatpush1.bf16.msra.mxu0 0
      %2025 = vmatprep.subr.bf16.mxu0 0
      %2026 = vmatpush1.bf16.msra.mxu0 0
      %2027 = vmatprep.subr.bf16.mxu0 0
      %2028 = vmatpush1.bf16.msra.mxu0 0
      %2029 = vmatprep.subr.bf16.mxu0 0
      %2030 = vmatpush1.bf16.msra.mxu0 0
      %2031 = vmatprep.subr.bf16.mxu0 0
      %2032 = vmatpush1.bf16.msra.mxu0 0
      %2033 = vmatprep.subr.bf16.mxu0 0
      %2034 = vmatpush1.bf16.msra.mxu0 0
      %2035 = vmatprep.subr.bf16.mxu0 0
      %2036 = vmatpush1.bf16.msra.mxu0 0
      %2037 = vmatprep.subr.bf16.mxu0 0
      %2038 = vmatpush1.bf16.msra.mxu0 0
      %2039 = vmatprep.subr.bf16.mxu0 0
      %2040 = vmatpush1.bf16.msra.mxu0 0
      %2041 = vmatprep.subr.bf16.mxu0 0
      %2042 = vmatpush1.bf16.msra.mxu0 0
      %2043 = vmatprep.subr.bf16.mxu0 0
      %2044 = vmatpush1.bf16.msra.mxu0 0
      %2045 = vmatprep.subr.bf16.mxu0 0
      %2046 = vmatpush1.bf16.msra.mxu0 0
      %2047 = vmatprep.subr.bf16.mxu0 0
      %2048 = vmatpush1.bf16.msra.mxu0 0
      %2049 = vmatprep.mubr.bf16.mxu0 0
      %2050 = vmatmul.mubr.bf16.gmra.mrb[0].mxu0 %v2015
      %v2051 = vpop.f32.mrb[0].mxu0
      %v2052 = vadd.f32 0.0, %v2051
      %v2053 = vpop.f32.mrb[0].mxu0
      %v2054 = vpop.f32.mrb[0].mxu0
      %v2055 = vadd.f32 0.0, %v2054
      %v2056 = vpop.f32.mrb[0].mxu0
      %2057 = vdwg.mxu0
      %v2058 = vadd.f32 %v1989, %v2052
      %v2059 = vadd.f32 %v1990, %v2055
      %v2060 = vld [vmem:[%s1937] sm:$0xe]
      %v2062 = vunpack.c.l.b16 %v2060
      %v2063 = vpack.c.b16 %v1998, %v2062
      %v2064 = vrot.slane %v2063, 1
      %v2065 = vrot.slane %v2001, 1
      %v2066 = vsel %vm328, %v2064, %v2065
      %v2068 = vsel %vm226, %v2066, 0
      %2070 = vmatprep.subr.bf16.mxu0 0
      %2071 = vmatpush1.bf16.msra.mxu0 %v712
      %2072 = vmatprep.subr.bf16.mxu0 0
      %2073 = vmatpush1.bf16.msra.mxu0 0
      %2074 = vmatprep.subr.bf16.mxu0 0
      %2075 = vmatpush1.bf16.msra.mxu0 0
      %2076 = vmatprep.subr.bf16.mxu0 0
      %2077 = vmatpush1.bf16.msra.mxu0 0
      %2078 = vmatprep.subr.bf16.mxu0 0
      %2079 = vmatpush1.bf16.msra.mxu0 0
      %2080 = vmatprep.subr.bf16.mxu0 0
      %2081 = vmatpush1.bf16.msra.mxu0 0
      %2082 = vmatprep.subr.bf16.mxu0 0
      %2083 = vmatpush1.bf16.msra.mxu0 0
      %2084 = vmatprep.subr.bf16.mxu0 0
      %2085 = vmatpush1.bf16.msra.mxu0 0
      %2086 = vmatprep.subr.bf16.mxu0 0
      %2087 = vmatpush1.bf16.msra.mxu0 0
      %2088 = vmatprep.subr.bf16.mxu0 0
      %2089 = vmatpush1.bf16.msra.mxu0 0
      %2090 = vmatprep.subr.bf16.mxu0 0
      %2091 = vmatpush1.bf16.msra.mxu0 0
      %2092 = vmatprep.subr.bf16.mxu0 0
      %2093 = vmatpush1.bf16.msra.mxu0 0
      %2094 = vmatprep.subr.bf16.mxu0 0
      %2095 = vmatpush1.bf16.msra.mxu0 0
      %2096 = vmatprep.subr.bf16.mxu0 0
      %2097 = vmatpush1.bf16.msra.mxu0 0
      %2098 = vmatprep.subr.bf16.mxu0 0
      %2099 = vmatpush1.bf16.msra.mxu0 0
      %2100 = vmatprep.subr.bf16.mxu0 0
      %2101 = vmatpush1.bf16.msra.mxu0 0
      %2102 = vmatprep.mubr.bf16.mxu0 0
      %2103 = vmatmul.mubr.bf16.gmra.mrb[0].mxu0 %v2068
      %v2104 = vpop.f32.mrb[0].mxu0
      %v2105 = vadd.f32 0.0, %v2104
      %v2106 = vpop.f32.mrb[0].mxu0
      %v2107 = vpop.f32.mrb[0].mxu0
      %v2108 = vadd.f32 0.0, %v2107
      %v2109 = vpop.f32.mrb[0].mxu0
      %2110 = vdwg.mxu0
      %v2111 = vadd.f32 %v2058, %v2105
      %v2112 = vadd.f32 %v2059, %v2108
      %v2113 = vadd.f32 %v2111, %v761
      %v2114 = vadd.f32 %v2112, %v761
      %v2115 = vmax.f32 %v2113, 0.0
      %v2116 = vmax.f32 %v2114, 0.0
      %v2117 = vadd.f32 %v2115, %v2116
      %v2118 = vrot.slane %v2117, 4
      %v2119 = vadd.f32 %v2117, %v2118
      %v2120 = vrot.slane %v2119, 2
      %v2121 = vadd.f32 %v2119, %v2120
      %v2122 = vrot.slane %v2121, 1
      %v2123 = vadd.f32 %v2121, %v2122
      %p2124 = scmp.lt.s32.totalorder %s1034, 16
      %s2125 = scalar_select %p2124, 1, 0
      %s2126 = scvt.s32.f32 %s2125
      %v2127 = vstv %s2126
      %v2128 = vmul.f32 %v2127, %v2123
      %v2129 = vadd.f32 %v1679, %v2128
      %2130 = vmatprep.subr.bf16.mxu0 0
      %2131 = vmatpush1.bf16.msra.mxu0 %v235
      %2132 = vmatprep.subr.bf16.mxu0 0
      %2133 = vmatpush1.bf16.msra.mxu0 0
      %2134 = vmatprep.subr.bf16.mxu0 0
      %2135 = vmatpush1.bf16.msra.mxu0 0
      %2136 = vmatprep.subr.bf16.mxu0 0
      %2137 = vmatpush1.bf16.msra.mxu0 0
      %2138 = vmatprep.subr.bf16.mxu0 0
      %2139 = vmatpush1.bf16.msra.mxu0 0
      %2140 = vmatprep.subr.bf16.mxu0 0
      %2141 = vmatpush1.bf16.msra.mxu0 0
      %2142 = vmatprep.subr.bf16.mxu0 0
      %2143 = vmatpush1.bf16.msra.mxu0 0
      %2144 = vmatprep.subr.bf16.mxu0 0
      %2145 = vmatpush1.bf16.msra.mxu0 0
      %2146 = vmatprep.subr.bf16.mxu0 0
      %2147 = vmatpush1.bf16.msra.mxu0 0
      %2148 = vmatprep.subr.bf16.mxu0 0
      %2149 = vmatpush1.bf16.msra.mxu0 0
      %2150 = vmatprep.subr.bf16.mxu0 0
      %2151 = vmatpush1.bf16.msra.mxu0 0
      %2152 = vmatprep.subr.bf16.mxu0 0
      %2153 = vmatpush1.bf16.msra.mxu0 0
      %2154 = vmatprep.subr.bf16.mxu0 0
      %2155 = vmatpush1.bf16.msra.mxu0 0
      %2156 = vmatprep.subr.bf16.mxu0 0
      %2157 = vmatpush1.bf16.msra.mxu0 0
      %2158 = vmatprep.subr.bf16.mxu0 0
      %2159 = vmatpush1.bf16.msra.mxu0 0
      %2160 = vmatprep.subr.bf16.mxu0 0
      %2161 = vmatpush1.bf16.msra.mxu0 0
      %2162 = vmatprep.mubr.bf16.mxu0 0
      %2163 = vmatmul.mubr.bf16.gmra.mrb[0].mxu0 %v1565
      %v2164 = vpop.f32.mrb[0].mxu0
      %v2165 = vadd.f32 0.0, %v2164
      %v2166 = vpop.f32.mrb[0].mxu0
      %v2167 = vpop.f32.mrb[0].mxu0
      %v2168 = vadd.f32 0.0, %v2167
      %v2169 = vpop.f32.mrb[0].mxu0
      %2170 = vdwg.mxu0
      %2171 = vmatprep.subr.bf16.mxu0 0
      %2172 = vmatpush1.bf16.msra.mxu0 %v281
      %2173 = vmatprep.subr.bf16.mxu0 0
      %2174 = vmatpush1.bf16.msra.mxu0 0
      %2175 = vmatprep.subr.bf16.mxu0 0
      %2176 = vmatpush1.bf16.msra.mxu0 0
      %2177 = vmatprep.subr.bf16.mxu0 0
      %2178 = vmatpush1.bf16.msra.mxu0 0
      %2179 = vmatprep.subr.bf16.mxu0 0
      %2180 = vmatpush1.bf16.msra.mxu0 0
      %2181 = vmatprep.subr.bf16.mxu0 0
      %2182 = vmatpush1.bf16.msra.mxu0 0
      %2183 = vmatprep.subr.bf16.mxu0 0
      %2184 = vmatpush1.bf16.msra.mxu0 0
      %2185 = vmatprep.subr.bf16.mxu0 0
      %2186 = vmatpush1.bf16.msra.mxu0 0
      %2187 = vmatprep.subr.bf16.mxu0 0
      %2188 = vmatpush1.bf16.msra.mxu0 0
      %2189 = vmatprep.subr.bf16.mxu0 0
      %2190 = vmatpush1.bf16.msra.mxu0 0
      %2191 = vmatprep.subr.bf16.mxu0 0
      %2192 = vmatpush1.bf16.msra.mxu0 0
      %2193 = vmatprep.subr.bf16.mxu0 0
      %2194 = vmatpush1.bf16.msra.mxu0 0
      %2195 = vmatprep.subr.bf16.mxu0 0
      %2196 = vmatpush1.bf16.msra.mxu0 0
      %2197 = vmatprep.subr.bf16.mxu0 0
      %2198 = vmatpush1.bf16.msra.mxu0 0
      %2199 = vmatprep.subr.bf16.mxu0 0
      %2200 = vmatpush1.bf16.msra.mxu0 0
      %2201 = vmatprep.subr.bf16.mxu0 0
      %2202 = vmatpush1.bf16.msra.mxu0 0
      %2203 = vmatprep.mubr.bf16.mxu0 0
      %2204 = vmatmul.mubr.bf16.gmra.mrb[0].mxu0 %v1496
      %v2205 = vpop.f32.mrb[0].mxu0
      %v2206 = vadd.f32 %v2165, %v2205
      %v2207 = vpop.f32.mrb[0].mxu0
      %v2208 = vpop.f32.mrb[0].mxu0
      %v2209 = vadd.f32 %v2168, %v2208
      %v2210 = vpop.f32.mrb[0].mxu0
      %2211 = vdwg.mxu0
      %2212 = vmatprep.subr.bf16.mxu0 0
      %2213 = vmatpush1.bf16.msra.mxu0 %v336
      %2214 = vmatprep.subr.bf16.mxu0 0
      %2215 = vmatpush1.bf16.msra.mxu0 0
      %2216 = vmatprep.subr.bf16.mxu0 0
      %2217 = vmatpush1.bf16.msra.mxu0 0
      %2218 = vmatprep.subr.bf16.mxu0 0
      %2219 = vmatpush1.bf16.msra.mxu0 0
      %2220 = vmatprep.subr.bf16.mxu0 0
      %2221 = vmatpush1.bf16.msra.mxu0 0
      %2222 = vmatprep.subr.bf16.mxu0 0
      %2223 = vmatpush1.bf16.msra.mxu0 0
      %2224 = vmatprep.subr.bf16.mxu0 0
      %2225 = vmatpush1.bf16.msra.mxu0 0
      %2226 = vmatprep.subr.bf16.mxu0 0
      %2227 = vmatpush1.bf16.msra.mxu0 0
      %2228 = vmatprep.subr.bf16.mxu0 0
      %2229 = vmatpush1.bf16.msra.mxu0 0
      %2230 = vmatprep.subr.bf16.mxu0 0
      %2231 = vmatpush1.bf16.msra.mxu0 0
      %2232 = vmatprep.subr.bf16.mxu0 0
      %2233 = vmatpush1.bf16.msra.mxu0 0
      %2234 = vmatprep.subr.bf16.mxu0 0
      %2235 = vmatpush1.bf16.msra.mxu0 0
      %2236 = vmatprep.subr.bf16.mxu0 0
      %2237 = vmatpush1.bf16.msra.mxu0 0
      %2238 = vmatprep.subr.bf16.mxu0 0
      %2239 = vmatpush1.bf16.msra.mxu0 0
      %2240 = vmatprep.subr.bf16.mxu0 0
      %2241 = vmatpush1.bf16.msra.mxu0 0
      %2242 = vmatprep.subr.bf16.mxu0 0
      %2243 = vmatpush1.bf16.msra.mxu0 0
      %2244 = vmatprep.mubr.bf16.mxu0 0
      %2245 = vmatmul.mubr.bf16.gmra.mrb[0].mxu0 %v1618
      %v2246 = vpop.f32.mrb[0].mxu0
      %v2247 = vadd.f32 0.0, %v2246
      %v2248 = vpop.f32.mrb[0].mxu0
      %v2249 = vpop.f32.mrb[0].mxu0
      %v2250 = vadd.f32 0.0, %v2249
      %v2251 = vpop.f32.mrb[0].mxu0
      %2252 = vdwg.mxu0
      %v2253 = vadd.f32 %v2206, %v2247
      %v2254 = vadd.f32 %v2209, %v2250
      %2255 = vmatprep.subr.bf16.mxu0 0
      %2256 = vmatpush1.bf16.msra.mxu0 %v396
      %2257 = vmatprep.subr.bf16.mxu0 0
      %2258 = vmatpush1.bf16.msra.mxu0 0
      %2259 = vmatprep.subr.bf16.mxu0 0
      %2260 = vmatpush1.bf16.msra.mxu0 0
      %2261 = vmatprep.subr.bf16.mxu0 0
      %2262 = vmatpush1.bf16.msra.mxu0 0
      %2263 = vmatprep.subr.bf16.mxu0 0
      %2264 = vmatpush1.bf16.msra.mxu0 0
      %2265 = vmatprep.subr.bf16.mxu0 0
      %2266 = vmatpush1.bf16.msra.mxu0 0
      %2267 = vmatprep.subr.bf16.mxu0 0
      %2268 = vmatpush1.bf16.msra.mxu0 0
      %2269 = vmatprep.subr.bf16.mxu0 0
      %2270 = vmatpush1.bf16.msra.mxu0 0
      %2271 = vmatprep.subr.bf16.mxu0 0
      %2272 = vmatpush1.bf16.msra.mxu0 0
      %2273 = vmatprep.subr.bf16.mxu0 0
      %2274 = vmatpush1.bf16.msra.mxu0 0
      %2275 = vmatprep.subr.bf16.mxu0 0
      %2276 = vmatpush1.bf16.msra.mxu0 0
      %2277 = vmatprep.subr.bf16.mxu0 0
      %2278 = vmatpush1.bf16.msra.mxu0 0
      %2279 = vmatprep.subr.bf16.mxu0 0
      %2280 = vmatpush1.bf16.msra.mxu0 0
      %2281 = vmatprep.subr.bf16.mxu0 0
      %2282 = vmatpush1.bf16.msra.mxu0 0
      %2283 = vmatprep.subr.bf16.mxu0 0
      %2284 = vmatpush1.bf16.msra.mxu0 0
      %2285 = vmatprep.subr.bf16.mxu0 0
      %2286 = vmatpush1.bf16.msra.mxu0 0
      %2287 = vmatprep.mubr.bf16.mxu0 0
      %2288 = vmatmul.mubr.bf16.gmra.mrb[0].mxu0 %v1946
      %v2289 = vpop.f32.mrb[0].mxu0
      %v2290 = vadd.f32 0.0, %v2289
      %v2291 = vpop.f32.mrb[0].mxu0
      %v2292 = vpop.f32.mrb[0].mxu0
      %v2293 = vadd.f32 0.0, %v2292
      %v2294 = vpop.f32.mrb[0].mxu0
      %2295 = vdwg.mxu0
      %v2296 = vadd.f32 %v2253, %v2290
      %v2297 = vadd.f32 %v2254, %v2293
      %2298 = vmatprep.subr.bf16.mxu0 0
      %2299 = vmatpush1.bf16.msra.mxu0 %v468
      %2300 = vmatprep.subr.bf16.mxu0 0
      %2301 = vmatpush1.bf16.msra.mxu0 0
      %2302 = vmatprep.subr.bf16.mxu0 0
      %2303 = vmatpush1.bf16.msra.mxu0 0
      %2304 = vmatprep.subr.bf16.mxu0 0
      %2305 = vmatpush1.bf16.msra.mxu0 0
      %2306 = vmatprep.subr.bf16.mxu0 0
      %2307 = vmatpush1.bf16.msra.mxu0 0
      %2308 = vmatprep.subr.bf16.mxu0 0
      %2309 = vmatpush1.bf16.msra.mxu0 0
      %2310 = vmatprep.subr.bf16.mxu0 0
      %2311 = vmatpush1.bf16.msra.mxu0 0
      %2312 = vmatprep.subr.bf16.mxu0 0
      %2313 = vmatpush1.bf16.msra.mxu0 0
      %2314 = vmatprep.subr.bf16.mxu0 0
      %2315 = vmatpush1.bf16.msra.mxu0 0
      %2316 = vmatprep.subr.bf16.mxu0 0
      %2317 = vmatpush1.bf16.msra.mxu0 0
      %2318 = vmatprep.subr.bf16.mxu0 0
      %2319 = vmatpush1.bf16.msra.mxu0 0
      %2320 = vmatprep.subr.bf16.mxu0 0
      %2321 = vmatpush1.bf16.msra.mxu0 0
      %2322 = vmatprep.subr.bf16.mxu0 0
      %2323 = vmatpush1.bf16.msra.mxu0 0
      %2324 = vmatprep.subr.bf16.mxu0 0
      %2325 = vmatpush1.bf16.msra.mxu0 0
      %2326 = vmatprep.subr.bf16.mxu0 0
      %2327 = vmatpush1.bf16.msra.mxu0 0
      %2328 = vmatprep.subr.bf16.mxu0 0
      %2329 = vmatpush1.bf16.msra.mxu0 0
      %2330 = vmatprep.mubr.bf16.mxu0 0
      %2331 = vmatmul.mubr.bf16.gmra.mrb[0].mxu0 %v2015
      %v2332 = vpop.f32.mrb[0].mxu0
      %v2333 = vadd.f32 0.0, %v2332
      %v2334 = vpop.f32.mrb[0].mxu0
      %v2335 = vpop.f32.mrb[0].mxu0
      %v2336 = vadd.f32 0.0, %v2335
      %v2337 = vpop.f32.mrb[0].mxu0
      %2338 = vdwg.mxu0
      %v2339 = vadd.f32 %v2296, %v2333
      %v2340 = vadd.f32 %v2297, %v2336
      %2341 = vmatprep.subr.bf16.mxu0 0
      %2342 = vmatpush1.bf16.msra.mxu0 %v524
      %2343 = vmatprep.subr.bf16.mxu0 0
      %2344 = vmatpush1.bf16.msra.mxu0 0
      %2345 = vmatprep.subr.bf16.mxu0 0
      %2346 = vmatpush1.bf16.msra.mxu0 0
      %2347 = vmatprep.subr.bf16.mxu0 0
      %2348 = vmatpush1.bf16.msra.mxu0 0
      %2349 = vmatprep.subr.bf16.mxu0 0
      %2350 = vmatpush1.bf16.msra.mxu0 0
      %2351 = vmatprep.subr.bf16.mxu0 0
      %2352 = vmatpush1.bf16.msra.mxu0 0
      %2353 = vmatprep.subr.bf16.mxu0 0
      %2354 = vmatpush1.bf16.msra.mxu0 0
      %2355 = vmatprep.subr.bf16.mxu0 0
      %2356 = vmatpush1.bf16.msra.mxu0 0
      %2357 = vmatprep.subr.bf16.mxu0 0
      %2358 = vmatpush1.bf16.msra.mxu0 0
      %2359 = vmatprep.subr.bf16.mxu0 0
      %2360 = vmatpush1.bf16.msra.mxu0 0
      %2361 = vmatprep.subr.bf16.mxu0 0
      %2362 = vmatpush1.bf16.msra.mxu0 0
      %2363 = vmatprep.subr.bf16.mxu0 0
      %2364 = vmatpush1.bf16.msra.mxu0 0
      %2365 = vmatprep.subr.bf16.mxu0 0
      %2366 = vmatpush1.bf16.msra.mxu0 0
      %2367 = vmatprep.subr.bf16.mxu0 0
      %2368 = vmatpush1.bf16.msra.mxu0 0
      %2369 = vmatprep.subr.bf16.mxu0 0
      %2370 = vmatpush1.bf16.msra.mxu0 0
      %2371 = vmatprep.subr.bf16.mxu0 0
      %2372 = vmatpush1.bf16.msra.mxu0 0
      %2373 = vmatprep.mubr.bf16.mxu0 0
      %2374 = vmatmul.mubr.bf16.gmra.mrb[0].mxu0 %v2068
      %v2375 = vpop.f32.mrb[0].mxu0
      %v2376 = vadd.f32 0.0, %v2375
      %v2377 = vpop.f32.mrb[0].mxu0
      %v2378 = vpop.f32.mrb[0].mxu0
      %v2379 = vadd.f32 0.0, %v2378
      %v2380 = vpop.f32.mrb[0].mxu0
      %2381 = vdwg.mxu0
      %v2382 = vadd.f32 %v2339, %v2376
      %v2383 = vadd.f32 %v2340, %v2379
      %s2384 = sadd.s32 %s180, 6
      %s2385 = smul.u32 %s2384, 3
      %s2386 = smul.addr %s2385, 4
      %s2387 = scalar_lea.vmem %s175, %s2386
      %v2388 = vld [vmem:[%s2387] sm:$0xf]
      %v2389 = vld [vmem:[%s2387 + $0x4] sm:$0xf]
      %v2392 = vunpack.c.l.b16 %v2388
      %v2393 = vunpack.c.l.b16 %v2389
      %v2394 = vpack.c.b16 %v2393, %v2392
      %v2396 = vsel %vm226, %v2394, 0
      %2398 = vmatprep.subr.bf16.mxu0 0
      %2399 = vmatpush1.bf16.msra.mxu0 %v584
      %2400 = vmatprep.subr.bf16.mxu0 0
      %2401 = vmatpush1.bf16.msra.mxu0 0
      %2402 = vmatprep.subr.bf16.mxu0 0
      %2403 = vmatpush1.bf16.msra.mxu0 0
      %2404 = vmatprep.subr.bf16.mxu0 0
      %2405 = vmatpush1.bf16.msra.mxu0 0
      %2406 = vmatprep.subr.bf16.mxu0 0
      %2407 = vmatpush1.bf16.msra.mxu0 0
      %2408 = vmatprep.subr.bf16.mxu0 0
      %2409 = vmatpush1.bf16.msra.mxu0 0
      %2410 = vmatprep.subr.bf16.mxu0 0
      %2411 = vmatpush1.bf16.msra.mxu0 0
      %2412 = vmatprep.subr.bf16.mxu0 0
      %2413 = vmatpush1.bf16.msra.mxu0 0
      %2414 = vmatprep.subr.bf16.mxu0 0
      %2415 = vmatpush1.bf16.msra.mxu0 0
      %2416 = vmatprep.subr.bf16.mxu0 0
      %2417 = vmatpush1.bf16.msra.mxu0 0
      %2418 = vmatprep.subr.bf16.mxu0 0
      %2419 = vmatpush1.bf16.msra.mxu0 0
      %2420 = vmatprep.subr.bf16.mxu0 0
      %2421 = vmatpush1.bf16.msra.mxu0 0
      %2422 = vmatprep.subr.bf16.mxu0 0
      %2423 = vmatpush1.bf16.msra.mxu0 0
      %2424 = vmatprep.subr.bf16.mxu0 0
      %2425 = vmatpush1.bf16.msra.mxu0 0
      %2426 = vmatprep.subr.bf16.mxu0 0
      %2427 = vmatpush1.bf16.msra.mxu0 0
      %2428 = vmatprep.subr.bf16.mxu0 0
      %2429 = vmatpush1.bf16.msra.mxu0 0
      %2430 = vmatprep.mubr.bf16.mxu0 0
      %2431 = vmatmul.mubr.bf16.gmra.mrb[0].mxu0 %v2396
      %v2432 = vpop.f32.mrb[0].mxu0
      %v2433 = vadd.f32 0.0, %v2432
      %v2434 = vpop.f32.mrb[0].mxu0
      %v2435 = vpop.f32.mrb[0].mxu0
      %v2436 = vadd.f32 0.0, %v2435
      %v2437 = vpop.f32.mrb[0].mxu0
      %2438 = vdwg.mxu0
      %v2439 = vadd.f32 %v2382, %v2433
      %v2440 = vadd.f32 %v2383, %v2436
      %v2441 = vld [vmem:[%s2387] sm:$0xf]
      %v2442 = vld [vmem:[%s2387 + $0x4] sm:$0xf]
      %v2443 = vld [vmem:[%s2387 + $0x8] sm:$0x1]
      %v2447 = vunpack.c.l.b16 %v2441
      %v2448 = vunpack.c.l.b16 %v2442
      %v2449 = vunpack.c.l.b16 %v2443
      %v2450 = vpack.c.b16 %v2448, %v2447
      %v2451 = vpack.c.b16 %v2449, %v2449
      %v2453 = vshrl.u32 %v2450, 16
      %v2455 = vshll.u32 %v2450, 16
      %v2457 = vrot.slane %v2455, 1
      %v2458 = vor.u32 %v2453, %v2457
      %v2460 = vshll.u32 %v2451, 16
      %v2462 = vrot.slane %v2460, 1
      %v2463 = vsel %vm213, %v2458, %v2462
      %v2465 = vsel %vm226, %v2463, 0
      %2467 = vmatprep.subr.bf16.mxu0 0
      %2468 = vmatpush1.bf16.msra.mxu0 %v656
      %2469 = vmatprep.subr.bf16.mxu0 0
      %2470 = vmatpush1.bf16.msra.mxu0 0
      %2471 = vmatprep.subr.bf16.mxu0 0
      %2472 = vmatpush1.bf16.msra.mxu0 0
      %2473 = vmatprep.subr.bf16.mxu0 0
      %2474 = vmatpush1.bf16.msra.mxu0 0
      %2475 = vmatprep.subr.bf16.mxu0 0
      %2476 = vmatpush1.bf16.msra.mxu0 0
      %2477 = vmatprep.subr.bf16.mxu0 0
      %2478 = vmatpush1.bf16.msra.mxu0 0
      %2479 = vmatprep.subr.bf16.mxu0 0
      %2480 = vmatpush1.bf16.msra.mxu0 0
      %2481 = vmatprep.subr.bf16.mxu0 0
      %2482 = vmatpush1.bf16.msra.mxu0 0
      %2483 = vmatprep.subr.bf16.mxu0 0
      %2484 = vmatpush1.bf16.msra.mxu0 0
      %2485 = vmatprep.subr.bf16.mxu0 0
      %2486 = vmatpush1.bf16.msra.mxu0 0
      %2487 = vmatprep.subr.bf16.mxu0 0
      %2488 = vmatpush1.bf16.msra.mxu0 0
      %2489 = vmatprep.subr.bf16.mxu0 0
      %2490 = vmatpush1.bf16.msra.mxu0 0
      %2491 = vmatprep.subr.bf16.mxu0 0
      %2492 = vmatpush1.bf16.msra.mxu0 0
      %2493 = vmatprep.subr.bf16.mxu0 0
      %2494 = vmatpush1.bf16.msra.mxu0 0
      %2495 = vmatprep.subr.bf16.mxu0 0
      %2496 = vmatpush1.bf16.msra.mxu0 0
      %2497 = vmatprep.subr.bf16.mxu0 0
      %2498 = vmatpush1.bf16.msra.mxu0 0
      %2499 = vmatprep.mubr.bf16.mxu0 0
      %2500 = vmatmul.mubr.bf16.gmra.mrb[0].mxu0 %v2465
      %v2501 = vpop.f32.mrb[0].mxu0
      %v2502 = vadd.f32 0.0, %v2501
      %v2503 = vpop.f32.mrb[0].mxu0
      %v2504 = vpop.f32.mrb[0].mxu0
      %v2505 = vadd.f32 0.0, %v2504
      %v2506 = vpop.f32.mrb[0].mxu0
      %2507 = vdwg.mxu0
      %v2508 = vadd.f32 %v2439, %v2502
      %v2509 = vadd.f32 %v2440, %v2505
      %v2510 = vld [vmem:[%s2387] sm:$0xe]
      %v2512 = vunpack.c.l.b16 %v2510
      %v2513 = vpack.c.b16 %v2448, %v2512
      %v2514 = vrot.slane %v2513, 1
      %v2515 = vrot.slane %v2451, 1
      %v2516 = vsel %vm328, %v2514, %v2515
      %v2518 = vsel %vm226, %v2516, 0
      %2520 = vmatprep.subr.bf16.mxu0 0
      %2521 = vmatpush1.bf16.msra.mxu0 %v712
      %2522 = vmatprep.subr.bf16.mxu0 0
      %2523 = vmatpush1.bf16.msra.mxu0 0
      %2524 = vmatprep.subr.bf16.mxu0 0
      %2525 = vmatpush1.bf16.msra.mxu0 0
      %2526 = vmatprep.subr.bf16.mxu0 0
      %2527 = vmatpush1.bf16.msra.mxu0 0
      %2528 = vmatprep.subr.bf16.mxu0 0
      %2529 = vmatpush1.bf16.msra.mxu0 0
      %2530 = vmatprep.subr.bf16.mxu0 0
      %2531 = vmatpush1.bf16.msra.mxu0 0
      %2532 = vmatprep.subr.bf16.mxu0 0
      %2533 = vmatpush1.bf16.msra.mxu0 0
      %2534 = vmatprep.subr.bf16.mxu0 0
      %2535 = vmatpush1.bf16.msra.mxu0 0
      %2536 = vmatprep.subr.bf16.mxu0 0
      %2537 = vmatpush1.bf16.msra.mxu0 0
      %2538 = vmatprep.subr.bf16.mxu0 0
      %2539 = vmatpush1.bf16.msra.mxu0 0
      %2540 = vmatprep.subr.bf16.mxu0 0
      %2541 = vmatpush1.bf16.msra.mxu0 0
      %2542 = vmatprep.subr.bf16.mxu0 0
      %2543 = vmatpush1.bf16.msra.mxu0 0
      %2544 = vmatprep.subr.bf16.mxu0 0
      %2545 = vmatpush1.bf16.msra.mxu0 0
      %2546 = vmatprep.subr.bf16.mxu0 0
      %2547 = vmatpush1.bf16.msra.mxu0 0
      %2548 = vmatprep.subr.bf16.mxu0 0
      %2549 = vmatpush1.bf16.msra.mxu0 0
      %2550 = vmatprep.subr.bf16.mxu0 0
      %2551 = vmatpush1.bf16.msra.mxu0 0
      %2552 = vmatprep.mubr.bf16.mxu0 0
      %2553 = vmatmul.mubr.bf16.gmra.mrb[0].mxu0 %v2518
      %v2554 = vpop.f32.mrb[0].mxu0
      %v2555 = vadd.f32 0.0, %v2554
      %v2556 = vpop.f32.mrb[0].mxu0
      %v2557 = vpop.f32.mrb[0].mxu0
      %v2558 = vadd.f32 0.0, %v2557
      %v2559 = vpop.f32.mrb[0].mxu0
      %2560 = vdwg.mxu0
      %v2561 = vadd.f32 %v2508, %v2555
      %v2562 = vadd.f32 %v2509, %v2558
      %v2563 = vadd.f32 %v2561, %v761
      %v2564 = vadd.f32 %v2562, %v761
      %v2565 = vmax.f32 %v2563, 0.0
      %v2566 = vmax.f32 %v2564, 0.0
      %v2567 = vadd.f32 %v2565, %v2566
      %v2568 = vrot.slane %v2567, 4
      %v2569 = vadd.f32 %v2567, %v2568
      %v2570 = vrot.slane %v2569, 2
      %v2571 = vadd.f32 %v2569, %v2570
      %v2572 = vrot.slane %v2571, 1
      %v2573 = vadd.f32 %v2571, %v2572
      %p2574 = scmp.lt.s32.totalorder %s1484, 16
      %s2575 = scalar_select %p2574, 1, 0
      %s2576 = scvt.s32.f32 %s2575
      %v2577 = vstv %s2576
      %v2578 = vmul.f32 %v2577, %v2573
      %v2579 = vadd.f32 %v2129, %v2578
      %2580 = vmatprep.subr.bf16.mxu0 0
      %2581 = vmatpush1.bf16.msra.mxu0 %v235
      %2582 = vmatprep.subr.bf16.mxu0 0
      %2583 = vmatpush1.bf16.msra.mxu0 0
      %2584 = vmatprep.subr.bf16.mxu0 0
      %2585 = vmatpush1.bf16.msra.mxu0 0
      %2586 = vmatprep.subr.bf16.mxu0 0
      %2587 = vmatpush1.bf16.msra.mxu0 0
      %2588 = vmatprep.subr.bf16.mxu0 0
      %2589 = vmatpush1.bf16.msra.mxu0 0
      %2590 = vmatprep.subr.bf16.mxu0 0
      %2591 = vmatpush1.bf16.msra.mxu0 0
      %2592 = vmatprep.subr.bf16.mxu0 0
      %2593 = vmatpush1.bf16.msra.mxu0 0
      %2594 = vmatprep.subr.bf16.mxu0 0
      %2595 = vmatpush1.bf16.msra.mxu0 0
      %2596 = vmatprep.subr.bf16.mxu0 0
      %2597 = vmatpush1.bf16.msra.mxu0 0
      %2598 = vmatprep.subr.bf16.mxu0 0
      %2599 = vmatpush1.bf16.msra.mxu0 0
      %2600 = vmatprep.subr.bf16.mxu0 0
      %2601 = vmatpush1.bf16.msra.mxu0 0
      %2602 = vmatprep.subr.bf16.mxu0 0
      %2603 = vmatpush1.bf16.msra.mxu0 0
      %2604 = vmatprep.subr.bf16.mxu0 0
      %2605 = vmatpush1.bf16.msra.mxu0 0
      %2606 = vmatprep.subr.bf16.mxu0 0
      %2607 = vmatpush1.bf16.msra.mxu0 0
      %2608 = vmatprep.subr.bf16.mxu0 0
      %2609 = vmatpush1.bf16.msra.mxu0 0
      %2610 = vmatprep.subr.bf16.mxu0 0
      %2611 = vmatpush1.bf16.msra.mxu0 0
      %2612 = vmatprep.mubr.bf16.mxu0 0
      %2613 = vmatmul.mubr.bf16.gmra.mrb[0].mxu0 %v2015
      %v2614 = vpop.f32.mrb[0].mxu0
      %v2615 = vadd.f32 0.0, %v2614
      %v2616 = vpop.f32.mrb[0].mxu0
      %v2617 = vpop.f32.mrb[0].mxu0
      %v2618 = vadd.f32 0.0, %v2617
      %v2619 = vpop.f32.mrb[0].mxu0
      %2620 = vdwg.mxu0
      %2621 = vmatprep.subr.bf16.mxu0 0
      %2622 = vmatpush1.bf16.msra.mxu0 %v281
      %2623 = vmatprep.subr.bf16.mxu0 0
      %2624 = vmatpush1.bf16.msra.mxu0 0
      %2625 = vmatprep.subr.bf16.mxu0 0
      %2626 = vmatpush1.bf16.msra.mxu0 0
      %2627 = vmatprep.subr.bf16.mxu0 0
      %2628 = vmatpush1.bf16.msra.mxu0 0
      %2629 = vmatprep.subr.bf16.mxu0 0
      %2630 = vmatpush1.bf16.msra.mxu0 0
      %2631 = vmatprep.subr.bf16.mxu0 0
      %2632 = vmatpush1.bf16.msra.mxu0 0
      %2633 = vmatprep.subr.bf16.mxu0 0
      %2634 = vmatpush1.bf16.msra.mxu0 0
      %2635 = vmatprep.subr.bf16.mxu0 0
      %2636 = vmatpush1.bf16.msra.mxu0 0
      %2637 = vmatprep.subr.bf16.mxu0 0
      %2638 = vmatpush1.bf16.msra.mxu0 0
      %2639 = vmatprep.subr.bf16.mxu0 0
      %2640 = vmatpush1.bf16.msra.mxu0 0
      %2641 = vmatprep.subr.bf16.mxu0 0
      %2642 = vmatpush1.bf16.msra.mxu0 0
      %2643 = vmatprep.subr.bf16.mxu0 0
      %2644 = vmatpush1.bf16.msra.mxu0 0
      %2645 = vmatprep.subr.bf16.mxu0 0
      %2646 = vmatpush1.bf16.msra.mxu0 0
      %2647 = vmatprep.subr.bf16.mxu0 0
      %2648 = vmatpush1.bf16.msra.mxu0 0
      %2649 = vmatprep.subr.bf16.mxu0 0
      %2650 = vmatpush1.bf16.msra.mxu0 0
      %2651 = vmatprep.subr.bf16.mxu0 0
      %2652 = vmatpush1.bf16.msra.mxu0 0
      %2653 = vmatprep.mubr.bf16.mxu0 0
      %2654 = vmatmul.mubr.bf16.gmra.mrb[0].mxu0 %v1946
      %v2655 = vpop.f32.mrb[0].mxu0
      %v2656 = vadd.f32 %v2615, %v2655
      %v2657 = vpop.f32.mrb[0].mxu0
      %v2658 = vpop.f32.mrb[0].mxu0
      %v2659 = vadd.f32 %v2618, %v2658
      %v2660 = vpop.f32.mrb[0].mxu0
      %2661 = vdwg.mxu0
      %2662 = vmatprep.subr.bf16.mxu0 0
      %2663 = vmatpush1.bf16.msra.mxu0 %v336
      %2664 = vmatprep.subr.bf16.mxu0 0
      %2665 = vmatpush1.bf16.msra.mxu0 0
      %2666 = vmatprep.subr.bf16.mxu0 0
      %2667 = vmatpush1.bf16.msra.mxu0 0
      %2668 = vmatprep.subr.bf16.mxu0 0
      %2669 = vmatpush1.bf16.msra.mxu0 0
      %2670 = vmatprep.subr.bf16.mxu0 0
      %2671 = vmatpush1.bf16.msra.mxu0 0
      %2672 = vmatprep.subr.bf16.mxu0 0
      %2673 = vmatpush1.bf16.msra.mxu0 0
      %2674 = vmatprep.subr.bf16.mxu0 0
      %2675 = vmatpush1.bf16.msra.mxu0 0
      %2676 = vmatprep.subr.bf16.mxu0 0
      %2677 = vmatpush1.bf16.msra.mxu0 0
      %2678 = vmatprep.subr.bf16.mxu0 0
      %2679 = vmatpush1.bf16.msra.mxu0 0
      %2680 = vmatprep.subr.bf16.mxu0 0
      %2681 = vmatpush1.bf16.msra.mxu0 0
      %2682 = vmatprep.subr.bf16.mxu0 0
      %2683 = vmatpush1.bf16.msra.mxu0 0
      %2684 = vmatprep.subr.bf16.mxu0 0
      %2685 = vmatpush1.bf16.msra.mxu0 0
      %2686 = vmatprep.subr.bf16.mxu0 0
      %2687 = vmatpush1.bf16.msra.mxu0 0
      %2688 = vmatprep.subr.bf16.mxu0 0
      %2689 = vmatpush1.bf16.msra.mxu0 0
      %2690 = vmatprep.subr.bf16.mxu0 0
      %2691 = vmatpush1.bf16.msra.mxu0 0
      %2692 = vmatprep.subr.bf16.mxu0 0
      %2693 = vmatpush1.bf16.msra.mxu0 0
      %2694 = vmatprep.mubr.bf16.mxu0 0
      %2695 = vmatmul.mubr.bf16.gmra.mrb[0].mxu0 %v2068
      %v2696 = vpop.f32.mrb[0].mxu0
      %v2697 = vadd.f32 0.0, %v2696
      %v2698 = vpop.f32.mrb[0].mxu0
      %v2699 = vpop.f32.mrb[0].mxu0
      %v2700 = vadd.f32 0.0, %v2699
      %v2701 = vpop.f32.mrb[0].mxu0
      %2702 = vdwg.mxu0
      %v2703 = vadd.f32 %v2656, %v2697
      %v2704 = vadd.f32 %v2659, %v2700
      %2705 = vmatprep.subr.bf16.mxu0 0
      %2706 = vmatpush1.bf16.msra.mxu0 %v396
      %2707 = vmatprep.subr.bf16.mxu0 0
      %2708 = vmatpush1.bf16.msra.mxu0 0
      %2709 = vmatprep.subr.bf16.mxu0 0
      %2710 = vmatpush1.bf16.msra.mxu0 0
      %2711 = vmatprep.subr.bf16.mxu0 0
      %2712 = vmatpush1.bf16.msra.mxu0 0
      %2713 = vmatprep.subr.bf16.mxu0 0
      %2714 = vmatpush1.bf16.msra.mxu0 0
      %2715 = vmatprep.subr.bf16.mxu0 0
      %2716 = vmatpush1.bf16.msra.mxu0 0
      %2717 = vmatprep.subr.bf16.mxu0 0
      %2718 = vmatpush1.bf16.msra.mxu0 0
      %2719 = vmatprep.subr.bf16.mxu0 0
      %2720 = vmatpush1.bf16.msra.mxu0 0
      %2721 = vmatprep.subr.bf16.mxu0 0
      %2722 = vmatpush1.bf16.msra.mxu0 0
      %2723 = vmatprep.subr.bf16.mxu0 0
      %2724 = vmatpush1.bf16.msra.mxu0 0
      %2725 = vmatprep.subr.bf16.mxu0 0
      %2726 = vmatpush1.bf16.msra.mxu0 0
      %2727 = vmatprep.subr.bf16.mxu0 0
      %2728 = vmatpush1.bf16.msra.mxu0 0
      %2729 = vmatprep.subr.bf16.mxu0 0
      %2730 = vmatpush1.bf16.msra.mxu0 0
      %2731 = vmatprep.subr.bf16.mxu0 0
      %2732 = vmatpush1.bf16.msra.mxu0 0
      %2733 = vmatprep.subr.bf16.mxu0 0
      %2734 = vmatpush1.bf16.msra.mxu0 0
      %2735 = vmatprep.subr.bf16.mxu0 0
      %2736 = vmatpush1.bf16.msra.mxu0 0
      %2737 = vmatprep.mubr.bf16.mxu0 0
      %2738 = vmatmul.mubr.bf16.gmra.mrb[0].mxu0 %v2396
      %v2739 = vpop.f32.mrb[0].mxu0
      %v2740 = vadd.f32 0.0, %v2739
      %v2741 = vpop.f32.mrb[0].mxu0
      %v2742 = vpop.f32.mrb[0].mxu0
      %v2743 = vadd.f32 0.0, %v2742
      %v2744 = vpop.f32.mrb[0].mxu0
      %2745 = vdwg.mxu0
      %v2746 = vadd.f32 %v2703, %v2740
      %v2747 = vadd.f32 %v2704, %v2743
      %2748 = vmatprep.subr.bf16.mxu0 0
      %2749 = vmatpush1.bf16.msra.mxu0 %v468
      %2750 = vmatprep.subr.bf16.mxu0 0
      %2751 = vmatpush1.bf16.msra.mxu0 0
      %2752 = vmatprep.subr.bf16.mxu0 0
      %2753 = vmatpush1.bf16.msra.mxu0 0
      %2754 = vmatprep.subr.bf16.mxu0 0
      %2755 = vmatpush1.bf16.msra.mxu0 0
      %2756 = vmatprep.subr.bf16.mxu0 0
      %2757 = vmatpush1.bf16.msra.mxu0 0
      %2758 = vmatprep.subr.bf16.mxu0 0
      %2759 = vmatpush1.bf16.msra.mxu0 0
      %2760 = vmatprep.subr.bf16.mxu0 0
      %2761 = vmatpush1.bf16.msra.mxu0 0
      %2762 = vmatprep.subr.bf16.mxu0 0
      %2763 = vmatpush1.bf16.msra.mxu0 0
      %2764 = vmatprep.subr.bf16.mxu0 0
      %2765 = vmatpush1.bf16.msra.mxu0 0
      %2766 = vmatprep.subr.bf16.mxu0 0
      %2767 = vmatpush1.bf16.msra.mxu0 0
      %2768 = vmatprep.subr.bf16.mxu0 0
      %2769 = vmatpush1.bf16.msra.mxu0 0
      %2770 = vmatprep.subr.bf16.mxu0 0
      %2771 = vmatpush1.bf16.msra.mxu0 0
      %2772 = vmatprep.subr.bf16.mxu0 0
      %2773 = vmatpush1.bf16.msra.mxu0 0
      %2774 = vmatprep.subr.bf16.mxu0 0
      %2775 = vmatpush1.bf16.msra.mxu0 0
      %2776 = vmatprep.subr.bf16.mxu0 0
      %2777 = vmatpush1.bf16.msra.mxu0 0
      %2778 = vmatprep.subr.bf16.mxu0 0
      %2779 = vmatpush1.bf16.msra.mxu0 0
      %2780 = vmatprep.mubr.bf16.mxu0 0
      %2781 = vmatmul.mubr.bf16.gmra.mrb[0].mxu0 %v2465
      %v2782 = vpop.f32.mrb[0].mxu0
      %v2783 = vadd.f32 0.0, %v2782
      %v2784 = vpop.f32.mrb[0].mxu0
      %v2785 = vpop.f32.mrb[0].mxu0
      %v2786 = vadd.f32 0.0, %v2785
      %v2787 = vpop.f32.mrb[0].mxu0
      %2788 = vdwg.mxu0
      %v2789 = vadd.f32 %v2746, %v2783
      %v2790 = vadd.f32 %v2747, %v2786
      %2791 = vmatprep.subr.bf16.mxu0 0
      %2792 = vmatpush1.bf16.msra.mxu0 %v524
      %2793 = vmatprep.subr.bf16.mxu0 0
      %2794 = vmatpush1.bf16.msra.mxu0 0
      %2795 = vmatprep.subr.bf16.mxu0 0
      %2796 = vmatpush1.bf16.msra.mxu0 0
      %2797 = vmatprep.subr.bf16.mxu0 0
      %2798 = vmatpush1.bf16.msra.mxu0 0
      %2799 = vmatprep.subr.bf16.mxu0 0
      %2800 = vmatpush1.bf16.msra.mxu0 0
      %2801 = vmatprep.subr.bf16.mxu0 0
      %2802 = vmatpush1.bf16.msra.mxu0 0
      %2803 = vmatprep.subr.bf16.mxu0 0
      %2804 = vmatpush1.bf16.msra.mxu0 0
      %2805 = vmatprep.subr.bf16.mxu0 0
      %2806 = vmatpush1.bf16.msra.mxu0 0
      %2807 = vmatprep.subr.bf16.mxu0 0
      %2808 = vmatpush1.bf16.msra.mxu0 0
      %2809 = vmatprep.subr.bf16.mxu0 0
      %2810 = vmatpush1.bf16.msra.mxu0 0
      %2811 = vmatprep.subr.bf16.mxu0 0
      %2812 = vmatpush1.bf16.msra.mxu0 0
      %2813 = vmatprep.subr.bf16.mxu0 0
      %2814 = vmatpush1.bf16.msra.mxu0 0
      %2815 = vmatprep.subr.bf16.mxu0 0
      %2816 = vmatpush1.bf16.msra.mxu0 0
      %2817 = vmatprep.subr.bf16.mxu0 0
      %2818 = vmatpush1.bf16.msra.mxu0 0
      %2819 = vmatprep.subr.bf16.mxu0 0
      %2820 = vmatpush1.bf16.msra.mxu0 0
      %2821 = vmatprep.subr.bf16.mxu0 0
      %2822 = vmatpush1.bf16.msra.mxu0 0
      %2823 = vmatprep.mubr.bf16.mxu0 0
      %2824 = vmatmul.mubr.bf16.gmra.mrb[0].mxu0 %v2518
      %v2825 = vpop.f32.mrb[0].mxu0
      %v2826 = vadd.f32 0.0, %v2825
      %v2827 = vpop.f32.mrb[0].mxu0
      %v2828 = vpop.f32.mrb[0].mxu0
      %v2829 = vadd.f32 0.0, %v2828
      %v2830 = vpop.f32.mrb[0].mxu0
      %2831 = vdwg.mxu0
      %v2832 = vadd.f32 %v2789, %v2826
      %v2833 = vadd.f32 %v2790, %v2829
      %s2834 = sadd.s32 %s180, 7
      %s2835 = smul.u32 %s2834, 3
      %s2836 = smul.addr %s2835, 4
      %s2837 = scalar_lea.vmem %s175, %s2836
      %v2838 = vld [vmem:[%s2837] sm:$0xf]
      %v2839 = vld [vmem:[%s2837 + $0x4] sm:$0xf]
      %v2842 = vunpack.c.l.b16 %v2838
      %v2843 = vunpack.c.l.b16 %v2839
      %v2844 = vpack.c.b16 %v2843, %v2842
      %v2846 = vsel %vm226, %v2844, 0
      %2848 = vmatprep.subr.bf16.mxu0 0
      %2849 = vmatpush1.bf16.msra.mxu0 %v584
      %2850 = vmatprep.subr.bf16.mxu0 0
      %2851 = vmatpush1.bf16.msra.mxu0 0
      %2852 = vmatprep.subr.bf16.mxu0 0
      %2853 = vmatpush1.bf16.msra.mxu0 0
      %2854 = vmatprep.subr.bf16.mxu0 0
      %2855 = vmatpush1.bf16.msra.mxu0 0
      %2856 = vmatprep.subr.bf16.mxu0 0
      %2857 = vmatpush1.bf16.msra.mxu0 0
      %2858 = vmatprep.subr.bf16.mxu0 0
      %2859 = vmatpush1.bf16.msra.mxu0 0
      %2860 = vmatprep.subr.bf16.mxu0 0
      %2861 = vmatpush1.bf16.msra.mxu0 0
      %2862 = vmatprep.subr.bf16.mxu0 0
      %2863 = vmatpush1.bf16.msra.mxu0 0
      %2864 = vmatprep.subr.bf16.mxu0 0
      %2865 = vmatpush1.bf16.msra.mxu0 0
      %2866 = vmatprep.subr.bf16.mxu0 0
      %2867 = vmatpush1.bf16.msra.mxu0 0
      %2868 = vmatprep.subr.bf16.mxu0 0
      %2869 = vmatpush1.bf16.msra.mxu0 0
      %2870 = vmatprep.subr.bf16.mxu0 0
      %2871 = vmatpush1.bf16.msra.mxu0 0
      %2872 = vmatprep.subr.bf16.mxu0 0
      %2873 = vmatpush1.bf16.msra.mxu0 0
      %2874 = vmatprep.subr.bf16.mxu0 0
      %2875 = vmatpush1.bf16.msra.mxu0 0
      %2876 = vmatprep.subr.bf16.mxu0 0
      %2877 = vmatpush1.bf16.msra.mxu0 0
      %2878 = vmatprep.subr.bf16.mxu0 0
      %2879 = vmatpush1.bf16.msra.mxu0 0
      %2880 = vmatprep.mubr.bf16.mxu0 0
      %2881 = vmatmul.mubr.bf16.gmra.mrb[0].mxu0 %v2846
      %v2882 = vpop.f32.mrb[0].mxu0
      %v2883 = vadd.f32 0.0, %v2882
      %v2884 = vpop.f32.mrb[0].mxu0
      %v2885 = vpop.f32.mrb[0].mxu0
      %v2886 = vadd.f32 0.0, %v2885
      %v2887 = vpop.f32.mrb[0].mxu0
      %2888 = vdwg.mxu0
      %v2889 = vadd.f32 %v2832, %v2883
      %v2890 = vadd.f32 %v2833, %v2886
      %v2891 = vld [vmem:[%s2837] sm:$0xf]
      %v2892 = vld [vmem:[%s2837 + $0x4] sm:$0xf]
      %v2893 = vld [vmem:[%s2837 + $0x8] sm:$0x1]
      %v2897 = vunpack.c.l.b16 %v2891
      %v2898 = vunpack.c.l.b16 %v2892
      %v2899 = vunpack.c.l.b16 %v2893
      %v2900 = vpack.c.b16 %v2898, %v2897
      %v2901 = vpack.c.b16 %v2899, %v2899
      %v2903 = vshrl.u32 %v2900, 16
      %v2905 = vshll.u32 %v2900, 16
      %v2907 = vrot.slane %v2905, 1
      %v2908 = vor.u32 %v2903, %v2907
      %v2910 = vshll.u32 %v2901, 16
      %v2912 = vrot.slane %v2910, 1
      %v2913 = vsel %vm213, %v2908, %v2912
      %v2915 = vsel %vm226, %v2913, 0
      %2917 = vmatprep.subr.bf16.mxu0 0
      %2918 = vmatpush1.bf16.msra.mxu0 %v656
      %2919 = vmatprep.subr.bf16.mxu0 0
      %2920 = vmatpush1.bf16.msra.mxu0 0
      %2921 = vmatprep.subr.bf16.mxu0 0
      %2922 = vmatpush1.bf16.msra.mxu0 0
      %2923 = vmatprep.subr.bf16.mxu0 0
      %2924 = vmatpush1.bf16.msra.mxu0 0
      %2925 = vmatprep.subr.bf16.mxu0 0
      %2926 = vmatpush1.bf16.msra.mxu0 0
      %2927 = vmatprep.subr.bf16.mxu0 0
      %2928 = vmatpush1.bf16.msra.mxu0 0
      %2929 = vmatprep.subr.bf16.mxu0 0
      %2930 = vmatpush1.bf16.msra.mxu0 0
      %2931 = vmatprep.subr.bf16.mxu0 0
      %2932 = vmatpush1.bf16.msra.mxu0 0
      %2933 = vmatprep.subr.bf16.mxu0 0
      %2934 = vmatpush1.bf16.msra.mxu0 0
      %2935 = vmatprep.subr.bf16.mxu0 0
      %2936 = vmatpush1.bf16.msra.mxu0 0
      %2937 = vmatprep.subr.bf16.mxu0 0
      %2938 = vmatpush1.bf16.msra.mxu0 0
      %2939 = vmatprep.subr.bf16.mxu0 0
      %2940 = vmatpush1.bf16.msra.mxu0 0
      %2941 = vmatprep.subr.bf16.mxu0 0
      %2942 = vmatpush1.bf16.msra.mxu0 0
      %2943 = vmatprep.subr.bf16.mxu0 0
      %2944 = vmatpush1.bf16.msra.mxu0 0
      %2945 = vmatprep.subr.bf16.mxu0 0
      %2946 = vmatpush1.bf16.msra.mxu0 0
      %2947 = vmatprep.subr.bf16.mxu0 0
      %2948 = vmatpush1.bf16.msra.mxu0 0
      %2949 = vmatprep.mubr.bf16.mxu0 0
      %2950 = vmatmul.mubr.bf16.gmra.mrb[0].mxu0 %v2915
      %v2951 = vpop.f32.mrb[0].mxu0
      %v2952 = vadd.f32 0.0, %v2951
      %v2953 = vpop.f32.mrb[0].mxu0
      %v2954 = vpop.f32.mrb[0].mxu0
      %v2955 = vadd.f32 0.0, %v2954
      %v2956 = vpop.f32.mrb[0].mxu0
      %2957 = vdwg.mxu0
      %v2958 = vadd.f32 %v2889, %v2952
      %v2959 = vadd.f32 %v2890, %v2955
      %v2960 = vld [vmem:[%s2837] sm:$0xe]
      %v2962 = vunpack.c.l.b16 %v2960
      %v2963 = vpack.c.b16 %v2898, %v2962
      %v2964 = vrot.slane %v2963, 1
      %v2965 = vrot.slane %v2901, 1
      %v2966 = vsel %vm328, %v2964, %v2965
      %v2968 = vsel %vm226, %v2966, 0
      %2970 = vmatprep.subr.bf16.mxu0 0
      %2971 = vmatpush1.bf16.msra.mxu0 %v712
      %2972 = vmatprep.subr.bf16.mxu0 0
      %2973 = vmatpush1.bf16.msra.mxu0 0
      %2974 = vmatprep.subr.bf16.mxu0 0
      %2975 = vmatpush1.bf16.msra.mxu0 0
      %2976 = vmatprep.subr.bf16.mxu0 0
      %2977 = vmatpush1.bf16.msra.mxu0 0
      %2978 = vmatprep.subr.bf16.mxu0 0
      %2979 = vmatpush1.bf16.msra.mxu0 0
      %2980 = vmatprep.subr.bf16.mxu0 0
      %2981 = vmatpush1.bf16.msra.mxu0 0
      %2982 = vmatprep.subr.bf16.mxu0 0
      %2983 = vmatpush1.bf16.msra.mxu0 0
      %2984 = vmatprep.subr.bf16.mxu0 0
      %2985 = vmatpush1.bf16.msra.mxu0 0
      %2986 = vmatprep.subr.bf16.mxu0 0
      %2987 = vmatpush1.bf16.msra.mxu0 0
      %2988 = vmatprep.subr.bf16.mxu0 0
      %2989 = vmatpush1.bf16.msra.mxu0 0
      %2990 = vmatprep.subr.bf16.mxu0 0
      %2991 = vmatpush1.bf16.msra.mxu0 0
      %2992 = vmatprep.subr.bf16.mxu0 0
      %2993 = vmatpush1.bf16.msra.mxu0 0
      %2994 = vmatprep.subr.bf16.mxu0 0
      %2995 = vmatpush1.bf16.msra.mxu0 0
      %2996 = vmatprep.subr.bf16.mxu0 0
      %2997 = vmatpush1.bf16.msra.mxu0 0
      %2998 = vmatprep.subr.bf16.mxu0 0
      %2999 = vmatpush1.bf16.msra.mxu0 0
      %3000 = vmatprep.subr.bf16.mxu0 0
      %3001 = vmatpush1.bf16.msra.mxu0 0
      %3002 = vmatprep.mubr.bf16.mxu0 0
      %3003 = vmatmul.mubr.bf16.gmra.mrb[0].mxu0 %v2968
      %v3004 = vpop.f32.mrb[0].mxu0
      %v3005 = vadd.f32 0.0, %v3004
      %v3006 = vpop.f32.mrb[0].mxu0
      %v3007 = vpop.f32.mrb[0].mxu0
      %v3008 = vadd.f32 0.0, %v3007
      %v3009 = vpop.f32.mrb[0].mxu0
      %3010 = vdwg.mxu0
      %v3011 = vadd.f32 %v2958, %v3005
      %v3012 = vadd.f32 %v2959, %v3008
      %v3013 = vadd.f32 %v3011, %v761
      %v3014 = vadd.f32 %v3012, %v761
      %v3015 = vmax.f32 %v3013, 0.0
      %v3016 = vmax.f32 %v3014, 0.0
      %v3017 = vadd.f32 %v3015, %v3016
      %v3018 = vrot.slane %v3017, 4
      %v3019 = vadd.f32 %v3017, %v3018
      %v3020 = vrot.slane %v3019, 2
      %v3021 = vadd.f32 %v3019, %v3020
      %v3022 = vrot.slane %v3021, 1
      %v3023 = vadd.f32 %v3021, %v3022
      %p3024 = scmp.lt.s32.totalorder %s1934, 16
      %s3025 = scalar_select %p3024, 1, 0
      %s3026 = scvt.s32.f32 %s3025
      %v3027 = vstv %s3026
      %v3028 = vmul.f32 %v3027, %v3023
      %v3029 = vadd.f32 %v2579, %v3028
      %3030 = vmatprep.subr.bf16.mxu0 0
      %3031 = vmatpush1.bf16.msra.mxu0 %v235
      %3032 = vmatprep.subr.bf16.mxu0 0
      %3033 = vmatpush1.bf16.msra.mxu0 0
      %3034 = vmatprep.subr.bf16.mxu0 0
      %3035 = vmatpush1.bf16.msra.mxu0 0
      %3036 = vmatprep.subr.bf16.mxu0 0
      %3037 = vmatpush1.bf16.msra.mxu0 0
      %3038 = vmatprep.subr.bf16.mxu0 0
      %3039 = vmatpush1.bf16.msra.mxu0 0
      %3040 = vmatprep.subr.bf16.mxu0 0
      %3041 = vmatpush1.bf16.msra.mxu0 0
      %3042 = vmatprep.subr.bf16.mxu0 0
      %3043 = vmatpush1.bf16.msra.mxu0 0
      %3044 = vmatprep.subr.bf16.mxu0 0
      %3045 = vmatpush1.bf16.msra.mxu0 0
      %3046 = vmatprep.subr.bf16.mxu0 0
      %3047 = vmatpush1.bf16.msra.mxu0 0
      %3048 = vmatprep.subr.bf16.mxu0 0
      %3049 = vmatpush1.bf16.msra.mxu0 0
      %3050 = vmatprep.subr.bf16.mxu0 0
      %3051 = vmatpush1.bf16.msra.mxu0 0
      %3052 = vmatprep.subr.bf16.mxu0 0
      %3053 = vmatpush1.bf16.msra.mxu0 0
      %3054 = vmatprep.subr.bf16.mxu0 0
      %3055 = vmatpush1.bf16.msra.mxu0 0
      %3056 = vmatprep.subr.bf16.mxu0 0
      %3057 = vmatpush1.bf16.msra.mxu0 0
      %3058 = vmatprep.subr.bf16.mxu0 0
      %3059 = vmatpush1.bf16.msra.mxu0 0
      %3060 = vmatprep.subr.bf16.mxu0 0
      %3061 = vmatpush1.bf16.msra.mxu0 0
      %3062 = vmatprep.mubr.bf16.mxu0 0
      %3063 = vmatmul.mubr.bf16.gmra.mrb[0].mxu0 %v2465
      %v3064 = vpop.f32.mrb[0].mxu0
      %v3065 = vadd.f32 0.0, %v3064
      %v3066 = vpop.f32.mrb[0].mxu0
      %v3067 = vpop.f32.mrb[0].mxu0
      %v3068 = vadd.f32 0.0, %v3067
      %v3069 = vpop.f32.mrb[0].mxu0
      %3070 = vdwg.mxu0
      %3071 = vmatprep.subr.bf16.mxu0 0
      %3072 = vmatpush1.bf16.msra.mxu0 %v281
      %3073 = vmatprep.subr.bf16.mxu0 0
      %3074 = vmatpush1.bf16.msra.mxu0 0
      %3075 = vmatprep.subr.bf16.mxu0 0
      %3076 = vmatpush1.bf16.msra.mxu0 0
      %3077 = vmatprep.subr.bf16.mxu0 0
      %3078 = vmatpush1.bf16.msra.mxu0 0
      %3079 = vmatprep.subr.bf16.mxu0 0
      %3080 = vmatpush1.bf16.msra.mxu0 0
      %3081 = vmatprep.subr.bf16.mxu0 0
      %3082 = vmatpush1.bf16.msra.mxu0 0
      %3083 = vmatprep.subr.bf16.mxu0 0
      %3084 = vmatpush1.bf16.msra.mxu0 0
      %3085 = vmatprep.subr.bf16.mxu0 0
      %3086 = vmatpush1.bf16.msra.mxu0 0
      %3087 = vmatprep.subr.bf16.mxu0 0
      %3088 = vmatpush1.bf16.msra.mxu0 0
      %3089 = vmatprep.subr.bf16.mxu0 0
      %3090 = vmatpush1.bf16.msra.mxu0 0
      %3091 = vmatprep.subr.bf16.mxu0 0
      %3092 = vmatpush1.bf16.msra.mxu0 0
      %3093 = vmatprep.subr.bf16.mxu0 0
      %3094 = vmatpush1.bf16.msra.mxu0 0
      %3095 = vmatprep.subr.bf16.mxu0 0
      %3096 = vmatpush1.bf16.msra.mxu0 0
      %3097 = vmatprep.subr.bf16.mxu0 0
      %3098 = vmatpush1.bf16.msra.mxu0 0
      %3099 = vmatprep.subr.bf16.mxu0 0
      %3100 = vmatpush1.bf16.msra.mxu0 0
      %3101 = vmatprep.subr.bf16.mxu0 0
      %3102 = vmatpush1.bf16.msra.mxu0 0
      %3103 = vmatprep.mubr.bf16.mxu0 0
      %3104 = vmatmul.mubr.bf16.gmra.mrb[0].mxu0 %v2396
      %v3105 = vpop.f32.mrb[0].mxu0
      %v3106 = vadd.f32 %v3065, %v3105
      %v3107 = vpop.f32.mrb[0].mxu0
      %v3108 = vpop.f32.mrb[0].mxu0
      %v3109 = vadd.f32 %v3068, %v3108
      %v3110 = vpop.f32.mrb[0].mxu0
      %3111 = vdwg.mxu0
      %3112 = vmatprep.subr.bf16.mxu0 0
      %3113 = vmatpush1.bf16.msra.mxu0 %v336
      %3114 = vmatprep.subr.bf16.mxu0 0
      %3115 = vmatpush1.bf16.msra.mxu0 0
      %3116 = vmatprep.subr.bf16.mxu0 0
      %3117 = vmatpush1.bf16.msra.mxu0 0
      %3118 = vmatprep.subr.bf16.mxu0 0
      %3119 = vmatpush1.bf16.msra.mxu0 0
      %3120 = vmatprep.subr.bf16.mxu0 0
      %3121 = vmatpush1.bf16.msra.mxu0 0
      %3122 = vmatprep.subr.bf16.mxu0 0
      %3123 = vmatpush1.bf16.msra.mxu0 0
      %3124 = vmatprep.subr.bf16.mxu0 0
      %3125 = vmatpush1.bf16.msra.mxu0 0
      %3126 = vmatprep.subr.bf16.mxu0 0
      %3127 = vmatpush1.bf16.msra.mxu0 0
      %3128 = vmatprep.subr.bf16.mxu0 0
      %3129 = vmatpush1.bf16.msra.mxu0 0
      %3130 = vmatprep.subr.bf16.mxu0 0
      %3131 = vmatpush1.bf16.msra.mxu0 0
      %3132 = vmatprep.subr.bf16.mxu0 0
      %3133 = vmatpush1.bf16.msra.mxu0 0
      %3134 = vmatprep.subr.bf16.mxu0 0
      %3135 = vmatpush1.bf16.msra.mxu0 0
      %3136 = vmatprep.subr.bf16.mxu0 0
      %3137 = vmatpush1.bf16.msra.mxu0 0
      %3138 = vmatprep.subr.bf16.mxu0 0
      %3139 = vmatpush1.bf16.msra.mxu0 0
      %3140 = vmatprep.subr.bf16.mxu0 0
      %3141 = vmatpush1.bf16.msra.mxu0 0
      %3142 = vmatprep.subr.bf16.mxu0 0
      %3143 = vmatpush1.bf16.msra.mxu0 0
      %3144 = vmatprep.mubr.bf16.mxu0 0
      %3145 = vmatmul.mubr.bf16.gmra.mrb[0].mxu0 %v2518
      %v3146 = vpop.f32.mrb[0].mxu0
      %v3147 = vadd.f32 0.0, %v3146
      %v3148 = vpop.f32.mrb[0].mxu0
      %v3149 = vpop.f32.mrb[0].mxu0
      %v3150 = vadd.f32 0.0, %v3149
      %v3151 = vpop.f32.mrb[0].mxu0
      %3152 = vdwg.mxu0
      %v3153 = vadd.f32 %v3106, %v3147
      %v3154 = vadd.f32 %v3109, %v3150
      %3155 = vmatprep.subr.bf16.mxu0 0
      %3156 = vmatpush1.bf16.msra.mxu0 %v396
      %3157 = vmatprep.subr.bf16.mxu0 0
      %3158 = vmatpush1.bf16.msra.mxu0 0
      %3159 = vmatprep.subr.bf16.mxu0 0
      %3160 = vmatpush1.bf16.msra.mxu0 0
      %3161 = vmatprep.subr.bf16.mxu0 0
      %3162 = vmatpush1.bf16.msra.mxu0 0
      %3163 = vmatprep.subr.bf16.mxu0 0
      %3164 = vmatpush1.bf16.msra.mxu0 0
      %3165 = vmatprep.subr.bf16.mxu0 0
      %3166 = vmatpush1.bf16.msra.mxu0 0
      %3167 = vmatprep.subr.bf16.mxu0 0
      %3168 = vmatpush1.bf16.msra.mxu0 0
      %3169 = vmatprep.subr.bf16.mxu0 0
      %3170 = vmatpush1.bf16.msra.mxu0 0
      %3171 = vmatprep.subr.bf16.mxu0 0
      %3172 = vmatpush1.bf16.msra.mxu0 0
      %3173 = vmatprep.subr.bf16.mxu0 0
      %3174 = vmatpush1.bf16.msra.mxu0 0
      %3175 = vmatprep.subr.bf16.mxu0 0
      %3176 = vmatpush1.bf16.msra.mxu0 0
      %3177 = vmatprep.subr.bf16.mxu0 0
      %3178 = vmatpush1.bf16.msra.mxu0 0
      %3179 = vmatprep.subr.bf16.mxu0 0
      %3180 = vmatpush1.bf16.msra.mxu0 0
      %3181 = vmatprep.subr.bf16.mxu0 0
      %3182 = vmatpush1.bf16.msra.mxu0 0
      %3183 = vmatprep.subr.bf16.mxu0 0
      %3184 = vmatpush1.bf16.msra.mxu0 0
      %3185 = vmatprep.subr.bf16.mxu0 0
      %3186 = vmatpush1.bf16.msra.mxu0 0
      %3187 = vmatprep.mubr.bf16.mxu0 0
      %3188 = vmatmul.mubr.bf16.gmra.mrb[0].mxu0 %v2846
      %v3189 = vpop.f32.mrb[0].mxu0
      %v3190 = vadd.f32 0.0, %v3189
      %v3191 = vpop.f32.mrb[0].mxu0
      %v3192 = vpop.f32.mrb[0].mxu0
      %v3193 = vadd.f32 0.0, %v3192
      %v3194 = vpop.f32.mrb[0].mxu0
      %3195 = vdwg.mxu0
      %v3196 = vadd.f32 %v3153, %v3190
      %v3197 = vadd.f32 %v3154, %v3193
      %3198 = vmatprep.subr.bf16.mxu0 0
      %3199 = vmatpush1.bf16.msra.mxu0 %v468
      %3200 = vmatprep.subr.bf16.mxu0 0
      %3201 = vmatpush1.bf16.msra.mxu0 0
      %3202 = vmatprep.subr.bf16.mxu0 0
      %3203 = vmatpush1.bf16.msra.mxu0 0
      %3204 = vmatprep.subr.bf16.mxu0 0
      %3205 = vmatpush1.bf16.msra.mxu0 0
      %3206 = vmatprep.subr.bf16.mxu0 0
      %3207 = vmatpush1.bf16.msra.mxu0 0
      %3208 = vmatprep.subr.bf16.mxu0 0
      %3209 = vmatpush1.bf16.msra.mxu0 0
      %3210 = vmatprep.subr.bf16.mxu0 0
      %3211 = vmatpush1.bf16.msra.mxu0 0
      %3212 = vmatprep.subr.bf16.mxu0 0
      %3213 = vmatpush1.bf16.msra.mxu0 0
      %3214 = vmatprep.subr.bf16.mxu0 0
      %3215 = vmatpush1.bf16.msra.mxu0 0
      %3216 = vmatprep.subr.bf16.mxu0 0
      %3217 = vmatpush1.bf16.msra.mxu0 0
      %3218 = vmatprep.subr.bf16.mxu0 0
      %3219 = vmatpush1.bf16.msra.mxu0 0
      %3220 = vmatprep.subr.bf16.mxu0 0
      %3221 = vmatpush1.bf16.msra.mxu0 0
      %3222 = vmatprep.subr.bf16.mxu0 0
      %3223 = vmatpush1.bf16.msra.mxu0 0
      %3224 = vmatprep.subr.bf16.mxu0 0
      %3225 = vmatpush1.bf16.msra.mxu0 0
      %3226 = vmatprep.subr.bf16.mxu0 0
      %3227 = vmatpush1.bf16.msra.mxu0 0
      %3228 = vmatprep.subr.bf16.mxu0 0
      %3229 = vmatpush1.bf16.msra.mxu0 0
      %3230 = vmatprep.mubr.bf16.mxu0 0
      %3231 = vmatmul.mubr.bf16.gmra.mrb[0].mxu0 %v2915
      %v3232 = vpop.f32.mrb[0].mxu0
      %v3233 = vadd.f32 0.0, %v3232
      %v3234 = vpop.f32.mrb[0].mxu0
      %v3235 = vpop.f32.mrb[0].mxu0
      %v3236 = vadd.f32 0.0, %v3235
      %v3237 = vpop.f32.mrb[0].mxu0
      %3238 = vdwg.mxu0
      %v3239 = vadd.f32 %v3196, %v3233
      %v3240 = vadd.f32 %v3197, %v3236
      %3241 = vmatprep.subr.bf16.mxu0 0
      %3242 = vmatpush1.bf16.msra.mxu0 %v524
      %3243 = vmatprep.subr.bf16.mxu0 0
      %3244 = vmatpush1.bf16.msra.mxu0 0
      %3245 = vmatprep.subr.bf16.mxu0 0
      %3246 = vmatpush1.bf16.msra.mxu0 0
      %3247 = vmatprep.subr.bf16.mxu0 0
      %3248 = vmatpush1.bf16.msra.mxu0 0
      %3249 = vmatprep.subr.bf16.mxu0 0
      %3250 = vmatpush1.bf16.msra.mxu0 0
      %3251 = vmatprep.subr.bf16.mxu0 0
      %3252 = vmatpush1.bf16.msra.mxu0 0
      %3253 = vmatprep.subr.bf16.mxu0 0
      %3254 = vmatpush1.bf16.msra.mxu0 0
      %3255 = vmatprep.subr.bf16.mxu0 0
      %3256 = vmatpush1.bf16.msra.mxu0 0
      %3257 = vmatprep.subr.bf16.mxu0 0
      %3258 = vmatpush1.bf16.msra.mxu0 0
      %3259 = vmatprep.subr.bf16.mxu0 0
      %3260 = vmatpush1.bf16.msra.mxu0 0
      %3261 = vmatprep.subr.bf16.mxu0 0
      %3262 = vmatpush1.bf16.msra.mxu0 0
      %3263 = vmatprep.subr.bf16.mxu0 0
      %3264 = vmatpush1.bf16.msra.mxu0 0
      %3265 = vmatprep.subr.bf16.mxu0 0
      %3266 = vmatpush1.bf16.msra.mxu0 0
      %3267 = vmatprep.subr.bf16.mxu0 0
      %3268 = vmatpush1.bf16.msra.mxu0 0
      %3269 = vmatprep.subr.bf16.mxu0 0
      %3270 = vmatpush1.bf16.msra.mxu0 0
      %3271 = vmatprep.subr.bf16.mxu0 0
      %3272 = vmatpush1.bf16.msra.mxu0 0
      %3273 = vmatprep.mubr.bf16.mxu0 0
      %3274 = vmatmul.mubr.bf16.gmra.mrb[0].mxu0 %v2968
      %v3275 = vpop.f32.mrb[0].mxu0
      %v3276 = vadd.f32 0.0, %v3275
      %v3277 = vpop.f32.mrb[0].mxu0
      %v3278 = vpop.f32.mrb[0].mxu0
      %v3279 = vadd.f32 0.0, %v3278
      %v3280 = vpop.f32.mrb[0].mxu0
      %3281 = vdwg.mxu0
      %v3282 = vadd.f32 %v3239, %v3276
      %v3283 = vadd.f32 %v3240, %v3279
      %s3284 = sadd.s32 %s180, 8
      %s3285 = smul.u32 %s3284, 3
      %s3286 = smul.addr %s3285, 4
      %s3287 = scalar_lea.vmem %s175, %s3286
      %v3288 = vld [vmem:[%s3287] sm:$0xf]
      %v3289 = vld [vmem:[%s3287 + $0x4] sm:$0xf]
      %v3292 = vunpack.c.l.b16 %v3288
      %v3293 = vunpack.c.l.b16 %v3289
      %v3294 = vpack.c.b16 %v3293, %v3292
      %v3296 = vsel %vm226, %v3294, 0
      %3298 = vmatprep.subr.bf16.mxu0 0
      %3299 = vmatpush1.bf16.msra.mxu0 %v584
      %3300 = vmatprep.subr.bf16.mxu0 0
      %3301 = vmatpush1.bf16.msra.mxu0 0
      %3302 = vmatprep.subr.bf16.mxu0 0
      %3303 = vmatpush1.bf16.msra.mxu0 0
      %3304 = vmatprep.subr.bf16.mxu0 0
      %3305 = vmatpush1.bf16.msra.mxu0 0
      %3306 = vmatprep.subr.bf16.mxu0 0
      %3307 = vmatpush1.bf16.msra.mxu0 0
      %3308 = vmatprep.subr.bf16.mxu0 0
      %3309 = vmatpush1.bf16.msra.mxu0 0
      %3310 = vmatprep.subr.bf16.mxu0 0
      %3311 = vmatpush1.bf16.msra.mxu0 0
      %3312 = vmatprep.subr.bf16.mxu0 0
      %3313 = vmatpush1.bf16.msra.mxu0 0
      %3314 = vmatprep.subr.bf16.mxu0 0
      %3315 = vmatpush1.bf16.msra.mxu0 0
      %3316 = vmatprep.subr.bf16.mxu0 0
      %3317 = vmatpush1.bf16.msra.mxu0 0
      %3318 = vmatprep.subr.bf16.mxu0 0
      %3319 = vmatpush1.bf16.msra.mxu0 0
      %3320 = vmatprep.subr.bf16.mxu0 0
      %3321 = vmatpush1.bf16.msra.mxu0 0
      %3322 = vmatprep.subr.bf16.mxu0 0
      %3323 = vmatpush1.bf16.msra.mxu0 0
      %3324 = vmatprep.subr.bf16.mxu0 0
      %3325 = vmatpush1.bf16.msra.mxu0 0
      %3326 = vmatprep.subr.bf16.mxu0 0
      %3327 = vmatpush1.bf16.msra.mxu0 0
      %3328 = vmatprep.subr.bf16.mxu0 0
      %3329 = vmatpush1.bf16.msra.mxu0 0
      %3330 = vmatprep.mubr.bf16.mxu0 0
      %3331 = vmatmul.mubr.bf16.gmra.mrb[0].mxu0 %v3296
      %v3332 = vpop.f32.mrb[0].mxu0
      %v3333 = vadd.f32 0.0, %v3332
      %v3334 = vpop.f32.mrb[0].mxu0
      %v3335 = vpop.f32.mrb[0].mxu0
      %v3336 = vadd.f32 0.0, %v3335
      %v3337 = vpop.f32.mrb[0].mxu0
      %3338 = vdwg.mxu0
      %v3339 = vadd.f32 %v3282, %v3333
      %v3340 = vadd.f32 %v3283, %v3336
      %v3341 = vld [vmem:[%s3287] sm:$0xf]
      %v3342 = vld [vmem:[%s3287 + $0x4] sm:$0xf]
      %v3343 = vld [vmem:[%s3287 + $0x8] sm:$0x1]
      %v3347 = vunpack.c.l.b16 %v3341
      %v3348 = vunpack.c.l.b16 %v3342
      %v3349 = vunpack.c.l.b16 %v3343
      %v3350 = vpack.c.b16 %v3348, %v3347
      %v3351 = vpack.c.b16 %v3349, %v3349
      %v3353 = vshrl.u32 %v3350, 16
      %v3355 = vshll.u32 %v3350, 16
      %v3357 = vrot.slane %v3355, 1
      %v3358 = vor.u32 %v3353, %v3357
      %v3360 = vshll.u32 %v3351, 16
      %v3362 = vrot.slane %v3360, 1
      %v3363 = vsel %vm213, %v3358, %v3362
      %v3365 = vsel %vm226, %v3363, 0
      %3367 = vmatprep.subr.bf16.mxu0 0
      %3368 = vmatpush1.bf16.msra.mxu0 %v656
      %3369 = vmatprep.subr.bf16.mxu0 0
      %3370 = vmatpush1.bf16.msra.mxu0 0
      %3371 = vmatprep.subr.bf16.mxu0 0
      %3372 = vmatpush1.bf16.msra.mxu0 0
      %3373 = vmatprep.subr.bf16.mxu0 0
      %3374 = vmatpush1.bf16.msra.mxu0 0
      %3375 = vmatprep.subr.bf16.mxu0 0
      %3376 = vmatpush1.bf16.msra.mxu0 0
      %3377 = vmatprep.subr.bf16.mxu0 0
      %3378 = vmatpush1.bf16.msra.mxu0 0
      %3379 = vmatprep.subr.bf16.mxu0 0
      %3380 = vmatpush1.bf16.msra.mxu0 0
      %3381 = vmatprep.subr.bf16.mxu0 0
      %3382 = vmatpush1.bf16.msra.mxu0 0
      %3383 = vmatprep.subr.bf16.mxu0 0
      %3384 = vmatpush1.bf16.msra.mxu0 0
      %3385 = vmatprep.subr.bf16.mxu0 0
      %3386 = vmatpush1.bf16.msra.mxu0 0
      %3387 = vmatprep.subr.bf16.mxu0 0
      %3388 = vmatpush1.bf16.msra.mxu0 0
      %3389 = vmatprep.subr.bf16.mxu0 0
      %3390 = vmatpush1.bf16.msra.mxu0 0
      %3391 = vmatprep.subr.bf16.mxu0 0
      %3392 = vmatpush1.bf16.msra.mxu0 0
      %3393 = vmatprep.subr.bf16.mxu0 0
      %3394 = vmatpush1.bf16.msra.mxu0 0
      %3395 = vmatprep.subr.bf16.mxu0 0
      %3396 = vmatpush1.bf16.msra.mxu0 0
      %3397 = vmatprep.subr.bf16.mxu0 0
      %3398 = vmatpush1.bf16.msra.mxu0 0
      %3399 = vmatprep.mubr.bf16.mxu0 0
      %3400 = vmatmul.mubr.bf16.gmra.mrb[0].mxu0 %v3365
      %v3401 = vpop.f32.mrb[0].mxu0
      %v3402 = vadd.f32 0.0, %v3401
      %v3403 = vpop.f32.mrb[0].mxu0
      %v3404 = vpop.f32.mrb[0].mxu0
      %v3405 = vadd.f32 0.0, %v3404
      %v3406 = vpop.f32.mrb[0].mxu0
      %3407 = vdwg.mxu0
      %v3408 = vadd.f32 %v3339, %v3402
      %v3409 = vadd.f32 %v3340, %v3405
      %v3410 = vld [vmem:[%s3287] sm:$0xe]
      %v3412 = vunpack.c.l.b16 %v3410
      %v3413 = vpack.c.b16 %v3348, %v3412
      %v3414 = vrot.slane %v3413, 1
      %v3415 = vrot.slane %v3351, 1
      %v3416 = vsel %vm328, %v3414, %v3415
      %v3418 = vsel %vm226, %v3416, 0
      %3420 = vmatprep.subr.bf16.mxu0 0
      %3421 = vmatpush1.bf16.msra.mxu0 %v712
      %3422 = vmatprep.subr.bf16.mxu0 0
      %3423 = vmatpush1.bf16.msra.mxu0 0
      %3424 = vmatprep.subr.bf16.mxu0 0
      %3425 = vmatpush1.bf16.msra.mxu0 0
      %3426 = vmatprep.subr.bf16.mxu0 0
      %3427 = vmatpush1.bf16.msra.mxu0 0
      %3428 = vmatprep.subr.bf16.mxu0 0
      %3429 = vmatpush1.bf16.msra.mxu0 0
      %3430 = vmatprep.subr.bf16.mxu0 0
      %3431 = vmatpush1.bf16.msra.mxu0 0
      %3432 = vmatprep.subr.bf16.mxu0 0
      %3433 = vmatpush1.bf16.msra.mxu0 0
      %3434 = vmatprep.subr.bf16.mxu0 0
      %3435 = vmatpush1.bf16.msra.mxu0 0
      %3436 = vmatprep.subr.bf16.mxu0 0
      %3437 = vmatpush1.bf16.msra.mxu0 0
      %3438 = vmatprep.subr.bf16.mxu0 0
      %3439 = vmatpush1.bf16.msra.mxu0 0
      %3440 = vmatprep.subr.bf16.mxu0 0
      %3441 = vmatpush1.bf16.msra.mxu0 0
      %3442 = vmatprep.subr.bf16.mxu0 0
      %3443 = vmatpush1.bf16.msra.mxu0 0
      %3444 = vmatprep.subr.bf16.mxu0 0
      %3445 = vmatpush1.bf16.msra.mxu0 0
      %3446 = vmatprep.subr.bf16.mxu0 0
      %3447 = vmatpush1.bf16.msra.mxu0 0
      %3448 = vmatprep.subr.bf16.mxu0 0
      %3449 = vmatpush1.bf16.msra.mxu0 0
      %3450 = vmatprep.subr.bf16.mxu0 0
      %3451 = vmatpush1.bf16.msra.mxu0 0
      %3452 = vmatprep.mubr.bf16.mxu0 0
      %3453 = vmatmul.mubr.bf16.gmra.mrb[0].mxu0 %v3418
      %v3454 = vpop.f32.mrb[0].mxu0
      %v3455 = vadd.f32 0.0, %v3454
      %v3456 = vpop.f32.mrb[0].mxu0
      %v3457 = vpop.f32.mrb[0].mxu0
      %v3458 = vadd.f32 0.0, %v3457
      %v3459 = vpop.f32.mrb[0].mxu0
      %3460 = vdwg.mxu0
      %v3461 = vadd.f32 %v3408, %v3455
      %v3462 = vadd.f32 %v3409, %v3458
      %v3463 = vadd.f32 %v3461, %v761
      %v3464 = vadd.f32 %v3462, %v761
      %v3465 = vmax.f32 %v3463, 0.0
      %v3466 = vmax.f32 %v3464, 0.0
      %v3467 = vadd.f32 %v3465, %v3466
      %v3468 = vrot.slane %v3467, 4
      %v3469 = vadd.f32 %v3467, %v3468
      %v3470 = vrot.slane %v3469, 2
      %v3471 = vadd.f32 %v3469, %v3470
      %v3472 = vrot.slane %v3471, 1
      %v3473 = vadd.f32 %v3471, %v3472
      %p3474 = scmp.lt.s32.totalorder %s2384, 16
      %s3475 = scalar_select %p3474, 1, 0
      %s3476 = scvt.s32.f32 %s3475
      %v3477 = vstv %s3476
      %v3478 = vmul.f32 %v3477, %v3473
      %v3479 = vadd.f32 %v3029, %v3478
      %3480 = vmatprep.subr.bf16.mxu0 0
      %3481 = vmatpush1.bf16.msra.mxu0 %v235
      %3482 = vmatprep.subr.bf16.mxu0 0
      %3483 = vmatpush1.bf16.msra.mxu0 0
      %3484 = vmatprep.subr.bf16.mxu0 0
      %3485 = vmatpush1.bf16.msra.mxu0 0
      %3486 = vmatprep.subr.bf16.mxu0 0
      %3487 = vmatpush1.bf16.msra.mxu0 0
      %3488 = vmatprep.subr.bf16.mxu0 0
      %3489 = vmatpush1.bf16.msra.mxu0 0
      %3490 = vmatprep.subr.bf16.mxu0 0
      %3491 = vmatpush1.bf16.msra.mxu0 0
      %3492 = vmatprep.subr.bf16.mxu0 0
      %3493 = vmatpush1.bf16.msra.mxu0 0
      %3494 = vmatprep.subr.bf16.mxu0 0
      %3495 = vmatpush1.bf16.msra.mxu0 0
      %3496 = vmatprep.subr.bf16.mxu0 0
      %3497 = vmatpush1.bf16.msra.mxu0 0
      %3498 = vmatprep.subr.bf16.mxu0 0
      %3499 = vmatpush1.bf16.msra.mxu0 0
      %3500 = vmatprep.subr.bf16.mxu0 0
      %3501 = vmatpush1.bf16.msra.mxu0 0
      %3502 = vmatprep.subr.bf16.mxu0 0
      %3503 = vmatpush1.bf16.msra.mxu0 0
      %3504 = vmatprep.subr.bf16.mxu0 0
      %3505 = vmatpush1.bf16.msra.mxu0 0
      %3506 = vmatprep.subr.bf16.mxu0 0
      %3507 = vmatpush1.bf16.msra.mxu0 0
      %3508 = vmatprep.subr.bf16.mxu0 0
      %3509 = vmatpush1.bf16.msra.mxu0 0
      %3510 = vmatprep.subr.bf16.mxu0 0
      %3511 = vmatpush1.bf16.msra.mxu0 0
      %3512 = vmatprep.mubr.bf16.mxu0 0
      %3513 = vmatmul.mubr.bf16.gmra.mrb[0].mxu0 %v2915
      %v3514 = vpop.f32.mrb[0].mxu0
      %v3515 = vadd.f32 0.0, %v3514
      %v3516 = vpop.f32.mrb[0].mxu0
      %v3517 = vpop.f32.mrb[0].mxu0
      %v3518 = vadd.f32 0.0, %v3517
      %v3519 = vpop.f32.mrb[0].mxu0
      %3520 = vdwg.mxu0
      %3521 = vmatprep.subr.bf16.mxu0 0
      %3522 = vmatpush1.bf16.msra.mxu0 %v281
      %3523 = vmatprep.subr.bf16.mxu0 0
      %3524 = vmatpush1.bf16.msra.mxu0 0
      %3525 = vmatprep.subr.bf16.mxu0 0
      %3526 = vmatpush1.bf16.msra.mxu0 0
      %3527 = vmatprep.subr.bf16.mxu0 0
      %3528 = vmatpush1.bf16.msra.mxu0 0
      %3529 = vmatprep.subr.bf16.mxu0 0
      %3530 = vmatpush1.bf16.msra.mxu0 0
      %3531 = vmatprep.subr.bf16.mxu0 0
      %3532 = vmatpush1.bf16.msra.mxu0 0
      %3533 = vmatprep.subr.bf16.mxu0 0
      %3534 = vmatpush1.bf16.msra.mxu0 0
      %3535 = vmatprep.subr.bf16.mxu0 0
      %3536 = vmatpush1.bf16.msra.mxu0 0
      %3537 = vmatprep.subr.bf16.mxu0 0
      %3538 = vmatpush1.bf16.msra.mxu0 0
      %3539 = vmatprep.subr.bf16.mxu0 0
      %3540 = vmatpush1.bf16.msra.mxu0 0
      %3541 = vmatprep.subr.bf16.mxu0 0
      %3542 = vmatpush1.bf16.msra.mxu0 0
      %3543 = vmatprep.subr.bf16.mxu0 0
      %3544 = vmatpush1.bf16.msra.mxu0 0
      %3545 = vmatprep.subr.bf16.mxu0 0
      %3546 = vmatpush1.bf16.msra.mxu0 0
      %3547 = vmatprep.subr.bf16.mxu0 0
      %3548 = vmatpush1.bf16.msra.mxu0 0
      %3549 = vmatprep.subr.bf16.mxu0 0
      %3550 = vmatpush1.bf16.msra.mxu0 0
      %3551 = vmatprep.subr.bf16.mxu0 0
      %3552 = vmatpush1.bf16.msra.mxu0 0
      %3553 = vmatprep.mubr.bf16.mxu0 0
      %3554 = vmatmul.mubr.bf16.gmra.mrb[0].mxu0 %v2846
      %v3555 = vpop.f32.mrb[0].mxu0
      %v3556 = vadd.f32 %v3515, %v3555
      %v3557 = vpop.f32.mrb[0].mxu0
      %v3558 = vpop.f32.mrb[0].mxu0
      %v3559 = vadd.f32 %v3518, %v3558
      %v3560 = vpop.f32.mrb[0].mxu0
      %3561 = vdwg.mxu0
      %3562 = vmatprep.subr.bf16.mxu0 0
      %3563 = vmatpush1.bf16.msra.mxu0 %v336
      %3564 = vmatprep.subr.bf16.mxu0 0
      %3565 = vmatpush1.bf16.msra.mxu0 0
      %3566 = vmatprep.subr.bf16.mxu0 0
      %3567 = vmatpush1.bf16.msra.mxu0 0
      %3568 = vmatprep.subr.bf16.mxu0 0
      %3569 = vmatpush1.bf16.msra.mxu0 0
      %3570 = vmatprep.subr.bf16.mxu0 0
      %3571 = vmatpush1.bf16.msra.mxu0 0
      %3572 = vmatprep.subr.bf16.mxu0 0
      %3573 = vmatpush1.bf16.msra.mxu0 0
      %3574 = vmatprep.subr.bf16.mxu0 0
      %3575 = vmatpush1.bf16.msra.mxu0 0
      %3576 = vmatprep.subr.bf16.mxu0 0
      %3577 = vmatpush1.bf16.msra.mxu0 0
      %3578 = vmatprep.subr.bf16.mxu0 0
      %3579 = vmatpush1.bf16.msra.mxu0 0
      %3580 = vmatprep.subr.bf16.mxu0 0
      %3581 = vmatpush1.bf16.msra.mxu0 0
      %3582 = vmatprep.subr.bf16.mxu0 0
      %3583 = vmatpush1.bf16.msra.mxu0 0
      %3584 = vmatprep.subr.bf16.mxu0 0
      %3585 = vmatpush1.bf16.msra.mxu0 0
      %3586 = vmatprep.subr.bf16.mxu0 0
      %3587 = vmatpush1.bf16.msra.mxu0 0
      %3588 = vmatprep.subr.bf16.mxu0 0
      %3589 = vmatpush1.bf16.msra.mxu0 0
      %3590 = vmatprep.subr.bf16.mxu0 0
      %3591 = vmatpush1.bf16.msra.mxu0 0
      %3592 = vmatprep.subr.bf16.mxu0 0
      %3593 = vmatpush1.bf16.msra.mxu0 0
      %3594 = vmatprep.mubr.bf16.mxu0 0
      %3595 = vmatmul.mubr.bf16.gmra.mrb[0].mxu0 %v2968
      %v3596 = vpop.f32.mrb[0].mxu0
      %v3597 = vadd.f32 0.0, %v3596
      %v3598 = vpop.f32.mrb[0].mxu0
      %v3599 = vpop.f32.mrb[0].mxu0
      %v3600 = vadd.f32 0.0, %v3599
      %v3601 = vpop.f32.mrb[0].mxu0
      %3602 = vdwg.mxu0
      %v3603 = vadd.f32 %v3556, %v3597
      %v3604 = vadd.f32 %v3559, %v3600
      %3605 = vmatprep.subr.bf16.mxu0 0
      %3606 = vmatpush1.bf16.msra.mxu0 %v396
      %3607 = vmatprep.subr.bf16.mxu0 0
      %3608 = vmatpush1.bf16.msra.mxu0 0
      %3609 = vmatprep.subr.bf16.mxu0 0
      %3610 = vmatpush1.bf16.msra.mxu0 0
      %3611 = vmatprep.subr.bf16.mxu0 0
      %3612 = vmatpush1.bf16.msra.mxu0 0
      %3613 = vmatprep.subr.bf16.mxu0 0
      %3614 = vmatpush1.bf16.msra.mxu0 0
      %3615 = vmatprep.subr.bf16.mxu0 0
      %3616 = vmatpush1.bf16.msra.mxu0 0
      %3617 = vmatprep.subr.bf16.mxu0 0
      %3618 = vmatpush1.bf16.msra.mxu0 0
      %3619 = vmatprep.subr.bf16.mxu0 0
      %3620 = vmatpush1.bf16.msra.mxu0 0
      %3621 = vmatprep.subr.bf16.mxu0 0
      %3622 = vmatpush1.bf16.msra.mxu0 0
      %3623 = vmatprep.subr.bf16.mxu0 0
      %3624 = vmatpush1.bf16.msra.mxu0 0
      %3625 = vmatprep.subr.bf16.mxu0 0
      %3626 = vmatpush1.bf16.msra.mxu0 0
      %3627 = vmatprep.subr.bf16.mxu0 0
      %3628 = vmatpush1.bf16.msra.mxu0 0
      %3629 = vmatprep.subr.bf16.mxu0 0
      %3630 = vmatpush1.bf16.msra.mxu0 0
      %3631 = vmatprep.subr.bf16.mxu0 0
      %3632 = vmatpush1.bf16.msra.mxu0 0
      %3633 = vmatprep.subr.bf16.mxu0 0
      %3634 = vmatpush1.bf16.msra.mxu0 0
      %3635 = vmatprep.subr.bf16.mxu0 0
      %3636 = vmatpush1.bf16.msra.mxu0 0
      %3637 = vmatprep.mubr.bf16.mxu0 0
      %3638 = vmatmul.mubr.bf16.gmra.mrb[0].mxu0 %v3296
      %v3639 = vpop.f32.mrb[0].mxu0
      %v3640 = vadd.f32 0.0, %v3639
      %v3641 = vpop.f32.mrb[0].mxu0
      %v3642 = vpop.f32.mrb[0].mxu0
      %v3643 = vadd.f32 0.0, %v3642
      %v3644 = vpop.f32.mrb[0].mxu0
      %3645 = vdwg.mxu0
      %v3646 = vadd.f32 %v3603, %v3640
      %v3647 = vadd.f32 %v3604, %v3643
      %3648 = vmatprep.subr.bf16.mxu0 0
      %3649 = vmatpush1.bf16.msra.mxu0 %v468
      %3650 = vmatprep.subr.bf16.mxu0 0
      %3651 = vmatpush1.bf16.msra.mxu0 0
      %3652 = vmatprep.subr.bf16.mxu0 0
      %3653 = vmatpush1.bf16.msra.mxu0 0
      %3654 = vmatprep.subr.bf16.mxu0 0
      %3655 = vmatpush1.bf16.msra.mxu0 0
      %3656 = vmatprep.subr.bf16.mxu0 0
      %3657 = vmatpush1.bf16.msra.mxu0 0
      %3658 = vmatprep.subr.bf16.mxu0 0
      %3659 = vmatpush1.bf16.msra.mxu0 0
      %3660 = vmatprep.subr.bf16.mxu0 0
      %3661 = vmatpush1.bf16.msra.mxu0 0
      %3662 = vmatprep.subr.bf16.mxu0 0
      %3663 = vmatpush1.bf16.msra.mxu0 0
      %3664 = vmatprep.subr.bf16.mxu0 0
      %3665 = vmatpush1.bf16.msra.mxu0 0
      %3666 = vmatprep.subr.bf16.mxu0 0
      %3667 = vmatpush1.bf16.msra.mxu0 0
      %3668 = vmatprep.subr.bf16.mxu0 0
      %3669 = vmatpush1.bf16.msra.mxu0 0
      %3670 = vmatprep.subr.bf16.mxu0 0
      %3671 = vmatpush1.bf16.msra.mxu0 0
      %3672 = vmatprep.subr.bf16.mxu0 0
      %3673 = vmatpush1.bf16.msra.mxu0 0
      %3674 = vmatprep.subr.bf16.mxu0 0
      %3675 = vmatpush1.bf16.msra.mxu0 0
      %3676 = vmatprep.subr.bf16.mxu0 0
      %3677 = vmatpush1.bf16.msra.mxu0 0
      %3678 = vmatprep.subr.bf16.mxu0 0
      %3679 = vmatpush1.bf16.msra.mxu0 0
      %3680 = vmatprep.mubr.bf16.mxu0 0
      %3681 = vmatmul.mubr.bf16.gmra.mrb[0].mxu0 %v3365
      %v3682 = vpop.f32.mrb[0].mxu0
      %v3683 = vadd.f32 0.0, %v3682
      %v3684 = vpop.f32.mrb[0].mxu0
      %v3685 = vpop.f32.mrb[0].mxu0
      %v3686 = vadd.f32 0.0, %v3685
      %v3687 = vpop.f32.mrb[0].mxu0
      %3688 = vdwg.mxu0
      %v3689 = vadd.f32 %v3646, %v3683
      %v3690 = vadd.f32 %v3647, %v3686
      %3691 = vmatprep.subr.bf16.mxu0 0
      %3692 = vmatpush1.bf16.msra.mxu0 %v524
      %3693 = vmatprep.subr.bf16.mxu0 0
      %3694 = vmatpush1.bf16.msra.mxu0 0
      %3695 = vmatprep.subr.bf16.mxu0 0
      %3696 = vmatpush1.bf16.msra.mxu0 0
      %3697 = vmatprep.subr.bf16.mxu0 0
      %3698 = vmatpush1.bf16.msra.mxu0 0
      %3699 = vmatprep.subr.bf16.mxu0 0
      %3700 = vmatpush1.bf16.msra.mxu0 0
      %3701 = vmatprep.subr.bf16.mxu0 0
      %3702 = vmatpush1.bf16.msra.mxu0 0
      %3703 = vmatprep.subr.bf16.mxu0 0
      %3704 = vmatpush1.bf16.msra.mxu0 0
      %3705 = vmatprep.subr.bf16.mxu0 0
      %3706 = vmatpush1.bf16.msra.mxu0 0
      %3707 = vmatprep.subr.bf16.mxu0 0
      %3708 = vmatpush1.bf16.msra.mxu0 0
      %3709 = vmatprep.subr.bf16.mxu0 0
      %3710 = vmatpush1.bf16.msra.mxu0 0
      %3711 = vmatprep.subr.bf16.mxu0 0
      %3712 = vmatpush1.bf16.msra.mxu0 0
      %3713 = vmatprep.subr.bf16.mxu0 0
      %3714 = vmatpush1.bf16.msra.mxu0 0
      %3715 = vmatprep.subr.bf16.mxu0 0
      %3716 = vmatpush1.bf16.msra.mxu0 0
      %3717 = vmatprep.subr.bf16.mxu0 0
      %3718 = vmatpush1.bf16.msra.mxu0 0
      %3719 = vmatprep.subr.bf16.mxu0 0
      %3720 = vmatpush1.bf16.msra.mxu0 0
      %3721 = vmatprep.subr.bf16.mxu0 0
      %3722 = vmatpush1.bf16.msra.mxu0 0
      %3723 = vmatprep.mubr.bf16.mxu0 0
      %3724 = vmatmul.mubr.bf16.gmra.mrb[0].mxu0 %v3418
      %v3725 = vpop.f32.mrb[0].mxu0
      %v3726 = vadd.f32 0.0, %v3725
      %v3727 = vpop.f32.mrb[0].mxu0
      %v3728 = vpop.f32.mrb[0].mxu0
      %v3729 = vadd.f32 0.0, %v3728
      %v3730 = vpop.f32.mrb[0].mxu0
      %3731 = vdwg.mxu0
      %v3732 = vadd.f32 %v3689, %v3726
      %v3733 = vadd.f32 %v3690, %v3729
      %s3734 = sadd.s32 %s180, 9
      %s3735 = smul.u32 %s3734, 3
      %s3736 = smul.addr %s3735, 4
      %s3737 = scalar_lea.vmem %s175, %s3736
      %v3738 = vld [vmem:[%s3737] sm:$0xf]
      %v3739 = vld [vmem:[%s3737 + $0x4] sm:$0xf]
      %v3742 = vunpack.c.l.b16 %v3738
      %v3743 = vunpack.c.l.b16 %v3739
      %v3744 = vpack.c.b16 %v3743, %v3742
      %v3746 = vsel %vm226, %v3744, 0
      %3748 = vmatprep.subr.bf16.mxu0 0
      %3749 = vmatpush1.bf16.msra.mxu0 %v584
      %3750 = vmatprep.subr.bf16.mxu0 0
      %3751 = vmatpush1.bf16.msra.mxu0 0
      %3752 = vmatprep.subr.bf16.mxu0 0
      %3753 = vmatpush1.bf16.msra.mxu0 0
      %3754 = vmatprep.subr.bf16.mxu0 0
      %3755 = vmatpush1.bf16.msra.mxu0 0
      %3756 = vmatprep.subr.bf16.mxu0 0
      %3757 = vmatpush1.bf16.msra.mxu0 0
      %3758 = vmatprep.subr.bf16.mxu0 0
      %3759 = vmatpush1.bf16.msra.mxu0 0
      %3760 = vmatprep.subr.bf16.mxu0 0
      %3761 = vmatpush1.bf16.msra.mxu0 0
      %3762 = vmatprep.subr.bf16.mxu0 0
      %3763 = vmatpush1.bf16.msra.mxu0 0
      %3764 = vmatprep.subr.bf16.mxu0 0
      %3765 = vmatpush1.bf16.msra.mxu0 0
      %3766 = vmatprep.subr.bf16.mxu0 0
      %3767 = vmatpush1.bf16.msra.mxu0 0
      %3768 = vmatprep.subr.bf16.mxu0 0
      %3769 = vmatpush1.bf16.msra.mxu0 0
      %3770 = vmatprep.subr.bf16.mxu0 0
      %3771 = vmatpush1.bf16.msra.mxu0 0
      %3772 = vmatprep.subr.bf16.mxu0 0
      %3773 = vmatpush1.bf16.msra.mxu0 0
      %3774 = vmatprep.subr.bf16.mxu0 0
      %3775 = vmatpush1.bf16.msra.mxu0 0
      %3776 = vmatprep.subr.bf16.mxu0 0
      %3777 = vmatpush1.bf16.msra.mxu0 0
      %3778 = vmatprep.subr.bf16.mxu0 0
      %3779 = vmatpush1.bf16.msra.mxu0 0
      %3780 = vmatprep.mubr.bf16.mxu0 0
      %3781 = vmatmul.mubr.bf16.gmra.mrb[0].mxu0 %v3746
      %v3782 = vpop.f32.mrb[0].mxu0
      %v3783 = vadd.f32 0.0, %v3782
      %v3784 = vpop.f32.mrb[0].mxu0
      %v3785 = vpop.f32.mrb[0].mxu0
      %v3786 = vadd.f32 0.0, %v3785
      %v3787 = vpop.f32.mrb[0].mxu0
      %3788 = vdwg.mxu0
      %v3789 = vadd.f32 %v3732, %v3783
      %v3790 = vadd.f32 %v3733, %v3786
      %v3791 = vld [vmem:[%s3737] sm:$0xf]
      %v3792 = vld [vmem:[%s3737 + $0x4] sm:$0xf]
      %v3793 = vld [vmem:[%s3737 + $0x8] sm:$0x1]
      %v3797 = vunpack.c.l.b16 %v3791
      %v3798 = vunpack.c.l.b16 %v3792
      %v3799 = vunpack.c.l.b16 %v3793
      %v3800 = vpack.c.b16 %v3798, %v3797
      %v3801 = vpack.c.b16 %v3799, %v3799
      %v3803 = vshrl.u32 %v3800, 16
      %v3805 = vshll.u32 %v3800, 16
      %v3807 = vrot.slane %v3805, 1
      %v3808 = vor.u32 %v3803, %v3807
      %v3810 = vshll.u32 %v3801, 16
      %v3812 = vrot.slane %v3810, 1
      %v3813 = vsel %vm213, %v3808, %v3812
      %v3815 = vsel %vm226, %v3813, 0
      %3817 = vmatprep.subr.bf16.mxu0 0
      %3818 = vmatpush1.bf16.msra.mxu0 %v656
      %3819 = vmatprep.subr.bf16.mxu0 0
      %3820 = vmatpush1.bf16.msra.mxu0 0
      %3821 = vmatprep.subr.bf16.mxu0 0
      %3822 = vmatpush1.bf16.msra.mxu0 0
      %3823 = vmatprep.subr.bf16.mxu0 0
      %3824 = vmatpush1.bf16.msra.mxu0 0
      %3825 = vmatprep.subr.bf16.mxu0 0
      %3826 = vmatpush1.bf16.msra.mxu0 0
      %3827 = vmatprep.subr.bf16.mxu0 0
      %3828 = vmatpush1.bf16.msra.mxu0 0
      %3829 = vmatprep.subr.bf16.mxu0 0
      %3830 = vmatpush1.bf16.msra.mxu0 0
      %3831 = vmatprep.subr.bf16.mxu0 0
      %3832 = vmatpush1.bf16.msra.mxu0 0
      %3833 = vmatprep.subr.bf16.mxu0 0
      %3834 = vmatpush1.bf16.msra.mxu0 0
      %3835 = vmatprep.subr.bf16.mxu0 0
      %3836 = vmatpush1.bf16.msra.mxu0 0
      %3837 = vmatprep.subr.bf16.mxu0 0
      %3838 = vmatpush1.bf16.msra.mxu0 0
      %3839 = vmatprep.subr.bf16.mxu0 0
      %3840 = vmatpush1.bf16.msra.mxu0 0
      %3841 = vmatprep.subr.bf16.mxu0 0
      %3842 = vmatpush1.bf16.msra.mxu0 0
      %3843 = vmatprep.subr.bf16.mxu0 0
      %3844 = vmatpush1.bf16.msra.mxu0 0
      %3845 = vmatprep.subr.bf16.mxu0 0
      %3846 = vmatpush1.bf16.msra.mxu0 0
      %3847 = vmatprep.subr.bf16.mxu0 0
      %3848 = vmatpush1.bf16.msra.mxu0 0
      %3849 = vmatprep.mubr.bf16.mxu0 0
      %3850 = vmatmul.mubr.bf16.gmra.mrb[0].mxu0 %v3815
      %v3851 = vpop.f32.mrb[0].mxu0
      %v3852 = vadd.f32 0.0, %v3851
      %v3853 = vpop.f32.mrb[0].mxu0
      %v3854 = vpop.f32.mrb[0].mxu0
      %v3855 = vadd.f32 0.0, %v3854
      %v3856 = vpop.f32.mrb[0].mxu0
      %3857 = vdwg.mxu0
      %v3858 = vadd.f32 %v3789, %v3852
      %v3859 = vadd.f32 %v3790, %v3855
      %v3860 = vld [vmem:[%s3737] sm:$0xe]
      %v3862 = vunpack.c.l.b16 %v3860
      %v3863 = vpack.c.b16 %v3798, %v3862
      %v3864 = vrot.slane %v3863, 1
      %v3865 = vrot.slane %v3801, 1
      %v3866 = vsel %vm328, %v3864, %v3865
      %v3868 = vsel %vm226, %v3866, 0
      %3870 = vmatprep.subr.bf16.mxu0 0
      %3871 = vmatpush1.bf16.msra.mxu0 %v712
      %3872 = vmatprep.subr.bf16.mxu0 0
      %3873 = vmatpush1.bf16.msra.mxu0 0
      %3874 = vmatprep.subr.bf16.mxu0 0
      %3875 = vmatpush1.bf16.msra.mxu0 0
      %3876 = vmatprep.subr.bf16.mxu0 0
      %3877 = vmatpush1.bf16.msra.mxu0 0
      %3878 = vmatprep.subr.bf16.mxu0 0
      %3879 = vmatpush1.bf16.msra.mxu0 0
      %3880 = vmatprep.subr.bf16.mxu0 0
      %3881 = vmatpush1.bf16.msra.mxu0 0
      %3882 = vmatprep.subr.bf16.mxu0 0
      %3883 = vmatpush1.bf16.msra.mxu0 0
      %3884 = vmatprep.subr.bf16.mxu0 0
      %3885 = vmatpush1.bf16.msra.mxu0 0
      %3886 = vmatprep.subr.bf16.mxu0 0
      %3887 = vmatpush1.bf16.msra.mxu0 0
      %3888 = vmatprep.subr.bf16.mxu0 0
      %3889 = vmatpush1.bf16.msra.mxu0 0
      %3890 = vmatprep.subr.bf16.mxu0 0
      %3891 = vmatpush1.bf16.msra.mxu0 0
      %3892 = vmatprep.subr.bf16.mxu0 0
      %3893 = vmatpush1.bf16.msra.mxu0 0
      %3894 = vmatprep.subr.bf16.mxu0 0
      %3895 = vmatpush1.bf16.msra.mxu0 0
      %3896 = vmatprep.subr.bf16.mxu0 0
      %3897 = vmatpush1.bf16.msra.mxu0 0
      %3898 = vmatprep.subr.bf16.mxu0 0
      %3899 = vmatpush1.bf16.msra.mxu0 0
      %3900 = vmatprep.subr.bf16.mxu0 0
      %3901 = vmatpush1.bf16.msra.mxu0 0
      %3902 = vmatprep.mubr.bf16.mxu0 0
      %3903 = vmatmul.mubr.bf16.gmra.mrb[0].mxu0 %v3868
      %v3904 = vpop.f32.mrb[0].mxu0
      %v3905 = vadd.f32 0.0, %v3904
      %v3906 = vpop.f32.mrb[0].mxu0
      %v3907 = vpop.f32.mrb[0].mxu0
      %v3908 = vadd.f32 0.0, %v3907
      %v3909 = vpop.f32.mrb[0].mxu0
      %3910 = vdwg.mxu0
      %v3911 = vadd.f32 %v3858, %v3905
      %v3912 = vadd.f32 %v3859, %v3908
      %v3913 = vadd.f32 %v3911, %v761
      %v3914 = vadd.f32 %v3912, %v761
      %v3915 = vmax.f32 %v3913, 0.0
      %v3916 = vmax.f32 %v3914, 0.0
      %v3917 = vadd.f32 %v3915, %v3916
      %v3918 = vrot.slane %v3917, 4
      %v3919 = vadd.f32 %v3917, %v3918
      %v3920 = vrot.slane %v3919, 2
      %v3921 = vadd.f32 %v3919, %v3920
      %v3922 = vrot.slane %v3921, 1
      %v3923 = vadd.f32 %v3921, %v3922
      %p3924 = scmp.lt.s32.totalorder %s2834, 16
      %s3925 = scalar_select %p3924, 1, 0
      %s3926 = scvt.s32.f32 %s3925
      %v3927 = vstv %s3926
      %v3928 = vmul.f32 %v3927, %v3923
      %v3929 = vadd.f32 %v3479, %v3928
      %p3930 = scmp.eq.s32.totalorder %s19, 0
      // Predicated region
      $region33: #{cnn_forward.2} parent=31 // pred_check
        %p3931 = pneg %p3930
      $region34: #{cnn_forward.2} parent=31 // pred_check_branch
        %3933 = sbr.rel (%p3931) target = $region36
      $region35: #{cnn_forward.2} parent=31 // pred_region
        %3934 = vst [vmem:[%s178] sm:$0x1] 0.0
      $region36: #{cnn_forward.2} parent=31 // pred_fallthru
        _
      %v3935 = vld [vmem:[%s178] sm:$0x1]
      %v3936 = vadd.f32 %v3935, %v3929
      %3937 = vst [vmem:[%s178] sm:$0x1] %v3936
      %p3938 = scmp.eq.s32.totalorder %s19, 1
      // Predicated region
      $region37: #{cnn_forward.2} parent=31 // pred_check
        %p3939 = pneg %p3938
      $region38: #{cnn_forward.2} parent=31 // pred_check_branch
        %3941 = sbr.rel (%p3939) target = $region40
      $region39: #{cnn_forward.2} parent=31 // pred_region
        %v3942 = vld [vmem:[%s178] sm:$0x1]
        %v3943 = vmul.f32 %v3942, 0.00390625
        %3944 = vst [vmem:[%s178] sm:$0x1] %v3943
      $region40: #{cnn_forward.2} parent=31 // pred_fallthru
        _
      %p3945 = scmp.lt.s32.totalorder %s18, 3
      %s3946 = scalar_select %p3945, %s18, 3
      %s3947 = scalar_lea.vmem %s3, %s3946
      // Predicated region
      $region41: #{cnn_forward.2} parent=31 // pred_check
        %p3948 = pneg %p112
      $region42: #{cnn_forward.2} parent=31 // pred_check_branch
        %3950 = sbr.rel (%p3948) target = $region44
      $region43: #{cnn_forward.2} parent=31 // pred_region
        _
      $region44: #{cnn_forward.2} parent=31 // pred_fallthru
        _
    $region32: #{cnn_forward.2} parent=5 // pred_fallthru
      _
    %p3951 = scmp.le.s32.totalorder 2, %s9
    // Predicated region
    $region45: #{cnn_forward.2} parent=5 // pred_check
      %p3952 = pneg %p3951
    $region46: #{cnn_forward.2} parent=5 // pred_check_branch
      %3954 = sbr.rel (%p3952) target = $region48
    $region47: #{cnn_forward.2} parent=5 // pred_region
      %s3955 = ssub.s32 %s9, 2
      // Predicated region
      $region49: #{cnn_forward.2} parent=47 // pred_check
        %p3956 = pneg %p118
      $region50: #{cnn_forward.2} parent=47 // pred_check_branch
        %3958 = sbr.rel (%p3956) target = $region52
      $region51: #{cnn_forward.2} parent=47 // pred_region
        %p3959 = scmp.lt.s32.totalorder %s20, 3
        %s3960 = scalar_select %p3959, %s20, 3
        %s3961 = scalar_lea.vmem %s3, %s3960
      $region52: #{cnn_forward.2} parent=47 // pred_fallthru
        _
    $region48: #{cnn_forward.2} parent=5 // pred_fallthru
      _
  $region6: #{cnn_forward.2} parent=0 // loop_footer
    %s13 = sadd.s32 1, %s9
  $region7: #{cnn_forward.2} parent=0 // loop_footer_branch
    %8 = sbr.rel target = $region3
  $region8: #{cnn_forward.2} parent=0 // loop_exit
    _

</llo_original>
